<compile_context>
chip_gen: v7x
topology: tpu7x:2x2x1
jax: 0.10.0
libtpu: 0.0.40
codegen_flags: <defaults>
</compile_context>

<pallas_src>
import math

import jax
import jax.numpy as jnp
from jax import lax
from jax.experimental import pallas as pl
from jax.experimental.pallas import tpu as pltpu

H = W = 24
HW = H * W                  # 576
CIN = 3
KH = KW = 3
KTAPS = KH * KW * CIN       # 27
C_GEN = 3                   # G_img_to_label output channels
C_FEAT = 16                 # supervised.features output channels == classifier.in_features
C_CONV = C_FEAT + C_GEN     # 19 fused conv output channels
D_1D = 32                   # unsupervised.to_1d.out_features
N_CLS = 14

_VMEM = pl.BlockSpec(memory_space=pltpu.MemorySpace.VMEM)


# ---------------------------------------------------------------- fused Pallas kernel

def _combined_kernel(p_ref, wc_ref, bc_ref, blk_ref, w1t_ref, b1_ref,
                     wcs_ref, wcu_ref, cb_ref, o_ref):
    """Fused forward.
      p_ref  : (27, B*HW)  bf16  single transposed im2col patches copy
      wc_ref : (19, 27)    bf16  fused conv weight (rows 0..15 features, 16..18 generator)
      bc_ref : (19, 1)     f32   fused conv bias
      blk_ref: (B, B*HW)   f32   block mask (1.0 inside a row's own batch block)
      w1t_ref: (3, B*HW, 32) bf16 to_1d weights, per generator channel, tiled along batch
      b1_ref : (1, 32)     f32   to_1d bias
      wcs_ref: (16, 14)  wcu_ref: (32, 14)  cb_ref: (1, 14)   classifier (split weight)
      o_ref  : (B, 14)     f32
    """
    inv_hw = 1.0 / HW

    # Both convs in one lane-dense MXU pass: (19, 27) @ (27, B*HW) -> (19, B*HW).
    a = jnp.dot(wc_ref[...], p_ref[...],
                preferred_element_type=jnp.float32) + bc_ref[...]          # (19, B*HW)
    f = jnp.maximum(a[:C_FEAT, :], 0.0)                                     # (16, B*HW) ReLU
    g = jnp.tanh(a[C_FEAT:, :])                                             # (3,  B*HW) tanh

    blk = blk_ref[...]                                                      # (B, B*HW)

    # adaptive_avg_pool2d((1,1)) for all batches at once: one contraction vs the block mask.
    s = lax.dot_general(blk, f, (((1,), (1,)), ((), ())),
                        preferred_element_type=jnp.float32) * inv_hw        # (B, 16)

    # to_1d: torch's NCHW .view(-1, 1728) order is folded into the per-channel weight slices;
    # the block mask zeroes cross-batch terms so each channel is a single M=B matmul.
    u = b1_ref[...]                                                         # (1, 32)
    for c in range(C_GEN):
        gc = (blk * g[c:c + 1, :]).astype(w1t_ref.dtype)                    # (B, B*HW)
        u = u + jnp.dot(gc, w1t_ref[c], preferred_element_type=jnp.float32)  # (B, 32)

    # classifier on cat([s, u]) via split weights, then sigmoid; single output store.
    logits = (jnp.dot(s, wcs_ref[...], preferred_element_type=jnp.float32)
              + jnp.dot(u, wcu_ref[...], preferred_element_type=jnp.float32)
              + cb_ref[...])                                                # (B, 14)
    o_ref[...] = jax.nn.sigmoid(logits).astype(o_ref.dtype)


# ---------------------------------------------------------------- parameter prep (one-time)

def _conv_w_to_mat(w_oihw):
    # torch conv weight (Cout, Cin, KH, KW) -> matmul weight (KH*KW*Cin, Cout), taps (kh, kw, ci)
    cout, cin = w_oihw.shape[0], w_oihw.shape[1]
    return jnp.transpose(w_oihw, (2, 3, 1, 0)).reshape(KH * KW * cin, cout)


def prepare_params(params, batch):
    """One-time parameter re-layout, hoisted out of the per-call jitted forward."""
    fw = _conv_w_to_mat(params["feat_conv_w"])                              # (27, 16)
    gw = _conv_w_to_mat(params["g_conv_w"])                                 # (27, 3)
    wc = jnp.concatenate([fw, gw], axis=1).T.astype(jnp.bfloat16)           # (19, 27)
    bc = jnp.concatenate([params["feat_conv_b"], params["g_conv_b"]]
                         ).reshape(C_CONV, 1).astype(jnp.float32)           # (19, 1)

    # to_1d: w1s[c, hw, j] = to1d_w[j, c*HW + hw]; tiled along the batch axis so the in-kernel
    # masked contraction is one standard (B, B*HW) @ (B*HW, 32) matmul per generator channel.
    w1s = jnp.transpose(params["to1d_w"].reshape(D_1D, C_GEN, HW), (1, 2, 0))   # (3, HW, 32)
    w1t = jnp.tile(w1s, (1, batch, 1)).astype(jnp.bfloat16)                 # (3, B*HW, 32)
    b1 = params["to1d_b"].reshape(1, D_1D).astype(jnp.float32)

    wcs = params["cls_w"][:, :C_FEAT].T.astype(jnp.float32)                 # (16, 14)
    wcu = params["cls_w"][:, C_FEAT:].T.astype(jnp.float32)                 # (32, 14)
    cb = params["cls_b"].reshape(1, N_CLS).astype(jnp.float32)

    # block "pooling" mask: 1.0 inside a row's own batch block, 0 elsewhere.
    blk = jnp.kron(jnp.eye(batch, dtype=jnp.float32),
                   jnp.ones((1, HW), jnp.float32))                          # (B, B*HW)

    return dict(wc=wc, bc=bc, blk=blk, w1t=w1t, b1=b1, wcs=wcs, wcu=wcu, cb=cb)


# ---------------------------------------------------------------- JAX glue (per call)

def _im2col_t(x_nchw):
    # NCHW -> single (27, B*HW) transposed im2col layout, tap ordering (kh, kw, ci).
    B = x_nchw.shape[0]
    x = jnp.transpose(x_nchw, (0, 2, 3, 1))                                 # NHWC
    xp = jnp.pad(x, ((0, 0), (1, 1), (1, 1), (0, 0)))
    taps = [xp[:, kh:kh + H, kw:kw + W, :] for kh in range(KH) for kw in range(KW)]
    p = jnp.stack(taps, axis=0)                                             # (9, B, H, W, C)
    p = jnp.transpose(p, (0, 4, 1, 2, 3))                                   # (9, C, B, H, W)
    return p.reshape(KTAPS, B * HW)                                         # (27, B*HW)


def combined_model_forward(x_nchw, prepped):
    B = x_nchw.shape[0]
    patches = _im2col_t(x_nchw).astype(jnp.bfloat16)                        # (27, B*HW)
    # TODO(synk): move im2col into the kernel (pass the ~14 KB NHWC input + a padded VMEM
    # scratch with 9 static slice taps) to drop the remaining wrapper-side pad/stack ops.

    inputs = (patches, prepped["wc"], prepped["bc"], prepped["blk"], prepped["w1t"],
              prepped["b1"], prepped["wcs"], prepped["wcu"], prepped["cb"])

    flops = 2 * (C_CONV * KTAPS * B * HW                 # fused conv
                 + B * (B * HW) * C_FEAT                 # pooling contraction
                 + C_GEN * B * (B * HW) * D_1D           # masked to_1d
                 + B * (C_FEAT + D_1D) * N_CLS)          # classifier
    transcendentals = C_GEN * B * HW + B * N_CLS         # tanh + sigmoid
    bytes_accessed = sum(int(a.size) * a.dtype.itemsize for a in inputs) + B * N_CLS * 4

    return pl.pallas_call(
        _combined_kernel,
        in_specs=[_VMEM] * len(inputs),
        out_specs=_VMEM,
        out_shape=jax.ShapeDtypeStruct((B, N_CLS), jnp.float32),
        cost_estimate=pl.CostEstimate(flops=flops,
                                      transcendentals=transcendentals,
                                      bytes_accessed=bytes_accessed),
    )(*inputs)


# ---------------------------------------------------------------- pure-JAX reference

def reference_forward(x_nchw, params):
    dn = ("NCHW", "OIHW", "NCHW")
    g = lax.conv_general_dilated(x_nchw, params["g_conv_w"], (1, 1), "SAME",
                                 dimension_numbers=dn)
    g = jnp.tanh(g + params["g_conv_b"].reshape(1, -1, 1, 1))
    u = g.reshape(g.shape[0], -1) @ params["to1d_w"].T + params["to1d_b"]
    s = lax.conv_general_dilated(x_nchw, params["feat_conv_w"], (1, 1), "SAME",
                                 dimension_numbers=dn)
    s = jnp.maximum(s + params["feat_conv_b"].reshape(1, -1, 1, 1), 0.0)
    s = s.mean(axis=(2, 3))
    cat = jnp.concatenate([s, u], axis=1)
    return jax.nn.sigmoid(cat @ params["cls_w"].T + params["cls_b"])


def init_params(key):
    ks = jax.random.split(key, 8)

    def init(k, shape, fan_in):
        return jax.random.normal(k, shape, jnp.float32) * (1.0 / math.sqrt(fan_in))

    return {
        "g_conv_w": init(ks[0], (C_GEN, CIN, KH, KW), CIN * KH * KW),
        "g_conv_b": init(ks[1], (C_GEN,), CIN * KH * KW),
        "to1d_w": init(ks[2], (D_1D, C_GEN * H * W), C_GEN * H * W),   # torch (out, in)
        "to1d_b": init(ks[3], (D_1D,), C_GEN * H * W),
        "feat_conv_w": init(ks[4], (C_FEAT, CIN, KH, KW), CIN * KH * KW),
        "feat_conv_b": init(ks[5], (C_FEAT,), CIN * KH * KW),
        "cls_w": init(ks[6], (N_CLS, C_FEAT + D_1D), C_FEAT + D_1D),   # torch (out, in)
        "cls_b": init(ks[7], (N_CLS,), C_FEAT + D_1D),
    }


if __name__ == "__main__":
    key = jax.random.PRNGKey(0)
    pkey, xkey = jax.random.split(key)
    params = init_params(pkey)

    B = 2
    x = jax.random.normal(xkey, (B, CIN, H, W), jnp.float32)   # NCHW, like torch

    prepped = prepare_params(params, batch=B)                  # one-time layout prep
    fwd = jax.jit(lambda xx: combined_model_forward(xx, prepped))
    out = jax.block_until_ready(fwd(x))

    assert out.shape == (B, N_CLS), out.shape
    assert bool(jnp.all(jnp.isfinite(out)))
    assert bool(jnp.all((out >= 0.0) & (out <= 1.0)))          # sigmoid output range

    ref = reference_forward(x, params)
    assert bool(jnp.allclose(out, ref, atol=2e-2, rtol=2e-2)), \
        float(jnp.max(jnp.abs(out - ref)))

    print("KERNEL_OK")
</pallas_src>

<mosaic_0001>
module attributes {stable_mosaic.version = 11 : i64} {
  func.func @_combined_kernel(%arg0: memref<27x1152xbf16, #tpu.memory_space<vmem>>, %arg1: memref<19x27xbf16, #tpu.memory_space<vmem>>, %arg2: memref<19x1xf32, #tpu.memory_space<vmem>>, %arg3: memref<2x1152xf32, #tpu.memory_space<vmem>>, %arg4: memref<3x1152x32xbf16, #tpu.memory_space<vmem>>, %arg5: memref<1x32xf32, #tpu.memory_space<vmem>>, %arg6: memref<16x14xf32, #tpu.memory_space<vmem>>, %arg7: memref<32x14xf32, #tpu.memory_space<vmem>>, %arg8: memref<1x14xf32, #tpu.memory_space<vmem>>, %arg9: memref<2x14xf32, #tpu.memory_space<vmem>>) attributes {dimension_semantics = [], scalar_prefetch = 0 : i64, scratch_operands = 0 : i64, tpu.core_type = #tpu.core_type<tc>} {
    %c0 = arith.constant 0 : index
    %c0_0 = arith.constant 0 : index
    %0 = vector.load %arg1[%c0, %c0_0] : memref<19x27xbf16, #tpu.memory_space<vmem>>, vector<19x27xbf16>
    %c0_1 = arith.constant 0 : index
    %c0_2 = arith.constant 0 : index
    %1 = vector.load %arg0[%c0_1, %c0_2] : memref<27x1152xbf16, #tpu.memory_space<vmem>>, vector<27x1152xbf16>
    %cst = arith.constant dense<0.000000e+00> : vector<19x1152xf32>
    %2 = tpu.matmul %0, %1, %cst {dimension_numbers = #tpu.dot_dimension_numbers<[1], [0], [0], [1], [0, 0, 1, 1], [], []>} : vector<19x27xbf16>, vector<27x1152xbf16>, vector<19x1152xf32> -> vector<19x1152xf32>
    %c0_3 = arith.constant 0 : index
    %c0_4 = arith.constant 0 : index
    %3 = vector.load %arg2[%c0_3, %c0_4] : memref<19x1xf32, #tpu.memory_space<vmem>>, vector<19x1xf32>
    %4 = vector.broadcast %3 : vector<19x1xf32> to vector<19x1152xf32>
    %5 = arith.addf %2, %4 : vector<19x1152xf32>
    %6 = vector.extract_strided_slice %5 {offsets = [0, 0], sizes = [16, 1152], strides = [1, 1]} : vector<19x1152xf32> to vector<16x1152xf32>
    %cst_5 = arith.constant 0.000000e+00 : f32
    %7 = vector.broadcast %cst_5 : f32 to vector<16x1152xf32>
    %8 = arith.maximumf %6, %7 : vector<16x1152xf32>
    %9 = vector.extract_strided_slice %5 {offsets = [16, 0], sizes = [3, 1152], strides = [1, 1]} : vector<19x1152xf32> to vector<3x1152xf32>
    %10 = math.tanh %9 : vector<3x1152xf32>
    %c0_6 = arith.constant 0 : index
    %c0_7 = arith.constant 0 : index
    %11 = vector.load %arg3[%c0_6, %c0_7] : memref<2x1152xf32, #tpu.memory_space<vmem>>, vector<2x1152xf32>
    %cst_8 = arith.constant dense<0.000000e+00> : vector<2x16xf32>
    %12 = tpu.matmul %11, %8, %cst_8 {dimension_numbers = #tpu.dot_dimension_numbers<[1], [1], [0], [0], [0, 0, 1, 0], [], []>} : vector<2x1152xf32>, vector<16x1152xf32>, vector<2x16xf32> -> vector<2x16xf32>
    %cst_9 = arith.constant 0.00173611112 : f32
    %13 = vector.broadcast %cst_9 : f32 to vector<2x16xf32>
    %14 = arith.mulf %12, %13 : vector<2x16xf32>
    %c0_10 = arith.constant 0 : index
    %c0_11 = arith.constant 0 : index
    %15 = vector.load %arg5[%c0_10, %c0_11] : memref<1x32xf32, #tpu.memory_space<vmem>>, vector<1x32xf32>
    %16 = vector.extract_strided_slice %10 {offsets = [0, 0], sizes = [1, 1152], strides = [1, 1]} : vector<3x1152xf32> to vector<1x1152xf32>
    %17 = vector.broadcast %16 : vector<1x1152xf32> to vector<2x1152xf32>
    %18 = arith.mulf %11, %17 : vector<2x1152xf32>
    %19 = arith.truncf %18 : vector<2x1152xf32> to vector<2x1152xbf16>
    %c0_12 = arith.constant 0 : index
    %c0_13 = arith.constant 0 : index
    %c0_14 = arith.constant 0 : index
    %20 = vector.load %arg4[%c0_12, %c0_13, %c0_14] : memref<3x1152x32xbf16, #tpu.memory_space<vmem>>, vector<1x1152x32xbf16>
    %21 = vector.shape_cast %20 : vector<1x1152x32xbf16> to vector<1152x32xbf16>
    %cst_15 = arith.constant dense<0.000000e+00> : vector<2x32xf32>
    %22 = tpu.matmul %19, %21, %cst_15 {dimension_numbers = #tpu.dot_dimension_numbers<[1], [0], [0], [1], [0, 0, 1, 1], [], []>} : vector<2x1152xbf16>, vector<1152x32xbf16>, vector<2x32xf32> -> vector<2x32xf32>
    %23 = vector.broadcast %15 : vector<1x32xf32> to vector<2x32xf32>
    %24 = arith.addf %23, %22 : vector<2x32xf32>
    %25 = vector.extract_strided_slice %10 {offsets = [1, 0], sizes = [1, 1152], strides = [1, 1]} : vector<3x1152xf32> to vector<1x1152xf32>
    %26 = vector.broadcast %25 : vector<1x1152xf32> to vector<2x1152xf32>
    %27 = arith.mulf %11, %26 : vector<2x1152xf32>
    %28 = arith.truncf %27 : vector<2x1152xf32> to vector<2x1152xbf16>
    %c1 = arith.constant 1 : index
    %c0_16 = arith.constant 0 : index
    %c0_17 = arith.constant 0 : index
    %29 = vector.load %arg4[%c1, %c0_16, %c0_17] : memref<3x1152x32xbf16, #tpu.memory_space<vmem>>, vector<1x1152x32xbf16>
    %30 = vector.shape_cast %29 : vector<1x1152x32xbf16> to vector<1152x32xbf16>
    %cst_18 = arith.constant dense<0.000000e+00> : vector<2x32xf32>
    %31 = tpu.matmul %28, %30, %cst_18 {dimension_numbers = #tpu.dot_dimension_numbers<[1], [0], [0], [1], [0, 0, 1, 1], [], []>} : vector<2x1152xbf16>, vector<1152x32xbf16>, vector<2x32xf32> -> vector<2x32xf32>
    %32 = arith.addf %24, %31 : vector<2x32xf32>
    %33 = vector.extract_strided_slice %10 {offsets = [2, 0], sizes = [1, 1152], strides = [1, 1]} : vector<3x1152xf32> to vector<1x1152xf32>
    %34 = vector.broadcast %33 : vector<1x1152xf32> to vector<2x1152xf32>
    %35 = arith.mulf %11, %34 : vector<2x1152xf32>
    %36 = arith.truncf %35 : vector<2x1152xf32> to vector<2x1152xbf16>
    %c2 = arith.constant 2 : index
    %c0_19 = arith.constant 0 : index
    %c0_20 = arith.constant 0 : index
    %37 = vector.load %arg4[%c2, %c0_19, %c0_20] : memref<3x1152x32xbf16, #tpu.memory_space<vmem>>, vector<1x1152x32xbf16>
    %38 = vector.shape_cast %37 : vector<1x1152x32xbf16> to vector<1152x32xbf16>
    %cst_21 = arith.constant dense<0.000000e+00> : vector<2x32xf32>
    %39 = tpu.matmul %36, %38, %cst_21 {dimension_numbers = #tpu.dot_dimension_numbers<[1], [0], [0], [1], [0, 0, 1, 1], [], []>} : vector<2x1152xbf16>, vector<1152x32xbf16>, vector<2x32xf32> -> vector<2x32xf32>
    %40 = arith.addf %32, %39 : vector<2x32xf32>
    %c0_22 = arith.constant 0 : index
    %c0_23 = arith.constant 0 : index
    %41 = vector.load %arg6[%c0_22, %c0_23] : memref<16x14xf32, #tpu.memory_space<vmem>>, vector<16x14xf32>
    %cst_24 = arith.constant dense<0.000000e+00> : vector<2x14xf32>
    %42 = tpu.matmul %14, %41, %cst_24 {dimension_numbers = #tpu.dot_dimension_numbers<[1], [0], [0], [1], [0, 0, 1, 1], [], []>} : vector<2x16xf32>, vector<16x14xf32>, vector<2x14xf32> -> vector<2x14xf32>
    %c0_25 = arith.constant 0 : index
    %c0_26 = arith.constant 0 : index
    %43 = vector.load %arg7[%c0_25, %c0_26] : memref<32x14xf32, #tpu.memory_space<vmem>>, vector<32x14xf32>
    %cst_27 = arith.constant dense<0.000000e+00> : vector<2x14xf32>
    %44 = tpu.matmul %40, %43, %cst_27 {dimension_numbers = #tpu.dot_dimension_numbers<[1], [0], [0], [1], [0, 0, 1, 1], [], []>} : vector<2x32xf32>, vector<32x14xf32>, vector<2x14xf32> -> vector<2x14xf32>
    %45 = arith.addf %42, %44 : vector<2x14xf32>
    %c0_28 = arith.constant 0 : index
    %c0_29 = arith.constant 0 : index
    %46 = vector.load %arg8[%c0_28, %c0_29] : memref<1x14xf32, #tpu.memory_space<vmem>>, vector<1x14xf32>
    %47 = vector.broadcast %46 : vector<1x14xf32> to vector<2x14xf32>
    %48 = arith.addf %45, %47 : vector<2x14xf32>
    %49 = arith.negf %48 : vector<2x14xf32>
    %50 = math.exp %49 : vector<2x14xf32>
    %cst_30 = arith.constant 1.000000e+00 : f32
    %51 = vector.broadcast %cst_30 : f32 to vector<2x14xf32>
    %52 = arith.addf %51, %50 : vector<2x14xf32>
    %53 = arith.divf %51, %52 : vector<2x14xf32>
    %c0_31 = arith.constant 0 : index
    %c0_32 = arith.constant 0 : index
    %54 = vector.load %arg9[%c0_31, %c0_32] : memref<2x14xf32, #tpu.memory_space<vmem>>, vector<2x14xf32>
    tpu.vector_store %arg9[%c0_31, %c0_32], %53 {strides = array<i32>} : memref<2x14xf32, #tpu.memory_space<vmem>>, vector<2x14xf32>,
    return
  }
}

</mosaic_0001>

<llo_original>
// kernel: _lambda_.1
$region0: #{_lambda_.1}
  #allocation0 [shape = 'u32[]', space=smem, size = 0x4, offset = 0x4, fixed_abs, tag = 'smem constant byte address 0x4 - core index']
  #allocation1 [shape = 'u32[144,128]{1,0:T(1,128)}', space=vmem, size = 0x12000, scoped, tag = 'internal scratch']
  %s0 = inlined_call_operand.vmem [shape: bf16[27,1152], index: 0, kind: input, shape index: {}]
  %s1 = inlined_call_operand.vmem [shape: bf16[19,27], index: 1, kind: input, shape index: {}]
  %s2 = inlined_call_operand.vmem [shape: f32[19,1], index: 2, kind: input, shape index: {}]
  %s3 = inlined_call_operand.vmem [shape: f32[2,1152], index: 3, kind: input, shape index: {}]
  %s4 = inlined_call_operand.vmem [shape: bf16[3,1152,32], index: 4, kind: input, shape index: {}]
  %s5 = inlined_call_operand.vmem [shape: f32[1,32], index: 5, kind: input, shape index: {}]
  %s6 = inlined_call_operand.vmem [shape: f32[16,14], index: 6, kind: input, shape index: {}]
  %s7 = inlined_call_operand.vmem [shape: f32[32,14], index: 7, kind: input, shape index: {}]
  %s8 = inlined_call_operand.vmem [shape: f32[1,14], index: 8, kind: input, shape index: {}]
  %s9 = inlined_call_operand.hbm [shape: f32[2,14], index: 9, kind: output, shape index: {}]
  %s10 = sld [smem:[#allocation0]]
  $region46: #{_lambda_.1} parent=0
    _
  %s12 = ssub.s32 1, %s10
  %s13 = scalar_select 0, %s12, %s10
  $region1: #{_lambda_.1} parent=0
    #allocation2 [shape = 'u8[1024]{0}', space=vmem, size = 0x400, scoped, tag = 'output window, operand 0, single buffered']
    #allocation3 [shape = 's32[1]{0}', space=sflag, size = 0x4, scoped, tag = 'scoped memory for _lambda_.1']
    %14 = vsyncpa [#allocation3], 0
    // Predicated region
    $region2: #{_lambda_.1} parent=1 // pred_check
      _
    $region3: #{_lambda_.1} parent=1 // pred_check_branch
      %16 = sbr.rel (0) target = $region5
    $region4: #{_lambda_.1} parent=1 // pred_region
      _
    $region5: #{_lambda_.1} parent=1 // pred_fallthru
      _
    // Predicated region
    $region6: #{_lambda_.1} parent=1 // pred_check
      _
    $region7: #{_lambda_.1} parent=1 // pred_check_branch
      %18 = sbr.rel (0) target = $region9
    $region8: #{_lambda_.1} parent=1 // pred_region
      _
    $region9: #{_lambda_.1} parent=1 // pred_fallthru
      _
    // Predicated region
    $region10: #{_lambda_.1} parent=1 // pred_check
      _
    $region11: #{_lambda_.1} parent=1 // pred_check_branch
      %20 = sbr.rel (0) target = $region13
    $region12: #{_lambda_.1} parent=1 // pred_region
      _
    $region13: #{_lambda_.1} parent=1 // pred_fallthru
      _
    // Predicated region
    $region14: #{_lambda_.1} parent=1 // pred_check
      _
    $region15: #{_lambda_.1} parent=1 // pred_check_branch
      %22 = sbr.rel (0) target = $region17
    $region16: #{_lambda_.1} parent=1 // pred_region
      _
    $region17: #{_lambda_.1} parent=1 // pred_fallthru
      _
    // Predicated region
    $region18: #{_lambda_.1} parent=1 // pred_check
      _
    $region19: #{_lambda_.1} parent=1 // pred_check_branch
      %24 = sbr.rel (0) target = $region21
    $region20: #{_lambda_.1} parent=1 // pred_region
      _
    $region21: #{_lambda_.1} parent=1 // pred_fallthru
      _
    // Predicated region
    $region22: #{_lambda_.1} parent=1 // pred_check
      _
    $region23: #{_lambda_.1} parent=1 // pred_check_branch
      %26 = sbr.rel (0) target = $region25
    $region24: #{_lambda_.1} parent=1 // pred_region
      _
    $region25: #{_lambda_.1} parent=1 // pred_fallthru
      _
    // Predicated region
    $region26: #{_lambda_.1} parent=1 // pred_check
      _
    $region27: #{_lambda_.1} parent=1 // pred_check_branch
      %28 = sbr.rel (0) target = $region29
    $region28: #{_lambda_.1} parent=1 // pred_region
      _
    $region29: #{_lambda_.1} parent=1 // pred_fallthru
      _
    // Predicated region
    $region30: #{_lambda_.1} parent=1 // pred_check
      _
    $region31: #{_lambda_.1} parent=1 // pred_check_branch
      %30 = sbr.rel (0) target = $region33
    $region32: #{_lambda_.1} parent=1 // pred_region
      _
    $region33: #{_lambda_.1} parent=1 // pred_fallthru
      _
    // Predicated region
    $region34: #{_lambda_.1} parent=1 // pred_check
      _
    $region35: #{_lambda_.1} parent=1 // pred_check_branch
      %32 = sbr.rel (0) target = $region37
    $region36: #{_lambda_.1} parent=1 // pred_region
      _
    $region37: #{_lambda_.1} parent=1 // pred_fallthru
      _
    %v34 = vld [vmem:[%s1] sm:$0xf]
    %v35 = vld [vmem:[%s1 + $0x4] sm:$0xf]
    %v36 = vld [vmem:[%s1 + $0x8] sm:$0x3]
    %v37 = vld [vmem:[%s0] sm:$0xff]
    %v38 = vld [vmem:[%s0 + $0x8] sm:$0xff]
    %v39 = vld [vmem:[%s0 + $0x10] sm:$0xff]
    %v40 = vld [vmem:[%s0 + $0x18] sm:$0xff]
    %v41 = vld [vmem:[%s0 + $0x20] sm:$0xf]
    %v42 = vld [vmem:[%s0 + $0x24] sm:$0xff]
    %v43 = vld [vmem:[%s0 + $0x2c] sm:$0xff]
    %v44 = vld [vmem:[%s0 + $0x34] sm:$0xff]
    %v45 = vld [vmem:[%s0 + $0x3c] sm:$0xff]
    %v46 = vld [vmem:[%s0 + $0x44] sm:$0xf]
    %v47 = vld [vmem:[%s0 + $0x48] sm:$0xff]
    %v48 = vld [vmem:[%s0 + $0x50] sm:$0xff]
    %v49 = vld [vmem:[%s0 + $0x58] sm:$0xff]
    %v50 = vld [vmem:[%s0 + $0x60] sm:$0xff]
    %v51 = vld [vmem:[%s0 + $0x68] sm:$0xf]
    %v52 = vld [vmem:[%s0 + $0x6c] sm:$0x33]
    %v53 = vld [vmem:[%s0 + $0x74] sm:$0x33]
    %v54 = vld [vmem:[%s0 + $0x7c] sm:$0x33]
    %v55 = vld [vmem:[%s0 + $0x84] sm:$0x33]
    %v56 = vld [vmem:[%s0 + $0x8c] sm:$0x3]
    %v57 = vld [vmem:[%s2] sm:$0xff]
    %v58 = vld [vmem:[%s2 + $0x8] sm:$0xff]
    %v59 = vld [vmem:[%s2 + $0x10] sm:$0x7]
    %61 = vset.pattern.permute.xlu0 0
    %62 = vperm.xlu0 %61, %v57
    %v63 = vpop.permute.xlu0 %62
    %66 = vset.pattern.permute.xlu0 0
    %67 = vperm.xlu0 %66, %v58
    %v68 = vpop.permute.xlu0 %67
    %71 = vset.pattern.permute.xlu0 0
    %72 = vperm.xlu0 %71, %v59
    %v73 = vpop.permute.xlu0 %72
    %v78 = vunpack.c.l.b16 %v34
    %v79 = vunpack.c.l.b16 %v35
    %v80 = vunpack.c.l.b16 %v36
    %v81 = vpack.c.b16 %v79, %v78
    %v82 = vpack.c.b16 %v80, %v80
    %v103 = vunpack.c.l.b16 %v37
    %v104 = vunpack.c.h.b16 %v37
    %v105 = vunpack.c.l.b16 %v38
    %v106 = vunpack.c.h.b16 %v38
    %v107 = vunpack.c.l.b16 %v39
    %v108 = vunpack.c.h.b16 %v39
    %v109 = vunpack.c.l.b16 %v40
    %v110 = vunpack.c.h.b16 %v40
    %v111 = vunpack.c.l.b16 %v41
    %v112 = vunpack.c.l.b16 %v42
    %v113 = vunpack.c.h.b16 %v42
    %v114 = vunpack.c.l.b16 %v43
    %v115 = vunpack.c.h.b16 %v43
    %v116 = vunpack.c.l.b16 %v44
    %v117 = vunpack.c.h.b16 %v44
    %v118 = vunpack.c.l.b16 %v45
    %v119 = vunpack.c.h.b16 %v45
    %v120 = vunpack.c.l.b16 %v46
    %v121 = vunpack.c.l.b16 %v47
    %v122 = vunpack.c.h.b16 %v47
    %v123 = vunpack.c.l.b16 %v48
    %v124 = vunpack.c.h.b16 %v48
    %v125 = vunpack.c.l.b16 %v49
    %v126 = vunpack.c.h.b16 %v49
    %v127 = vunpack.c.l.b16 %v50
    %v128 = vunpack.c.h.b16 %v50
    %v129 = vunpack.c.l.b16 %v51
    %v130 = vunpack.c.l.b16 %v52
    %v131 = vunpack.c.h.b16 %v52
    %v132 = vunpack.c.l.b16 %v53
    %v133 = vunpack.c.h.b16 %v53
    %v134 = vunpack.c.l.b16 %v54
    %v135 = vunpack.c.h.b16 %v54
    %v136 = vunpack.c.l.b16 %v55
    %v137 = vunpack.c.h.b16 %v55
    %v138 = vunpack.c.l.b16 %v56
    %v139 = vpack.c.b16 %v112, %v103
    %v140 = vpack.c.b16 %v113, %v104
    %v141 = vpack.c.b16 %v114, %v105
    %v142 = vpack.c.b16 %v115, %v106
    %v143 = vpack.c.b16 %v116, %v107
    %v144 = vpack.c.b16 %v117, %v108
    %v145 = vpack.c.b16 %v118, %v109
    %v146 = vpack.c.b16 %v119, %v110
    %v147 = vpack.c.b16 %v120, %v111
    %v148 = vpack.c.b16 %v130, %v121
    %v149 = vpack.c.b16 %v131, %v122
    %v150 = vpack.c.b16 %v132, %v123
    %v151 = vpack.c.b16 %v133, %v124
    %v152 = vpack.c.b16 %v134, %v125
    %v153 = vpack.c.b16 %v135, %v126
    %v154 = vpack.c.b16 %v136, %v127
    %v155 = vpack.c.b16 %v137, %v128
    %v156 = vpack.c.b16 %v138, %v129
    %vm166 = vcmask 220160
    %v168 = vsel %vm166, %v81, 0
    %v171 = vsel %vm166, %v82, 0
    %vm173 = vcmask 1044480
    %vm174 = vcmask 1045504
    %v175 = vsel %vm173, 4294967295, 65535
    %v176 = vsel %vm174, %v175, 0
    %v178 = vand.u32 %v148, %v176
    %v181 = vand.u32 %v149, %v176
    %v184 = vand.u32 %v150, %v176
    %v187 = vand.u32 %v151, %v176
    %v190 = vand.u32 %v152, %v176
    %v193 = vand.u32 %v153, %v176
    %v196 = vand.u32 %v154, %v176
    %v199 = vand.u32 %v155, %v176
    %v202 = vand.u32 %v156, %v176
    %204 = vmatprep.subr.bf16.mxu0 %v140
    %205 = vmatpush1.bf16.msra.mxu0 %v139
    %206 = vmatprep.subr.bf16.mxu0 %v181
    %207 = vmatpush1.bf16.msra.mxu0 %v178
    %208 = vmatprep.subr.bf16.mxu0 0
    %209 = vmatpush1.bf16.msra.mxu0 0
    %210 = vmatprep.subr.bf16.mxu0 0
    %211 = vmatpush1.bf16.msra.mxu0 0
    %212 = vmatprep.subr.bf16.mxu0 0
    %213 = vmatpush1.bf16.msra.mxu0 0
    %214 = vmatprep.subr.bf16.mxu0 0
    %215 = vmatpush1.bf16.msra.mxu0 0
    %216 = vmatprep.subr.bf16.mxu0 0
    %217 = vmatpush1.bf16.msra.mxu0 0
    %218 = vmatprep.subr.bf16.mxu0 0
    %219 = vmatpush1.bf16.msra.mxu0 0
    %220 = vmatprep.subr.bf16.mxu0 0
    %221 = vmatpush1.bf16.msra.mxu0 0
    %222 = vmatprep.subr.bf16.mxu0 0
    %223 = vmatpush1.bf16.msra.mxu0 0
    %224 = vmatprep.subr.bf16.mxu0 0
    %225 = vmatpush1.bf16.msra.mxu0 0
    %226 = vmatprep.subr.bf16.mxu0 0
    %227 = vmatpush1.bf16.msra.mxu0 0
    %228 = vmatprep.subr.bf16.mxu0 0
    %229 = vmatpush1.bf16.msra.mxu0 0
    %230 = vmatprep.subr.bf16.mxu0 0
    %231 = vmatpush1.bf16.msra.mxu0 0
    %232 = vmatprep.subr.bf16.mxu0 0
    %233 = vmatpush1.bf16.msra.mxu0 0
    %234 = vmatprep.subr.bf16.mxu0 0
    %235 = vmatpush1.bf16.msra.mxu0 0
    %236 = vmatprep.mubr.bf16.mxu0 0
    %237 = vmatmul.mubr.bf16.gmra.mrb[0].mxu0 %v168
    %v238 = vpop.f32.mrb[0].mxu0
    %v239 = vadd.f32 %v63, %v238
    %v240 = vpop.f32.mrb[0].mxu0
    %v241 = vadd.f32 %v63, %v240
    %v242 = vpop.f32.mrb[0].mxu0
    %v243 = vadd.f32 %v68, %v242
    %v244 = vpop.f32.mrb[0].mxu0
    %v245 = vadd.f32 %v68, %v244
    %246 = vmatprep.mubr.bf16.mxu0 0
    %247 = vmatmul.mubr.bf16.gmra.mrb[0].mxu0 %v171
    %v248 = vpop.f32.mrb[0].mxu0
    %v249 = vadd.f32 %v73, %v248
    %v250 = vpop.f32.mrb[0].mxu0
    %v251 = vadd.f32 %v73, %v250
    %v252 = vpop.f32.mrb[0].mxu0
    %v253 = vpop.f32.mrb[0].mxu0
    %254 = vdwg.mxu0
    %255 = vmatprep.subr.bf16.mxu0 %v142
    %256 = vmatpush1.bf16.msra.mxu0 %v141
    %257 = vmatprep.subr.bf16.mxu0 %v187
    %258 = vmatpush1.bf16.msra.mxu0 %v184
    %259 = vmatprep.subr.bf16.mxu0 0
    %260 = vmatpush1.bf16.msra.mxu0 0
    %261 = vmatprep.subr.bf16.mxu0 0
    %262 = vmatpush1.bf16.msra.mxu0 0
    %263 = vmatprep.subr.bf16.mxu0 0
    %264 = vmatpush1.bf16.msra.mxu0 0
    %265 = vmatprep.subr.bf16.mxu0 0
    %266 = vmatpush1.bf16.msra.mxu0 0
    %267 = vmatprep.subr.bf16.mxu0 0
    %268 = vmatpush1.bf16.msra.mxu0 0
    %269 = vmatprep.subr.bf16.mxu0 0
    %270 = vmatpush1.bf16.msra.mxu0 0
    %271 = vmatprep.subr.bf16.mxu0 0
    %272 = vmatpush1.bf16.msra.mxu0 0
    %273 = vmatprep.subr.bf16.mxu0 0
    %274 = vmatpush1.bf16.msra.mxu0 0
    %275 = vmatprep.subr.bf16.mxu0 0
    %276 = vmatpush1.bf16.msra.mxu0 0
    %277 = vmatprep.subr.bf16.mxu0 0
    %278 = vmatpush1.bf16.msra.mxu0 0
    %279 = vmatprep.subr.bf16.mxu0 0
    %280 = vmatpush1.bf16.msra.mxu0 0
    %281 = vmatprep.subr.bf16.mxu0 0
    %282 = vmatpush1.bf16.msra.mxu0 0
    %283 = vmatprep.subr.bf16.mxu0 0
    %284 = vmatpush1.bf16.msra.mxu0 0
    %285 = vmatprep.subr.bf16.mxu0 0
    %286 = vmatpush1.bf16.msra.mxu0 0
    %287 = vmatprep.mubr.bf16.mxu0 0
    %288 = vmatmul.mubr.bf16.gmra.mrb[0].mxu0 %v168
    %v289 = vpop.f32.mrb[0].mxu0
    %v290 = vadd.f32 %v63, %v289
    %v291 = vpop.f32.mrb[0].mxu0
    %v292 = vadd.f32 %v63, %v291
    %v293 = vpop.f32.mrb[0].mxu0
    %v294 = vadd.f32 %v68, %v293
    %v295 = vpop.f32.mrb[0].mxu0
    %v296 = vadd.f32 %v68, %v295
    %297 = vmatprep.mubr.bf16.mxu0 0
    %298 = vmatmul.mubr.bf16.gmra.mrb[0].mxu0 %v171
    %v299 = vpop.f32.mrb[0].mxu0
    %v300 = vadd.f32 %v73, %v299
    %v301 = vpop.f32.mrb[0].mxu0
    %v302 = vadd.f32 %v73, %v301
    %v303 = vpop.f32.mrb[0].mxu0
    %v304 = vpop.f32.mrb[0].mxu0
    %305 = vdwg.mxu0
    %306 = vmatprep.subr.bf16.mxu0 %v144
    %307 = vmatpush1.bf16.msra.mxu0 %v143
    %308 = vmatprep.subr.bf16.mxu0 %v193
    %309 = vmatpush1.bf16.msra.mxu0 %v190
    %310 = vmatprep.subr.bf16.mxu0 0
    %311 = vmatpush1.bf16.msra.mxu0 0
    %312 = vmatprep.subr.bf16.mxu0 0
    %313 = vmatpush1.bf16.msra.mxu0 0
    %314 = vmatprep.subr.bf16.mxu0 0
    %315 = vmatpush1.bf16.msra.mxu0 0
    %316 = vmatprep.subr.bf16.mxu0 0
    %317 = vmatpush1.bf16.msra.mxu0 0
    %318 = vmatprep.subr.bf16.mxu0 0
    %319 = vmatpush1.bf16.msra.mxu0 0
    %320 = vmatprep.subr.bf16.mxu0 0
    %321 = vmatpush1.bf16.msra.mxu0 0
    %322 = vmatprep.subr.bf16.mxu0 0
    %323 = vmatpush1.bf16.msra.mxu0 0
    %324 = vmatprep.subr.bf16.mxu0 0
    %325 = vmatpush1.bf16.msra.mxu0 0
    %326 = vmatprep.subr.bf16.mxu0 0
    %327 = vmatpush1.bf16.msra.mxu0 0
    %328 = vmatprep.subr.bf16.mxu0 0
    %329 = vmatpush1.bf16.msra.mxu0 0
    %330 = vmatprep.subr.bf16.mxu0 0
    %331 = vmatpush1.bf16.msra.mxu0 0
    %332 = vmatprep.subr.bf16.mxu0 0
    %333 = vmatpush1.bf16.msra.mxu0 0
    %334 = vmatprep.subr.bf16.mxu0 0
    %335 = vmatpush1.bf16.msra.mxu0 0
    %336 = vmatprep.subr.bf16.mxu0 0
    %337 = vmatpush1.bf16.msra.mxu0 0
    %338 = vmatprep.mubr.bf16.mxu0 0
    %339 = vmatmul.mubr.bf16.gmra.mrb[0].mxu0 %v168
    %v340 = vpop.f32.mrb[0].mxu0
    %v341 = vadd.f32 %v63, %v340
    %v342 = vpop.f32.mrb[0].mxu0
    %v343 = vadd.f32 %v63, %v342
    %v344 = vpop.f32.mrb[0].mxu0
    %v345 = vadd.f32 %v68, %v344
    %v346 = vpop.f32.mrb[0].mxu0
    %v347 = vadd.f32 %v68, %v346
    %348 = vmatprep.mubr.bf16.mxu0 0
    %349 = vmatmul.mubr.bf16.gmra.mrb[0].mxu0 %v171
    %v350 = vpop.f32.mrb[0].mxu0
    %v351 = vadd.f32 %v73, %v350
    %v352 = vpop.f32.mrb[0].mxu0
    %v353 = vadd.f32 %v73, %v352
    %v354 = vpop.f32.mrb[0].mxu0
    %v355 = vpop.f32.mrb[0].mxu0
    %356 = vdwg.mxu0
    %357 = vmatprep.subr.bf16.mxu0 %v146
    %358 = vmatpush1.bf16.msra.mxu0 %v145
    %359 = vmatprep.subr.bf16.mxu0 %v199
    %360 = vmatpush1.bf16.msra.mxu0 %v196
    %361 = vmatprep.subr.bf16.mxu0 0
    %362 = vmatpush1.bf16.msra.mxu0 0
    %363 = vmatprep.subr.bf16.mxu0 0
    %364 = vmatpush1.bf16.msra.mxu0 0
    %365 = vmatprep.subr.bf16.mxu0 0
    %366 = vmatpush1.bf16.msra.mxu0 0
    %367 = vmatprep.subr.bf16.mxu0 0
    %368 = vmatpush1.bf16.msra.mxu0 0
    %369 = vmatprep.subr.bf16.mxu0 0
    %370 = vmatpush1.bf16.msra.mxu0 0
    %371 = vmatprep.subr.bf16.mxu0 0
    %372 = vmatpush1.bf16.msra.mxu0 0
    %373 = vmatprep.subr.bf16.mxu0 0
    %374 = vmatpush1.bf16.msra.mxu0 0
    %375 = vmatprep.subr.bf16.mxu0 0
    %376 = vmatpush1.bf16.msra.mxu0 0
    %377 = vmatprep.subr.bf16.mxu0 0
    %378 = vmatpush1.bf16.msra.mxu0 0
    %379 = vmatprep.subr.bf16.mxu0 0
    %380 = vmatpush1.bf16.msra.mxu0 0
    %381 = vmatprep.subr.bf16.mxu0 0
    %382 = vmatpush1.bf16.msra.mxu0 0
    %383 = vmatprep.subr.bf16.mxu0 0
    %384 = vmatpush1.bf16.msra.mxu0 0
    %385 = vmatprep.subr.bf16.mxu0 0
    %386 = vmatpush1.bf16.msra.mxu0 0
    %387 = vmatprep.subr.bf16.mxu0 0
    %388 = vmatpush1.bf16.msra.mxu0 0
    %389 = vmatprep.mubr.bf16.mxu0 0
    %390 = vmatmul.mubr.bf16.gmra.mrb[0].mxu0 %v168
    %v391 = vpop.f32.mrb[0].mxu0
    %v392 = vadd.f32 %v63, %v391
    %v393 = vpop.f32.mrb[0].mxu0
    %v394 = vadd.f32 %v63, %v393
    %v395 = vpop.f32.mrb[0].mxu0
    %v396 = vadd.f32 %v68, %v395
    %v397 = vpop.f32.mrb[0].mxu0
    %v398 = vadd.f32 %v68, %v397
    %399 = vmatprep.mubr.bf16.mxu0 0
    %400 = vmatmul.mubr.bf16.gmra.mrb[0].mxu0 %v171
    %v401 = vpop.f32.mrb[0].mxu0
    %v402 = vadd.f32 %v73, %v401
    %v403 = vpop.f32.mrb[0].mxu0
    %v404 = vadd.f32 %v73, %v403
    %v405 = vpop.f32.mrb[0].mxu0
    %v406 = vpop.f32.mrb[0].mxu0
    %407 = vdwg.mxu0
    %408 = vmatprep.subr.bf16.mxu0 0
    %409 = vmatpush1.bf16.msra.mxu0 %v147
    %410 = vmatprep.subr.bf16.mxu0 0
    %411 = vmatpush1.bf16.msra.mxu0 %v202
    %412 = vmatprep.subr.bf16.mxu0 0
    %413 = vmatpush1.bf16.msra.mxu0 0
    %414 = vmatprep.subr.bf16.mxu0 0
    %415 = vmatpush1.bf16.msra.mxu0 0
    %416 = vmatprep.subr.bf16.mxu0 0
    %417 = vmatpush1.bf16.msra.mxu0 0
    %418 = vmatprep.subr.bf16.mxu0 0
    %419 = vmatpush1.bf16.msra.mxu0 0
    %420 = vmatprep.subr.bf16.mxu0 0
    %421 = vmatpush1.bf16.msra.mxu0 0
    %422 = vmatprep.subr.bf16.mxu0 0
    %423 = vmatpush1.bf16.msra.mxu0 0
    %424 = vmatprep.subr.bf16.mxu0 0
    %425 = vmatpush1.bf16.msra.mxu0 0
    %426 = vmatprep.subr.bf16.mxu0 0
    %427 = vmatpush1.bf16.msra.mxu0 0
    %428 = vmatprep.subr.bf16.mxu0 0
    %429 = vmatpush1.bf16.msra.mxu0 0
    %430 = vmatprep.subr.bf16.mxu0 0
    %431 = vmatpush1.bf16.msra.mxu0 0
    %432 = vmatprep.subr.bf16.mxu0 0
    %433 = vmatpush1.bf16.msra.mxu0 0
    %434 = vmatprep.subr.bf16.mxu0 0
    %435 = vmatpush1.bf16.msra.mxu0 0
    %436 = vmatprep.subr.bf16.mxu0 0
    %437 = vmatpush1.bf16.msra.mxu0 0
    %438 = vmatprep.subr.bf16.mxu0 0
    %439 = vmatpush1.bf16.msra.mxu0 0
    %440 = vmatprep.mubr.bf16.mxu0 0
    %441 = vmatmul.mubr.bf16.gmra.mrb[0].mxu0 %v168
    %v442 = vpop.f32.mrb[0].mxu0
    %v443 = vadd.f32 %v63, %v442
    %v444 = vpop.f32.mrb[0].mxu0
    %v445 = vpop.f32.mrb[0].mxu0
    %v446 = vadd.f32 %v68, %v445
    %v447 = vpop.f32.mrb[0].mxu0
    %448 = vmatprep.mubr.bf16.mxu0 0
    %449 = vmatmul.mubr.bf16.gmra.mrb[0].mxu0 %v171
    %v450 = vpop.f32.mrb[0].mxu0
    %v451 = vadd.f32 %v73, %v450
    %v452 = vpop.f32.mrb[0].mxu0
    %v453 = vpop.f32.mrb[0].mxu0
    %v454 = vpop.f32.mrb[0].mxu0
    %455 = vdwg.mxu0
    %v456 = vmax.f32 %v239, 0.0
    %v457 = vmax.f32 %v241, 0.0
    %v458 = vmax.f32 %v290, 0.0
    %v459 = vmax.f32 %v292, 0.0
    %v460 = vmax.f32 %v341, 0.0
    %v461 = vmax.f32 %v343, 0.0
    %v462 = vmax.f32 %v392, 0.0
    %v463 = vmax.f32 %v394, 0.0
    %v464 = vmax.f32 %v443, 0.0
    %v465 = vmax.f32 %v243, 0.0
    %v466 = vmax.f32 %v245, 0.0
    %v467 = vmax.f32 %v294, 0.0
    %v468 = vmax.f32 %v296, 0.0
    %v469 = vmax.f32 %v345, 0.0
    %v470 = vmax.f32 %v347, 0.0
    %v471 = vmax.f32 %v396, 0.0
    %v472 = vmax.f32 %v398, 0.0
    %v473 = vmax.f32 %v446, 0.0
    %v474 = vtanh.pop %v249
    %v475 = vtanh.pop %v251
    %v476 = vtanh.pop %v300
    %v477 = vtanh.pop %v302
    %v478 = vtanh.pop %v351
    %v479 = vtanh.pop %v353
    %v480 = vtanh.pop %v402
    %v481 = vtanh.pop %v404
    %v482 = vtanh.pop %v451
    %v483 = vld [vmem:[%s3] sm:$0xff]
    %v484 = vld [vmem:[%s3 + $0x8] sm:$0xff]
    %v485 = vld [vmem:[%s3 + $0x10] sm:$0x3]
    %v489 = vcombine.high %v483, %v483
    %v491 = vunpack.c.l.s4 1983009808
    %v492 = vunpack.c.0.s8 %v491
    %v493 = vlaneseq
    %v494 = vshrl.u32 %v493, 7
    %v495 = vsub.s32 %v492, %v494
    %v496 = vrot.slane %v483, %v495
    %v498 = vunpack.c.l.s4 1983009808
    %v499 = vunpack.c.0.s8 %v498
    %v500 = vlaneseq
    %v501 = vshrl.u32 %v500, 7
    %v502 = vsub.s32 %v499, %v501
    %v503 = vrot.slane %v489, %v502
    %v504 = vcombine.high %v496, %v496
    %v505 = vcombine.high %v503, %v503
    %v506 = vcombine.high %v484, %v484
    %v508 = vunpack.c.l.s4 1983009808
    %v509 = vunpack.c.0.s8 %v508
    %v510 = vlaneseq
    %v511 = vshrl.u32 %v510, 7
    %v512 = vsub.s32 %v509, %v511
    %v513 = vrot.slane %v484, %v512
    %v515 = vunpack.c.l.s4 1983009808
    %v516 = vunpack.c.0.s8 %v515
    %v517 = vlaneseq
    %v518 = vshrl.u32 %v517, 7
    %v519 = vsub.s32 %v516, %v518
    %v520 = vrot.slane %v506, %v519
    %v521 = vcombine.high %v513, %v513
    %v522 = vcombine.high %v520, %v520
    %v524 = vunpack.c.l.s4 1983009808
    %v525 = vunpack.c.0.s8 %v524
    %v526 = vlaneseq
    %v527 = vshrl.u32 %v526, 7
    %v528 = vsub.s32 %v525, %v527
    %v529 = vrot.slane %v485, %v528
    %539 = vmatprep.subr.mxu0 %v457
    %540 = vmatpush1.xpose.msra.mxu0 %v456
    %541 = vmatprep.subr.mxu0 %v466
    %542 = vmatpush1.xpose.msra.mxu0 %v465
    %543 = vmatprep.subr.mxu0 0.0
    %544 = vmatpush1.xpose.msra.mxu0 0.0
    %545 = vmatprep.subr.mxu0 0.0
    %546 = vmatpush1.xpose.msra.mxu0 0.0
    %547 = vmatprep.subr.mxu0 0.0
    %548 = vmatpush1.xpose.msra.mxu0 0.0
    %549 = vmatprep.subr.mxu0 0.0
    %550 = vmatpush1.xpose.msra.mxu0 0.0
    %551 = vmatprep.subr.mxu0 0.0
    %552 = vmatpush1.xpose.msra.mxu0 0.0
    %553 = vmatprep.subr.mxu0 0.0
    %554 = vmatpush1.xpose.msra.mxu0 0.0
    %555 = vmatprep.subr.mxu0 0.0
    %556 = vmatpush1.xpose.msra.mxu0 0.0
    %557 = vmatprep.subr.mxu0 0.0
    %558 = vmatpush1.xpose.msra.mxu0 0.0
    %559 = vmatprep.subr.mxu0 0.0
    %560 = vmatpush1.xpose.msra.mxu0 0.0
    %561 = vmatprep.subr.mxu0 0.0
    %562 = vmatpush1.xpose.msra.mxu0 0.0
    %563 = vmatprep.subr.mxu0 0.0
    %564 = vmatpush1.xpose.msra.mxu0 0.0
    %565 = vmatprep.subr.mxu0 0.0
    %566 = vmatpush1.xpose.msra.mxu0 0.0
    %567 = vmatprep.subr.mxu0 0.0
    %568 = vmatpush1.xpose.msra.mxu0 0.0
    %569 = vmatprep.subr.mxu0 0.0
    %570 = vmatpush1.xpose.msra.mxu0 0.0
    %571 = vmatprep.subr.mxu0 0.0
    %572 = vmatpush1.xpose.msra.mxu0 0.0
    %573 = vmatprep.subr.mxu0 0.0
    %574 = vmatpush1.xpose.msra.mxu0 0.0
    %575 = vmatprep.subr.mxu0 0.0
    %576 = vmatpush1.xpose.msra.mxu0 0.0
    %577 = vmatprep.subr.mxu0 0.0
    %578 = vmatpush1.xpose.msra.mxu0 0.0
    %579 = vmatprep.subr.mxu0 0.0
    %580 = vmatpush1.xpose.msra.mxu0 0.0
    %581 = vmatprep.subr.mxu0 0.0
    %582 = vmatpush1.xpose.msra.mxu0 0.0
    %583 = vmatprep.subr.mxu0 0.0
    %584 = vmatpush1.xpose.msra.mxu0 0.0
    %585 = vmatprep.subr.mxu0 0.0
    %586 = vmatpush1.xpose.msra.mxu0 0.0
    %587 = vmatprep.subr.mxu0 0.0
    %588 = vmatpush1.xpose.msra.mxu0 0.0
    %589 = vmatprep.subr.mxu0 0.0
    %590 = vmatpush1.xpose.msra.mxu0 0.0
    %591 = vmatprep.subr.mxu0 0.0
    %592 = vmatpush1.xpose.msra.mxu0 0.0
    %593 = vmatprep.subr.mxu0 0.0
    %594 = vmatpush1.xpose.msra.mxu0 0.0
    %595 = vmatprep.subr.mxu0 0.0
    %596 = vmatpush1.xpose.msra.mxu0 0.0
    %597 = vmatprep.subr.mxu0 0.0
    %598 = vmatpush1.xpose.msra.mxu0 0.0
    %599 = vmatprep.subr.mxu0 0.0
    %600 = vmatpush1.xpose.msra.mxu0 0.0
    %601 = vmatprep.subr.mxu0 0.0
    %602 = vmatpush1.xpose.msra.mxu0 0.0
    %603 = vmatprep.mubr.f32.mxu0 %v504
    %604 = vmatmul.mubr.f32.gmra.mrb[0].mxu0 %v496
    %v605 = vpop.f32.mrb[0].mxu0
    %v606 = vadd.f32 0.0, %v605
    %v607 = vpop.f32.mrb[0].mxu0
    %608 = vdwg.mxu0
    %609 = vmatprep.subr.mxu0 %v459
    %610 = vmatpush1.xpose.msra.mxu0 %v458
    %611 = vmatprep.subr.mxu0 %v468
    %612 = vmatpush1.xpose.msra.mxu0 %v467
    %613 = vmatprep.subr.mxu0 0.0
    %614 = vmatpush1.xpose.msra.mxu0 0.0
    %615 = vmatprep.subr.mxu0 0.0
    %616 = vmatpush1.xpose.msra.mxu0 0.0
    %617 = vmatprep.subr.mxu0 0.0
    %618 = vmatpush1.xpose.msra.mxu0 0.0
    %619 = vmatprep.subr.mxu0 0.0
    %620 = vmatpush1.xpose.msra.mxu0 0.0
    %621 = vmatprep.subr.mxu0 0.0
    %622 = vmatpush1.xpose.msra.mxu0 0.0
    %623 = vmatprep.subr.mxu0 0.0
    %624 = vmatpush1.xpose.msra.mxu0 0.0
    %625 = vmatprep.subr.mxu0 0.0
    %626 = vmatpush1.xpose.msra.mxu0 0.0
    %627 = vmatprep.subr.mxu0 0.0
    %628 = vmatpush1.xpose.msra.mxu0 0.0
    %629 = vmatprep.subr.mxu0 0.0
    %630 = vmatpush1.xpose.msra.mxu0 0.0
    %631 = vmatprep.subr.mxu0 0.0
    %632 = vmatpush1.xpose.msra.mxu0 0.0
    %633 = vmatprep.subr.mxu0 0.0
    %634 = vmatpush1.xpose.msra.mxu0 0.0
    %635 = vmatprep.subr.mxu0 0.0
    %636 = vmatpush1.xpose.msra.mxu0 0.0
    %637 = vmatprep.subr.mxu0 0.0
    %638 = vmatpush1.xpose.msra.mxu0 0.0
    %639 = vmatprep.subr.mxu0 0.0
    %640 = vmatpush1.xpose.msra.mxu0 0.0
    %641 = vmatprep.subr.mxu0 0.0
    %642 = vmatpush1.xpose.msra.mxu0 0.0
    %643 = vmatprep.subr.mxu0 0.0
    %644 = vmatpush1.xpose.msra.mxu0 0.0
    %645 = vmatprep.subr.mxu0 0.0
    %646 = vmatpush1.xpose.msra.mxu0 0.0
    %647 = vmatprep.subr.mxu0 0.0
    %648 = vmatpush1.xpose.msra.mxu0 0.0
    %649 = vmatprep.subr.mxu0 0.0
    %650 = vmatpush1.xpose.msra.mxu0 0.0
    %651 = vmatprep.subr.mxu0 0.0
    %652 = vmatpush1.xpose.msra.mxu0 0.0
    %653 = vmatprep.subr.mxu0 0.0
    %654 = vmatpush1.xpose.msra.mxu0 0.0
    %655 = vmatprep.subr.mxu0 0.0
    %656 = vmatpush1.xpose.msra.mxu0 0.0
    %657 = vmatprep.subr.mxu0 0.0
    %658 = vmatpush1.xpose.msra.mxu0 0.0
    %659 = vmatprep.subr.mxu0 0.0
    %660 = vmatpush1.xpose.msra.mxu0 0.0
    %661 = vmatprep.subr.mxu0 0.0
    %662 = vmatpush1.xpose.msra.mxu0 0.0
    %663 = vmatprep.subr.mxu0 0.0
    %664 = vmatpush1.xpose.msra.mxu0 0.0
    %665 = vmatprep.subr.mxu0 0.0
    %666 = vmatpush1.xpose.msra.mxu0 0.0
    %667 = vmatprep.subr.mxu0 0.0
    %668 = vmatpush1.xpose.msra.mxu0 0.0
    %669 = vmatprep.subr.mxu0 0.0
    %670 = vmatpush1.xpose.msra.mxu0 0.0
    %671 = vmatprep.subr.mxu0 0.0
    %672 = vmatpush1.xpose.msra.mxu0 0.0
    %673 = vmatprep.mubr.f32.mxu0 %v505
    %674 = vmatmul.mubr.f32.gmra.mrb[0].mxu0 %v503
    %v675 = vpop.f32.mrb[0].mxu0
    %v676 = vadd.f32 %v606, %v675
    %v677 = vpop.f32.mrb[0].mxu0
    %678 = vdwg.mxu0
    %679 = vmatprep.subr.mxu0 %v461
    %680 = vmatpush1.xpose.msra.mxu0 %v460
    %681 = vmatprep.subr.mxu0 %v470
    %682 = vmatpush1.xpose.msra.mxu0 %v469
    %683 = vmatprep.subr.mxu0 0.0
    %684 = vmatpush1.xpose.msra.mxu0 0.0
    %685 = vmatprep.subr.mxu0 0.0
    %686 = vmatpush1.xpose.msra.mxu0 0.0
    %687 = vmatprep.subr.mxu0 0.0
    %688 = vmatpush1.xpose.msra.mxu0 0.0
    %689 = vmatprep.subr.mxu0 0.0
    %690 = vmatpush1.xpose.msra.mxu0 0.0
    %691 = vmatprep.subr.mxu0 0.0
    %692 = vmatpush1.xpose.msra.mxu0 0.0
    %693 = vmatprep.subr.mxu0 0.0
    %694 = vmatpush1.xpose.msra.mxu0 0.0
    %695 = vmatprep.subr.mxu0 0.0
    %696 = vmatpush1.xpose.msra.mxu0 0.0
    %697 = vmatprep.subr.mxu0 0.0
    %698 = vmatpush1.xpose.msra.mxu0 0.0
    %699 = vmatprep.subr.mxu0 0.0
    %700 = vmatpush1.xpose.msra.mxu0 0.0
    %701 = vmatprep.subr.mxu0 0.0
    %702 = vmatpush1.xpose.msra.mxu0 0.0
    %703 = vmatprep.subr.mxu0 0.0
    %704 = vmatpush1.xpose.msra.mxu0 0.0
    %705 = vmatprep.subr.mxu0 0.0
    %706 = vmatpush1.xpose.msra.mxu0 0.0
    %707 = vmatprep.subr.mxu0 0.0
    %708 = vmatpush1.xpose.msra.mxu0 0.0
    %709 = vmatprep.subr.mxu0 0.0
    %710 = vmatpush1.xpose.msra.mxu0 0.0
    %711 = vmatprep.subr.mxu0 0.0
    %712 = vmatpush1.xpose.msra.mxu0 0.0
    %713 = vmatprep.subr.mxu0 0.0
    %714 = vmatpush1.xpose.msra.mxu0 0.0
    %715 = vmatprep.subr.mxu0 0.0
    %716 = vmatpush1.xpose.msra.mxu0 0.0
    %717 = vmatprep.subr.mxu0 0.0
    %718 = vmatpush1.xpose.msra.mxu0 0.0
    %719 = vmatprep.subr.mxu0 0.0
    %720 = vmatpush1.xpose.msra.mxu0 0.0
    %721 = vmatprep.subr.mxu0 0.0
    %722 = vmatpush1.xpose.msra.mxu0 0.0
    %723 = vmatprep.subr.mxu0 0.0
    %724 = vmatpush1.xpose.msra.mxu0 0.0
    %725 = vmatprep.subr.mxu0 0.0
    %726 = vmatpush1.xpose.msra.mxu0 0.0
    %727 = vmatprep.subr.mxu0 0.0
    %728 = vmatpush1.xpose.msra.mxu0 0.0
    %729 = vmatprep.subr.mxu0 0.0
    %730 = vmatpush1.xpose.msra.mxu0 0.0
    %731 = vmatprep.subr.mxu0 0.0
    %732 = vmatpush1.xpose.msra.mxu0 0.0
    %733 = vmatprep.subr.mxu0 0.0
    %734 = vmatpush1.xpose.msra.mxu0 0.0
    %735 = vmatprep.subr.mxu0 0.0
    %736 = vmatpush1.xpose.msra.mxu0 0.0
    %737 = vmatprep.subr.mxu0 0.0
    %738 = vmatpush1.xpose.msra.mxu0 0.0
    %739 = vmatprep.subr.mxu0 0.0
    %740 = vmatpush1.xpose.msra.mxu0 0.0
    %741 = vmatprep.subr.mxu0 0.0
    %742 = vmatpush1.xpose.msra.mxu0 0.0
    %743 = vmatprep.mubr.f32.mxu0 %v521
    %744 = vmatmul.mubr.f32.gmra.mrb[0].mxu0 %v513
    %v745 = vpop.f32.mrb[0].mxu0
    %v746 = vadd.f32 %v676, %v745
    %v747 = vpop.f32.mrb[0].mxu0
    %748 = vdwg.mxu0
    %749 = vmatprep.subr.mxu0 %v463
    %750 = vmatpush1.xpose.msra.mxu0 %v462
    %751 = vmatprep.subr.mxu0 %v472
    %752 = vmatpush1.xpose.msra.mxu0 %v471
    %753 = vmatprep.subr.mxu0 0.0
    %754 = vmatpush1.xpose.msra.mxu0 0.0
    %755 = vmatprep.subr.mxu0 0.0
    %756 = vmatpush1.xpose.msra.mxu0 0.0
    %757 = vmatprep.subr.mxu0 0.0
    %758 = vmatpush1.xpose.msra.mxu0 0.0
    %759 = vmatprep.subr.mxu0 0.0
    %760 = vmatpush1.xpose.msra.mxu0 0.0
    %761 = vmatprep.subr.mxu0 0.0
    %762 = vmatpush1.xpose.msra.mxu0 0.0
    %763 = vmatprep.subr.mxu0 0.0
    %764 = vmatpush1.xpose.msra.mxu0 0.0
    %765 = vmatprep.subr.mxu0 0.0
    %766 = vmatpush1.xpose.msra.mxu0 0.0
    %767 = vmatprep.subr.mxu0 0.0
    %768 = vmatpush1.xpose.msra.mxu0 0.0
    %769 = vmatprep.subr.mxu0 0.0
    %770 = vmatpush1.xpose.msra.mxu0 0.0
    %771 = vmatprep.subr.mxu0 0.0
    %772 = vmatpush1.xpose.msra.mxu0 0.0
    %773 = vmatprep.subr.mxu0 0.0
    %774 = vmatpush1.xpose.msra.mxu0 0.0
    %775 = vmatprep.subr.mxu0 0.0
    %776 = vmatpush1.xpose.msra.mxu0 0.0
    %777 = vmatprep.subr.mxu0 0.0
    %778 = vmatpush1.xpose.msra.mxu0 0.0
    %779 = vmatprep.subr.mxu0 0.0
    %780 = vmatpush1.xpose.msra.mxu0 0.0
    %781 = vmatprep.subr.mxu0 0.0
    %782 = vmatpush1.xpose.msra.mxu0 0.0
    %783 = vmatprep.subr.mxu0 0.0
    %784 = vmatpush1.xpose.msra.mxu0 0.0
    %785 = vmatprep.subr.mxu0 0.0
    %786 = vmatpush1.xpose.msra.mxu0 0.0
    %787 = vmatprep.subr.mxu0 0.0
    %788 = vmatpush1.xpose.msra.mxu0 0.0
    %789 = vmatprep.subr.mxu0 0.0
    %790 = vmatpush1.xpose.msra.mxu0 0.0
    %791 = vmatprep.subr.mxu0 0.0
    %792 = vmatpush1.xpose.msra.mxu0 0.0
    %793 = vmatprep.subr.mxu0 0.0
    %794 = vmatpush1.xpose.msra.mxu0 0.0
    %795 = vmatprep.subr.mxu0 0.0
    %796 = vmatpush1.xpose.msra.mxu0 0.0
    %797 = vmatprep.subr.mxu0 0.0
    %798 = vmatpush1.xpose.msra.mxu0 0.0
    %799 = vmatprep.subr.mxu0 0.0
    %800 = vmatpush1.xpose.msra.mxu0 0.0
    %801 = vmatprep.subr.mxu0 0.0
    %802 = vmatpush1.xpose.msra.mxu0 0.0
    %803 = vmatprep.subr.mxu0 0.0
    %804 = vmatpush1.xpose.msra.mxu0 0.0
    %805 = vmatprep.subr.mxu0 0.0
    %806 = vmatpush1.xpose.msra.mxu0 0.0
    %807 = vmatprep.subr.mxu0 0.0
    %808 = vmatpush1.xpose.msra.mxu0 0.0
    %809 = vmatprep.subr.mxu0 0.0
    %810 = vmatpush1.xpose.msra.mxu0 0.0
    %811 = vmatprep.subr.mxu0 0.0
    %812 = vmatpush1.xpose.msra.mxu0 0.0
    %813 = vmatprep.mubr.f32.mxu0 %v522
    %814 = vmatmul.mubr.f32.gmra.mrb[0].mxu0 %v520
    %v815 = vpop.f32.mrb[0].mxu0
    %v816 = vadd.f32 %v746, %v815
    %v817 = vpop.f32.mrb[0].mxu0
    %818 = vdwg.mxu0
    %819 = vmatprep.subr.mxu0 0.0
    %820 = vmatpush1.xpose.msra.mxu0 %v464
    %821 = vmatprep.subr.mxu0 0.0
    %822 = vmatpush1.xpose.msra.mxu0 %v473
    %823 = vmatprep.subr.mxu0 0.0
    %824 = vmatpush1.xpose.msra.mxu0 0.0
    %825 = vmatprep.subr.mxu0 0.0
    %826 = vmatpush1.xpose.msra.mxu0 0.0
    %827 = vmatprep.subr.mxu0 0.0
    %828 = vmatpush1.xpose.msra.mxu0 0.0
    %829 = vmatprep.subr.mxu0 0.0
    %830 = vmatpush1.xpose.msra.mxu0 0.0
    %831 = vmatprep.subr.mxu0 0.0
    %832 = vmatpush1.xpose.msra.mxu0 0.0
    %833 = vmatprep.subr.mxu0 0.0
    %834 = vmatpush1.xpose.msra.mxu0 0.0
    %835 = vmatprep.subr.mxu0 0.0
    %836 = vmatpush1.xpose.msra.mxu0 0.0
    %837 = vmatprep.subr.mxu0 0.0
    %838 = vmatpush1.xpose.msra.mxu0 0.0
    %839 = vmatprep.subr.mxu0 0.0
    %840 = vmatpush1.xpose.msra.mxu0 0.0
    %841 = vmatprep.subr.mxu0 0.0
    %842 = vmatpush1.xpose.msra.mxu0 0.0
    %843 = vmatprep.subr.mxu0 0.0
    %844 = vmatpush1.xpose.msra.mxu0 0.0
    %845 = vmatprep.subr.mxu0 0.0
    %846 = vmatpush1.xpose.msra.mxu0 0.0
    %847 = vmatprep.subr.mxu0 0.0
    %848 = vmatpush1.xpose.msra.mxu0 0.0
    %849 = vmatprep.subr.mxu0 0.0
    %850 = vmatpush1.xpose.msra.mxu0 0.0
    %851 = vmatprep.subr.mxu0 0.0
    %852 = vmatpush1.xpose.msra.mxu0 0.0
    %853 = vmatprep.subr.mxu0 0.0
    %854 = vmatpush1.xpose.msra.mxu0 0.0
    %855 = vmatprep.subr.mxu0 0.0
    %856 = vmatpush1.xpose.msra.mxu0 0.0
    %857 = vmatprep.subr.mxu0 0.0
    %858 = vmatpush1.xpose.msra.mxu0 0.0
    %859 = vmatprep.subr.mxu0 0.0
    %860 = vmatpush1.xpose.msra.mxu0 0.0
    %861 = vmatprep.subr.mxu0 0.0
    %862 = vmatpush1.xpose.msra.mxu0 0.0
    %863 = vmatprep.subr.mxu0 0.0
    %864 = vmatpush1.xpose.msra.mxu0 0.0
    %865 = vmatprep.subr.mxu0 0.0
    %866 = vmatpush1.xpose.msra.mxu0 0.0
    %867 = vmatprep.subr.mxu0 0.0
    %868 = vmatpush1.xpose.msra.mxu0 0.0
    %869 = vmatprep.subr.mxu0 0.0
    %870 = vmatpush1.xpose.msra.mxu0 0.0
    %871 = vmatprep.subr.mxu0 0.0
    %872 = vmatpush1.xpose.msra.mxu0 0.0
    %873 = vmatprep.subr.mxu0 0.0
    %874 = vmatpush1.xpose.msra.mxu0 0.0
    %875 = vmatprep.subr.mxu0 0.0
    %876 = vmatpush1.xpose.msra.mxu0 0.0
    %877 = vmatprep.subr.mxu0 0.0
    %878 = vmatpush1.xpose.msra.mxu0 0.0
    %879 = vmatprep.subr.mxu0 0.0
    %880 = vmatpush1.xpose.msra.mxu0 0.0
    %881 = vmatprep.subr.mxu0 0.0
    %882 = vmatpush1.xpose.msra.mxu0 0.0
    %883 = vmatprep.mubr.f32.mxu0 0.0
    %884 = vmatmul.mubr.f32.gmra.mrb[0].mxu0 %v529
    %v885 = vpop.f32.mrb[0].mxu0
    %v886 = vadd.f32 %v816, %v885
    %v887 = vpop.f32.mrb[0].mxu0
    %888 = vdwg.mxu0
    %v889 = vmul.f32 %v886, 0.0017361111
    %v890 = vld [vmem:[%s5] sm:$0x1]
    %v891 = vlaneseq
    %v892 = vshrl.u32 %v891, 7
    %v893 = vsub.s32 0, %v892
    %v894 = vrot.slane %v474, %v893
    %v895 = vlaneseq
    %v896 = vshrl.u32 %v895, 7
    %v897 = vsub.s32 0, %v896
    %v898 = vrot.slane %v475, %v897
    %v899 = vlaneseq
    %v900 = vshrl.u32 %v899, 7
    %v901 = vsub.s32 0, %v900
    %v902 = vrot.slane %v476, %v901
    %v903 = vlaneseq
    %v904 = vshrl.u32 %v903, 7
    %v905 = vsub.s32 0, %v904
    %v906 = vrot.slane %v477, %v905
    %v907 = vlaneseq
    %v908 = vshrl.u32 %v907, 7
    %v909 = vsub.s32 0, %v908
    %v910 = vrot.slane %v478, %v909
    %v911 = vlaneseq
    %v912 = vshrl.u32 %v911, 7
    %v913 = vsub.s32 0, %v912
    %v914 = vrot.slane %v479, %v913
    %v915 = vlaneseq
    %v916 = vshrl.u32 %v915, 7
    %v917 = vsub.s32 0, %v916
    %v918 = vrot.slane %v480, %v917
    %v919 = vlaneseq
    %v920 = vshrl.u32 %v919, 7
    %v921 = vsub.s32 0, %v920
    %v922 = vrot.slane %v481, %v921
    %v923 = vlaneseq
    %v924 = vshrl.u32 %v923, 7
    %v925 = vsub.s32 0, %v924
    %v926 = vrot.slane %v482, %v925
    %v936 = vcombine.low %v894, %v898
    %v937 = vcombine.low %v902, %v906
    %v939 = vunpack.c.l.s4 1983009808
    %v940 = vunpack.c.0.s8 %v939
    %v941 = vlaneseq
    %v942 = vshrl.u32 %v941, 7
    %v943 = vsub.s32 %v940, %v942
    %v944 = vrot.slane %v936, %v943
    %v946 = vunpack.c.l.s4 1983009808
    %v947 = vunpack.c.0.s8 %v946
    %v948 = vlaneseq
    %v949 = vshrl.u32 %v948, 7
    %v950 = vsub.s32 %v947, %v949
    %v951 = vrot.slane %v937, %v950
    %v952 = vcombine.low %v944, %v951
    %v953 = vcombine.low %v910, %v914
    %v954 = vcombine.low %v918, %v922
    %v956 = vunpack.c.l.s4 1983009808
    %v957 = vunpack.c.0.s8 %v956
    %v958 = vlaneseq
    %v959 = vshrl.u32 %v958, 7
    %v960 = vsub.s32 %v957, %v959
    %v961 = vrot.slane %v953, %v960
    %v963 = vunpack.c.l.s4 1983009808
    %v964 = vunpack.c.0.s8 %v963
    %v965 = vlaneseq
    %v966 = vshrl.u32 %v965, 7
    %v967 = vsub.s32 %v964, %v966
    %v968 = vrot.slane %v954, %v967
    %v969 = vcombine.low %v961, %v968
    %v971 = vunpack.c.l.s4 1983009808
    %v972 = vunpack.c.0.s8 %v971
    %v973 = vlaneseq
    %v974 = vshrl.u32 %v973, 7
    %v975 = vsub.s32 %v972, %v974
    %v976 = vrot.slane %v926, %v975
    %v980 = vmul.f32 %v483, %v952
    %v981 = vmul.f32 %v484, %v969
    %v982 = vmul.f32 %v485, %v976
    %v986 = vcombine.high %v980, %v980
    %v988 = vunpack.c.l.s4 1983009808
    %v989 = vunpack.c.0.s8 %v988
    %v990 = vlaneseq
    %v991 = vshrl.u32 %v990, 7
    %v992 = vsub.s32 %v989, %v991
    %v993 = vrot.slane %v980, %v992
    %v995 = vunpack.c.l.s4 1983009808
    %v996 = vunpack.c.0.s8 %v995
    %v997 = vlaneseq
    %v998 = vshrl.u32 %v997, 7
    %v999 = vsub.s32 %v996, %v998
    %v1000 = vrot.slane %v986, %v999
    %v1001 = vcombine.high %v993, %v993
    %v1002 = vcombine.high %v1000, %v1000
    %v1003 = vcombine.high %v981, %v981
    %v1005 = vunpack.c.l.s4 1983009808
    %v1006 = vunpack.c.0.s8 %v1005
    %v1007 = vlaneseq
    %v1008 = vshrl.u32 %v1007, 7
    %v1009 = vsub.s32 %v1006, %v1008
    %v1010 = vrot.slane %v981, %v1009
    %v1012 = vunpack.c.l.s4 1983009808
    %v1013 = vunpack.c.0.s8 %v1012
    %v1014 = vlaneseq
    %v1015 = vshrl.u32 %v1014, 7
    %v1016 = vsub.s32 %v1013, %v1015
    %v1017 = vrot.slane %v1003, %v1016
    %v1018 = vcombine.high %v1010, %v1010
    %v1019 = vcombine.high %v1017, %v1017
    %v1021 = vunpack.c.l.s4 1983009808
    %v1022 = vunpack.c.0.s8 %v1021
    %v1023 = vlaneseq
    %v1024 = vshrl.u32 %v1023, 7
    %v1025 = vsub.s32 %v1022, %v1024
    %v1026 = vrot.slane %v982, %v1025
    %v1036 = vpack.c.bf16 %v993, %v993
    %v1037 = vpack.c.bf16 %v1001, %v1001
    %v1038 = vpack.c.bf16 %v1000, %v1000
    %v1039 = vpack.c.bf16 %v1002, %v1002
    %v1040 = vpack.c.bf16 %v1010, %v1010
    %v1041 = vpack.c.bf16 %v1018, %v1018
    %v1042 = vpack.c.bf16 %v1017, %v1017
    %v1043 = vpack.c.bf16 %v1019, %v1019
    %v1044 = vpack.c.bf16 %v1026, %v1026
    %v1045 = vld [vmem:[%s4] sm:$0xf]
    %v1046 = vld [vmem:[%s4 + $0x4] sm:$0xf]
    %v1047 = vld [vmem:[%s4 + $0x8] sm:$0xf]
    %v1048 = vld [vmem:[%s4 + $0xc] sm:$0xf]
    %v1049 = vld [vmem:[%s4 + $0x10] sm:$0xf]
    %v1050 = vld [vmem:[%s4 + $0x14] sm:$0xf]
    %v1051 = vld [vmem:[%s4 + $0x18] sm:$0xf]
    %v1052 = vld [vmem:[%s4 + $0x1c] sm:$0xf]
    %v1053 = vld [vmem:[%s4 + $0x20] sm:$0xf]
    %v1054 = vld [vmem:[%s4 + $0x24] sm:$0xf]
    %v1055 = vld [vmem:[%s4 + $0x28] sm:$0xf]
    %v1056 = vld [vmem:[%s4 + $0x2c] sm:$0xf]
    %v1057 = vld [vmem:[%s4 + $0x30] sm:$0xf]
    %v1058 = vld [vmem:[%s4 + $0x34] sm:$0xf]
    %v1059 = vld [vmem:[%s4 + $0x38] sm:$0xf]
    %v1060 = vld [vmem:[%s4 + $0x3c] sm:$0xf]
    %v1061 = vld [vmem:[%s4 + $0x40] sm:$0xf]
    %v1062 = vld [vmem:[%s4 + $0x44] sm:$0xf]
    %v1063 = vld [vmem:[%s4 + $0x48] sm:$0xf]
    %v1064 = vld [vmem:[%s4 + $0x4c] sm:$0xf]
    %v1065 = vld [vmem:[%s4 + $0x50] sm:$0xf]
    %v1066 = vld [vmem:[%s4 + $0x54] sm:$0xf]
    %v1067 = vld [vmem:[%s4 + $0x58] sm:$0xf]
    %v1068 = vld [vmem:[%s4 + $0x5c] sm:$0xf]
    %v1069 = vld [vmem:[%s4 + $0x60] sm:$0xf]
    %v1070 = vld [vmem:[%s4 + $0x64] sm:$0xf]
    %v1071 = vld [vmem:[%s4 + $0x68] sm:$0xf]
    %v1072 = vld [vmem:[%s4 + $0x6c] sm:$0xf]
    %v1073 = vld [vmem:[%s4 + $0x70] sm:$0xf]
    %v1074 = vld [vmem:[%s4 + $0x74] sm:$0xf]
    %v1075 = vld [vmem:[%s4 + $0x78] sm:$0xf]
    %v1076 = vld [vmem:[%s4 + $0x7c] sm:$0xf]
    %v1077 = vld [vmem:[%s4 + $0x80] sm:$0xf]
    %v1078 = vld [vmem:[%s4 + $0x84] sm:$0xf]
    %v1079 = vld [vmem:[%s4 + $0x88] sm:$0xf]
    %v1080 = vld [vmem:[%s4 + $0x8c] sm:$0xf]
    %v1081 = vld [vmem:[%s4 + $0x90] sm:$0xf]
    %v1082 = vld [vmem:[%s4 + $0x94] sm:$0xf]
    %v1083 = vld [vmem:[%s4 + $0x98] sm:$0xf]
    %v1084 = vld [vmem:[%s4 + $0x9c] sm:$0xf]
    %v1085 = vld [vmem:[%s4 + $0xa0] sm:$0xf]
    %v1086 = vld [vmem:[%s4 + $0xa4] sm:$0xf]
    %v1087 = vld [vmem:[%s4 + $0xa8] sm:$0xf]
    %v1088 = vld [vmem:[%s4 + $0xac] sm:$0xf]
    %v1089 = vld [vmem:[%s4 + $0xb0] sm:$0xf]
    %v1090 = vld [vmem:[%s4 + $0xb4] sm:$0xf]
    %v1091 = vld [vmem:[%s4 + $0xb8] sm:$0xf]
    %v1092 = vld [vmem:[%s4 + $0xbc] sm:$0xf]
    %v1093 = vld [vmem:[%s4 + $0xc0] sm:$0xf]
    %v1094 = vld [vmem:[%s4 + $0xc4] sm:$0xf]
    %v1095 = vld [vmem:[%s4 + $0xc8] sm:$0xf]
    %v1096 = vld [vmem:[%s4 + $0xcc] sm:$0xf]
    %v1097 = vld [vmem:[%s4 + $0xd0] sm:$0xf]
    %v1098 = vld [vmem:[%s4 + $0xd4] sm:$0xf]
    %v1099 = vld [vmem:[%s4 + $0xd8] sm:$0xf]
    %v1100 = vld [vmem:[%s4 + $0xdc] sm:$0xf]
    %v1101 = vld [vmem:[%s4 + $0xe0] sm:$0xf]
    %v1102 = vld [vmem:[%s4 + $0xe4] sm:$0xf]
    %v1103 = vld [vmem:[%s4 + $0xe8] sm:$0xf]
    %v1104 = vld [vmem:[%s4 + $0xec] sm:$0xf]
    %v1105 = vld [vmem:[%s4 + $0xf0] sm:$0xf]
    %v1106 = vld [vmem:[%s4 + $0xf4] sm:$0xf]
    %v1107 = vld [vmem:[%s4 + $0xf8] sm:$0xf]
    %v1108 = vld [vmem:[%s4 + $0xfc] sm:$0xf]
    %v1109 = vld [vmem:[%s4 + $0x100] sm:$0xf]
    %v1110 = vld [vmem:[%s4 + $0x104] sm:$0xf]
    %v1111 = vld [vmem:[%s4 + $0x108] sm:$0xf]
    %v1112 = vld [vmem:[%s4 + $0x10c] sm:$0xf]
    %v1113 = vld [vmem:[%s4 + $0x110] sm:$0xf]
    %v1114 = vld [vmem:[%s4 + $0x114] sm:$0xf]
    %v1115 = vld [vmem:[%s4 + $0x118] sm:$0xf]
    %v1116 = vld [vmem:[%s4 + $0x11c] sm:$0xf]
    %v1117 = vld [vmem:[%s4 + $0x120] sm:$0xf]
    %v1118 = vld [vmem:[%s4 + $0x124] sm:$0xf]
    %v1119 = vld [vmem:[%s4 + $0x128] sm:$0xf]
    %v1120 = vld [vmem:[%s4 + $0x12c] sm:$0xf]
    %v1121 = vld [vmem:[%s4 + $0x130] sm:$0xf]
    %v1122 = vld [vmem:[%s4 + $0x134] sm:$0xf]
    %v1123 = vld [vmem:[%s4 + $0x138] sm:$0xf]
    %v1124 = vld [vmem:[%s4 + $0x13c] sm:$0xf]
    %v1125 = vld [vmem:[%s4 + $0x140] sm:$0xf]
    %v1126 = vld [vmem:[%s4 + $0x144] sm:$0xf]
    %v1127 = vld [vmem:[%s4 + $0x148] sm:$0xf]
    %v1128 = vld [vmem:[%s4 + $0x14c] sm:$0xf]
    %v1129 = vld [vmem:[%s4 + $0x150] sm:$0xf]
    %v1130 = vld [vmem:[%s4 + $0x154] sm:$0xf]
    %v1131 = vld [vmem:[%s4 + $0x158] sm:$0xf]
    %v1132 = vld [vmem:[%s4 + $0x15c] sm:$0xf]
    %v1133 = vld [vmem:[%s4 + $0x160] sm:$0xf]
    %v1134 = vld [vmem:[%s4 + $0x164] sm:$0xf]
    %v1135 = vld [vmem:[%s4 + $0x168] sm:$0xf]
    %v1136 = vld [vmem:[%s4 + $0x16c] sm:$0xf]
    %v1137 = vld [vmem:[%s4 + $0x170] sm:$0xf]
    %v1138 = vld [vmem:[%s4 + $0x174] sm:$0xf]
    %v1139 = vld [vmem:[%s4 + $0x178] sm:$0xf]
    %v1140 = vld [vmem:[%s4 + $0x17c] sm:$0xf]
    %v1141 = vld [vmem:[%s4 + $0x180] sm:$0xf]
    %v1142 = vld [vmem:[%s4 + $0x184] sm:$0xf]
    %v1143 = vld [vmem:[%s4 + $0x188] sm:$0xf]
    %v1144 = vld [vmem:[%s4 + $0x18c] sm:$0xf]
    %v1145 = vld [vmem:[%s4 + $0x190] sm:$0xf]
    %v1146 = vld [vmem:[%s4 + $0x194] sm:$0xf]
    %v1147 = vld [vmem:[%s4 + $0x198] sm:$0xf]
    %v1148 = vld [vmem:[%s4 + $0x19c] sm:$0xf]
    %v1149 = vld [vmem:[%s4 + $0x1a0] sm:$0xf]
    %v1150 = vld [vmem:[%s4 + $0x1a4] sm:$0xf]
    %v1151 = vld [vmem:[%s4 + $0x1a8] sm:$0xf]
    %v1152 = vld [vmem:[%s4 + $0x1ac] sm:$0xf]
    %v1153 = vld [vmem:[%s4 + $0x1b0] sm:$0xf]
    %v1154 = vld [vmem:[%s4 + $0x1b4] sm:$0xf]
    %v1155 = vld [vmem:[%s4 + $0x1b8] sm:$0xf]
    %v1156 = vld [vmem:[%s4 + $0x1bc] sm:$0xf]
    %v1157 = vld [vmem:[%s4 + $0x1c0] sm:$0xf]
    %v1158 = vld [vmem:[%s4 + $0x1c4] sm:$0xf]
    %v1159 = vld [vmem:[%s4 + $0x1c8] sm:$0xf]
    %v1160 = vld [vmem:[%s4 + $0x1cc] sm:$0xf]
    %v1161 = vld [vmem:[%s4 + $0x1d0] sm:$0xf]
    %v1162 = vld [vmem:[%s4 + $0x1d4] sm:$0xf]
    %v1163 = vld [vmem:[%s4 + $0x1d8] sm:$0xf]
    %v1164 = vld [vmem:[%s4 + $0x1dc] sm:$0xf]
    %v1165 = vld [vmem:[%s4 + $0x1e0] sm:$0xf]
    %v1166 = vld [vmem:[%s4 + $0x1e4] sm:$0xf]
    %v1167 = vld [vmem:[%s4 + $0x1e8] sm:$0xf]
    %v1168 = vld [vmem:[%s4 + $0x1ec] sm:$0xf]
    %v1169 = vld [vmem:[%s4 + $0x1f0] sm:$0xf]
    %v1170 = vld [vmem:[%s4 + $0x1f4] sm:$0xf]
    %v1171 = vld [vmem:[%s4 + $0x1f8] sm:$0xf]
    %v1172 = vld [vmem:[%s4 + $0x1fc] sm:$0xf]
    %v1173 = vld [vmem:[%s4 + $0x200] sm:$0xf]
    %v1174 = vld [vmem:[%s4 + $0x204] sm:$0xf]
    %v1175 = vld [vmem:[%s4 + $0x208] sm:$0xf]
    %v1176 = vld [vmem:[%s4 + $0x20c] sm:$0xf]
    %v1177 = vld [vmem:[%s4 + $0x210] sm:$0xf]
    %v1178 = vld [vmem:[%s4 + $0x214] sm:$0xf]
    %v1179 = vld [vmem:[%s4 + $0x218] sm:$0xf]
    %v1180 = vld [vmem:[%s4 + $0x21c] sm:$0xf]
    %v1181 = vld [vmem:[%s4 + $0x220] sm:$0xf]
    %v1182 = vld [vmem:[%s4 + $0x224] sm:$0xf]
    %v1183 = vld [vmem:[%s4 + $0x228] sm:$0xf]
    %v1184 = vld [vmem:[%s4 + $0x22c] sm:$0xf]
    %v1185 = vld [vmem:[%s4 + $0x230] sm:$0xf]
    %v1186 = vld [vmem:[%s4 + $0x234] sm:$0xf]
    %v1187 = vld [vmem:[%s4 + $0x238] sm:$0xf]
    %v1188 = vld [vmem:[%s4 + $0x23c] sm:$0xf]
    %v1333 = vunpack.c.l.b16 %v1045
    %v1334 = vunpack.c.l.b16 %v1046
    %v1335 = vunpack.c.l.b16 %v1047
    %v1336 = vunpack.c.l.b16 %v1048
    %v1337 = vunpack.c.l.b16 %v1049
    %v1338 = vunpack.c.l.b16 %v1050
    %v1339 = vunpack.c.l.b16 %v1051
    %v1340 = vunpack.c.l.b16 %v1052
    %v1341 = vunpack.c.l.b16 %v1053
    %v1342 = vunpack.c.l.b16 %v1054
    %v1343 = vunpack.c.l.b16 %v1055
    %v1344 = vunpack.c.l.b16 %v1056
    %v1345 = vunpack.c.l.b16 %v1057
    %v1346 = vunpack.c.l.b16 %v1058
    %v1347 = vunpack.c.l.b16 %v1059
    %v1348 = vunpack.c.l.b16 %v1060
    %v1349 = vunpack.c.l.b16 %v1061
    %v1350 = vunpack.c.l.b16 %v1062
    %v1351 = vunpack.c.l.b16 %v1063
    %v1352 = vunpack.c.l.b16 %v1064
    %v1353 = vunpack.c.l.b16 %v1065
    %v1354 = vunpack.c.l.b16 %v1066
    %v1355 = vunpack.c.l.b16 %v1067
    %v1356 = vunpack.c.l.b16 %v1068
    %v1357 = vunpack.c.l.b16 %v1069
    %v1358 = vunpack.c.l.b16 %v1070
    %v1359 = vunpack.c.l.b16 %v1071
    %v1360 = vunpack.c.l.b16 %v1072
    %v1361 = vunpack.c.l.b16 %v1073
    %v1362 = vunpack.c.l.b16 %v1074
    %v1363 = vunpack.c.l.b16 %v1075
    %v1364 = vunpack.c.l.b16 %v1076
    %v1365 = vunpack.c.l.b16 %v1077
    %v1366 = vunpack.c.l.b16 %v1078
    %v1367 = vunpack.c.l.b16 %v1079
    %v1368 = vunpack.c.l.b16 %v1080
    %v1369 = vunpack.c.l.b16 %v1081
    %v1370 = vunpack.c.l.b16 %v1082
    %v1371 = vunpack.c.l.b16 %v1083
    %v1372 = vunpack.c.l.b16 %v1084
    %v1373 = vunpack.c.l.b16 %v1085
    %v1374 = vunpack.c.l.b16 %v1086
    %v1375 = vunpack.c.l.b16 %v1087
    %v1376 = vunpack.c.l.b16 %v1088
    %v1377 = vunpack.c.l.b16 %v1089
    %v1378 = vunpack.c.l.b16 %v1090
    %v1379 = vunpack.c.l.b16 %v1091
    %v1380 = vunpack.c.l.b16 %v1092
    %v1381 = vunpack.c.l.b16 %v1093
    %v1382 = vunpack.c.l.b16 %v1094
    %v1383 = vunpack.c.l.b16 %v1095
    %v1384 = vunpack.c.l.b16 %v1096
    %v1385 = vunpack.c.l.b16 %v1097
    %v1386 = vunpack.c.l.b16 %v1098
    %v1387 = vunpack.c.l.b16 %v1099
    %v1388 = vunpack.c.l.b16 %v1100
    %v1389 = vunpack.c.l.b16 %v1101
    %v1390 = vunpack.c.l.b16 %v1102
    %v1391 = vunpack.c.l.b16 %v1103
    %v1392 = vunpack.c.l.b16 %v1104
    %v1393 = vunpack.c.l.b16 %v1105
    %v1394 = vunpack.c.l.b16 %v1106
    %v1395 = vunpack.c.l.b16 %v1107
    %v1396 = vunpack.c.l.b16 %v1108
    %v1397 = vunpack.c.l.b16 %v1109
    %v1398 = vunpack.c.l.b16 %v1110
    %v1399 = vunpack.c.l.b16 %v1111
    %v1400 = vunpack.c.l.b16 %v1112
    %v1401 = vunpack.c.l.b16 %v1113
    %v1402 = vunpack.c.l.b16 %v1114
    %v1403 = vunpack.c.l.b16 %v1115
    %v1404 = vunpack.c.l.b16 %v1116
    %v1405 = vunpack.c.l.b16 %v1117
    %v1406 = vunpack.c.l.b16 %v1118
    %v1407 = vunpack.c.l.b16 %v1119
    %v1408 = vunpack.c.l.b16 %v1120
    %v1409 = vunpack.c.l.b16 %v1121
    %v1410 = vunpack.c.l.b16 %v1122
    %v1411 = vunpack.c.l.b16 %v1123
    %v1412 = vunpack.c.l.b16 %v1124
    %v1413 = vunpack.c.l.b16 %v1125
    %v1414 = vunpack.c.l.b16 %v1126
    %v1415 = vunpack.c.l.b16 %v1127
    %v1416 = vunpack.c.l.b16 %v1128
    %v1417 = vunpack.c.l.b16 %v1129
    %v1418 = vunpack.c.l.b16 %v1130
    %v1419 = vunpack.c.l.b16 %v1131
    %v1420 = vunpack.c.l.b16 %v1132
    %v1421 = vunpack.c.l.b16 %v1133
    %v1422 = vunpack.c.l.b16 %v1134
    %v1423 = vunpack.c.l.b16 %v1135
    %v1424 = vunpack.c.l.b16 %v1136
    %v1425 = vunpack.c.l.b16 %v1137
    %v1426 = vunpack.c.l.b16 %v1138
    %v1427 = vunpack.c.l.b16 %v1139
    %v1428 = vunpack.c.l.b16 %v1140
    %v1429 = vunpack.c.l.b16 %v1141
    %v1430 = vunpack.c.l.b16 %v1142
    %v1431 = vunpack.c.l.b16 %v1143
    %v1432 = vunpack.c.l.b16 %v1144
    %v1433 = vunpack.c.l.b16 %v1145
    %v1434 = vunpack.c.l.b16 %v1146
    %v1435 = vunpack.c.l.b16 %v1147
    %v1436 = vunpack.c.l.b16 %v1148
    %v1437 = vunpack.c.l.b16 %v1149
    %v1438 = vunpack.c.l.b16 %v1150
    %v1439 = vunpack.c.l.b16 %v1151
    %v1440 = vunpack.c.l.b16 %v1152
    %v1441 = vunpack.c.l.b16 %v1153
    %v1442 = vunpack.c.l.b16 %v1154
    %v1443 = vunpack.c.l.b16 %v1155
    %v1444 = vunpack.c.l.b16 %v1156
    %v1445 = vunpack.c.l.b16 %v1157
    %v1446 = vunpack.c.l.b16 %v1158
    %v1447 = vunpack.c.l.b16 %v1159
    %v1448 = vunpack.c.l.b16 %v1160
    %v1449 = vunpack.c.l.b16 %v1161
    %v1450 = vunpack.c.l.b16 %v1162
    %v1451 = vunpack.c.l.b16 %v1163
    %v1452 = vunpack.c.l.b16 %v1164
    %v1453 = vunpack.c.l.b16 %v1165
    %v1454 = vunpack.c.l.b16 %v1166
    %v1455 = vunpack.c.l.b16 %v1167
    %v1456 = vunpack.c.l.b16 %v1168
    %v1457 = vunpack.c.l.b16 %v1169
    %v1458 = vunpack.c.l.b16 %v1170
    %v1459 = vunpack.c.l.b16 %v1171
    %v1460 = vunpack.c.l.b16 %v1172
    %v1461 = vunpack.c.l.b16 %v1173
    %v1462 = vunpack.c.l.b16 %v1174
    %v1463 = vunpack.c.l.b16 %v1175
    %v1464 = vunpack.c.l.b16 %v1176
    %v1465 = vunpack.c.l.b16 %v1177
    %v1466 = vunpack.c.l.b16 %v1178
    %v1467 = vunpack.c.l.b16 %v1179
    %v1468 = vunpack.c.l.b16 %v1180
    %v1469 = vunpack.c.l.b16 %v1181
    %v1470 = vunpack.c.l.b16 %v1182
    %v1471 = vunpack.c.l.b16 %v1183
    %v1472 = vunpack.c.l.b16 %v1184
    %v1473 = vunpack.c.l.b16 %v1185
    %v1474 = vunpack.c.l.b16 %v1186
    %v1475 = vunpack.c.l.b16 %v1187
    %v1476 = vunpack.c.l.b16 %v1188
    %v1477 = vpack.c.b16 %v1334, %v1333
    %v1478 = vpack.c.b16 %v1336, %v1335
    %v1479 = vpack.c.b16 %v1338, %v1337
    %v1480 = vpack.c.b16 %v1340, %v1339
    %v1481 = vpack.c.b16 %v1342, %v1341
    %v1482 = vpack.c.b16 %v1344, %v1343
    %v1483 = vpack.c.b16 %v1346, %v1345
    %v1484 = vpack.c.b16 %v1348, %v1347
    %v1485 = vpack.c.b16 %v1350, %v1349
    %v1486 = vpack.c.b16 %v1352, %v1351
    %v1487 = vpack.c.b16 %v1354, %v1353
    %v1488 = vpack.c.b16 %v1356, %v1355
    %v1489 = vpack.c.b16 %v1358, %v1357
    %v1490 = vpack.c.b16 %v1360, %v1359
    %v1491 = vpack.c.b16 %v1362, %v1361
    %v1492 = vpack.c.b16 %v1364, %v1363
    %v1493 = vpack.c.b16 %v1366, %v1365
    %v1494 = vpack.c.b16 %v1368, %v1367
    %v1495 = vpack.c.b16 %v1370, %v1369
    %v1496 = vpack.c.b16 %v1372, %v1371
    %v1497 = vpack.c.b16 %v1374, %v1373
    %v1498 = vpack.c.b16 %v1376, %v1375
    %v1499 = vpack.c.b16 %v1378, %v1377
    %v1500 = vpack.c.b16 %v1380, %v1379
    %v1501 = vpack.c.b16 %v1382, %v1381
    %v1502 = vpack.c.b16 %v1384, %v1383
    %v1503 = vpack.c.b16 %v1386, %v1385
    %v1504 = vpack.c.b16 %v1388, %v1387
    %v1505 = vpack.c.b16 %v1390, %v1389
    %v1506 = vpack.c.b16 %v1392, %v1391
    %v1507 = vpack.c.b16 %v1394, %v1393
    %v1508 = vpack.c.b16 %v1396, %v1395
    %v1509 = vpack.c.b16 %v1398, %v1397
    %v1510 = vpack.c.b16 %v1400, %v1399
    %v1511 = vpack.c.b16 %v1402, %v1401
    %v1512 = vpack.c.b16 %v1404, %v1403
    %v1513 = vpack.c.b16 %v1406, %v1405
    %v1514 = vpack.c.b16 %v1408, %v1407
    %v1515 = vpack.c.b16 %v1410, %v1409
    %v1516 = vpack.c.b16 %v1412, %v1411
    %v1517 = vpack.c.b16 %v1414, %v1413
    %v1518 = vpack.c.b16 %v1416, %v1415
    %v1519 = vpack.c.b16 %v1418, %v1417
    %v1520 = vpack.c.b16 %v1420, %v1419
    %v1521 = vpack.c.b16 %v1422, %v1421
    %v1522 = vpack.c.b16 %v1424, %v1423
    %v1523 = vpack.c.b16 %v1426, %v1425
    %v1524 = vpack.c.b16 %v1428, %v1427
    %v1525 = vpack.c.b16 %v1430, %v1429
    %v1526 = vpack.c.b16 %v1432, %v1431
    %v1527 = vpack.c.b16 %v1434, %v1433
    %v1528 = vpack.c.b16 %v1436, %v1435
    %v1529 = vpack.c.b16 %v1438, %v1437
    %v1530 = vpack.c.b16 %v1440, %v1439
    %v1531 = vpack.c.b16 %v1442, %v1441
    %v1532 = vpack.c.b16 %v1444, %v1443
    %v1533 = vpack.c.b16 %v1446, %v1445
    %v1534 = vpack.c.b16 %v1448, %v1447
    %v1535 = vpack.c.b16 %v1450, %v1449
    %v1536 = vpack.c.b16 %v1452, %v1451
    %v1537 = vpack.c.b16 %v1454, %v1453
    %v1538 = vpack.c.b16 %v1456, %v1455
    %v1539 = vpack.c.b16 %v1458, %v1457
    %v1540 = vpack.c.b16 %v1460, %v1459
    %v1541 = vpack.c.b16 %v1462, %v1461
    %v1542 = vpack.c.b16 %v1464, %v1463
    %v1543 = vpack.c.b16 %v1466, %v1465
    %v1544 = vpack.c.b16 %v1468, %v1467
    %v1545 = vpack.c.b16 %v1470, %v1469
    %v1546 = vpack.c.b16 %v1472, %v1471
    %v1547 = vpack.c.b16 %v1474, %v1473
    %v1548 = vpack.c.b16 %v1476, %v1475
    %1621 = vmatprep.subr.bf16.mxu0 0
    %1622 = vmatpush1.bf16.msra.mxu0 %v1477
    %1623 = vmatprep.subr.bf16.mxu0 0
    %1624 = vmatpush1.bf16.msra.mxu0 %v1478
    %1625 = vmatprep.subr.bf16.mxu0 0
    %1626 = vmatpush1.bf16.msra.mxu0 %v1479
    %1627 = vmatprep.subr.bf16.mxu0 0
    %1628 = vmatpush1.bf16.msra.mxu0 %v1480
    %1629 = vmatprep.subr.bf16.mxu0 0
    %1630 = vmatpush1.bf16.msra.mxu0 %v1481
    %1631 = vmatprep.subr.bf16.mxu0 0
    %1632 = vmatpush1.bf16.msra.mxu0 %v1482
    %1633 = vmatprep.subr.bf16.mxu0 0
    %1634 = vmatpush1.bf16.msra.mxu0 %v1483
    %1635 = vmatprep.subr.bf16.mxu0 0
    %1636 = vmatpush1.bf16.msra.mxu0 %v1484
    %1637 = vmatprep.subr.bf16.mxu0 0
    %1638 = vmatpush1.bf16.msra.mxu0 %v1485
    %1639 = vmatprep.subr.bf16.mxu0 0
    %1640 = vmatpush1.bf16.msra.mxu0 %v1486
    %1641 = vmatprep.subr.bf16.mxu0 0
    %1642 = vmatpush1.bf16.msra.mxu0 %v1487
    %1643 = vmatprep.subr.bf16.mxu0 0
    %1644 = vmatpush1.bf16.msra.mxu0 %v1488
    %1645 = vmatprep.subr.bf16.mxu0 0
    %1646 = vmatpush1.bf16.msra.mxu0 %v1489
    %1647 = vmatprep.subr.bf16.mxu0 0
    %1648 = vmatpush1.bf16.msra.mxu0 %v1490
    %1649 = vmatprep.subr.bf16.mxu0 0
    %1650 = vmatpush1.bf16.msra.mxu0 %v1491
    %1651 = vmatprep.subr.bf16.mxu0 0
    %1652 = vmatpush1.bf16.msra.mxu0 %v1492
    %1653 = vmatprep.mubr.bf16.mxu0 %v1037
    %1654 = vmatmul.mubr.bf16.gmra.mrb[0].mxu0 %v1036
    %v1655 = vpop.f32.mrb[0].mxu0
    %v1656 = vadd.f32 0.0, %v1655
    %v1657 = vpop.f32.mrb[0].mxu0
    %v1658 = vpop.f32.mrb[0].mxu0
    %v1659 = vpop.f32.mrb[0].mxu0
    %1660 = vdwg.mxu0
    %1661 = vmatprep.subr.bf16.mxu0 0
    %1662 = vmatpush1.bf16.msra.mxu0 %v1493
    %1663 = vmatprep.subr.bf16.mxu0 0
    %1664 = vmatpush1.bf16.msra.mxu0 %v1494
    %1665 = vmatprep.subr.bf16.mxu0 0
    %1666 = vmatpush1.bf16.msra.mxu0 %v1495
    %1667 = vmatprep.subr.bf16.mxu0 0
    %1668 = vmatpush1.bf16.msra.mxu0 %v1496
    %1669 = vmatprep.subr.bf16.mxu0 0
    %1670 = vmatpush1.bf16.msra.mxu0 %v1497
    %1671 = vmatprep.subr.bf16.mxu0 0
    %1672 = vmatpush1.bf16.msra.mxu0 %v1498
    %1673 = vmatprep.subr.bf16.mxu0 0
    %1674 = vmatpush1.bf16.msra.mxu0 %v1499
    %1675 = vmatprep.subr.bf16.mxu0 0
    %1676 = vmatpush1.bf16.msra.mxu0 %v1500
    %1677 = vmatprep.subr.bf16.mxu0 0
    %1678 = vmatpush1.bf16.msra.mxu0 %v1501
    %1679 = vmatprep.subr.bf16.mxu0 0
    %1680 = vmatpush1.bf16.msra.mxu0 %v1502
    %1681 = vmatprep.subr.bf16.mxu0 0
    %1682 = vmatpush1.bf16.msra.mxu0 %v1503
    %1683 = vmatprep.subr.bf16.mxu0 0
    %1684 = vmatpush1.bf16.msra.mxu0 %v1504
    %1685 = vmatprep.subr.bf16.mxu0 0
    %1686 = vmatpush1.bf16.msra.mxu0 %v1505
    %1687 = vmatprep.subr.bf16.mxu0 0
    %1688 = vmatpush1.bf16.msra.mxu0 %v1506
    %1689 = vmatprep.subr.bf16.mxu0 0
    %1690 = vmatpush1.bf16.msra.mxu0 %v1507
    %1691 = vmatprep.subr.bf16.mxu0 0
    %1692 = vmatpush1.bf16.msra.mxu0 %v1508
    %1693 = vmatprep.mubr.bf16.mxu0 %v1039
    %1694 = vmatmul.mubr.bf16.gmra.mrb[0].mxu0 %v1038
    %v1695 = vpop.f32.mrb[0].mxu0
    %v1696 = vadd.f32 %v1656, %v1695
    %v1697 = vpop.f32.mrb[0].mxu0
    %v1698 = vpop.f32.mrb[0].mxu0
    %v1699 = vpop.f32.mrb[0].mxu0
    %1700 = vdwg.mxu0
    %1701 = vmatprep.subr.bf16.mxu0 0
    %1702 = vmatpush1.bf16.msra.mxu0 %v1509
    %1703 = vmatprep.subr.bf16.mxu0 0
    %1704 = vmatpush1.bf16.msra.mxu0 %v1510
    %1705 = vmatprep.subr.bf16.mxu0 0
    %1706 = vmatpush1.bf16.msra.mxu0 %v1511
    %1707 = vmatprep.subr.bf16.mxu0 0
    %1708 = vmatpush1.bf16.msra.mxu0 %v1512
    %1709 = vmatprep.subr.bf16.mxu0 0
    %1710 = vmatpush1.bf16.msra.mxu0 %v1513
    %1711 = vmatprep.subr.bf16.mxu0 0
    %1712 = vmatpush1.bf16.msra.mxu0 %v1514
    %1713 = vmatprep.subr.bf16.mxu0 0
    %1714 = vmatpush1.bf16.msra.mxu0 %v1515
    %1715 = vmatprep.subr.bf16.mxu0 0
    %1716 = vmatpush1.bf16.msra.mxu0 %v1516
    %1717 = vmatprep.subr.bf16.mxu0 0
    %1718 = vmatpush1.bf16.msra.mxu0 %v1517
    %1719 = vmatprep.subr.bf16.mxu0 0
    %1720 = vmatpush1.bf16.msra.mxu0 %v1518
    %1721 = vmatprep.subr.bf16.mxu0 0
    %1722 = vmatpush1.bf16.msra.mxu0 %v1519
    %1723 = vmatprep.subr.bf16.mxu0 0
    %1724 = vmatpush1.bf16.msra.mxu0 %v1520
    %1725 = vmatprep.subr.bf16.mxu0 0
    %1726 = vmatpush1.bf16.msra.mxu0 %v1521
    %1727 = vmatprep.subr.bf16.mxu0 0
    %1728 = vmatpush1.bf16.msra.mxu0 %v1522
    %1729 = vmatprep.subr.bf16.mxu0 0
    %1730 = vmatpush1.bf16.msra.mxu0 %v1523
    %1731 = vmatprep.subr.bf16.mxu0 0
    %1732 = vmatpush1.bf16.msra.mxu0 %v1524
    %1733 = vmatprep.mubr.bf16.mxu0 %v1041
    %1734 = vmatmul.mubr.bf16.gmra.mrb[0].mxu0 %v1040
    %v1735 = vpop.f32.mrb[0].mxu0
    %v1736 = vadd.f32 %v1696, %v1735
    %v1737 = vpop.f32.mrb[0].mxu0
    %v1738 = vpop.f32.mrb[0].mxu0
    %v1739 = vpop.f32.mrb[0].mxu0
    %1740 = vdwg.mxu0
    %1741 = vmatprep.subr.bf16.mxu0 0
    %1742 = vmatpush1.bf16.msra.mxu0 %v1525
    %1743 = vmatprep.subr.bf16.mxu0 0
    %1744 = vmatpush1.bf16.msra.mxu0 %v1526
    %1745 = vmatprep.subr.bf16.mxu0 0
    %1746 = vmatpush1.bf16.msra.mxu0 %v1527
    %1747 = vmatprep.subr.bf16.mxu0 0
    %1748 = vmatpush1.bf16.msra.mxu0 %v1528
    %1749 = vmatprep.subr.bf16.mxu0 0
    %1750 = vmatpush1.bf16.msra.mxu0 %v1529
    %1751 = vmatprep.subr.bf16.mxu0 0
    %1752 = vmatpush1.bf16.msra.mxu0 %v1530
    %1753 = vmatprep.subr.bf16.mxu0 0
    %1754 = vmatpush1.bf16.msra.mxu0 %v1531
    %1755 = vmatprep.subr.bf16.mxu0 0
    %1756 = vmatpush1.bf16.msra.mxu0 %v1532
    %1757 = vmatprep.subr.bf16.mxu0 0
    %1758 = vmatpush1.bf16.msra.mxu0 %v1533
    %1759 = vmatprep.subr.bf16.mxu0 0
    %1760 = vmatpush1.bf16.msra.mxu0 %v1534
    %1761 = vmatprep.subr.bf16.mxu0 0
    %1762 = vmatpush1.bf16.msra.mxu0 %v1535
    %1763 = vmatprep.subr.bf16.mxu0 0
    %1764 = vmatpush1.bf16.msra.mxu0 %v1536
    %1765 = vmatprep.subr.bf16.mxu0 0
    %1766 = vmatpush1.bf16.msra.mxu0 %v1537
    %1767 = vmatprep.subr.bf16.mxu0 0
    %1768 = vmatpush1.bf16.msra.mxu0 %v1538
    %1769 = vmatprep.subr.bf16.mxu0 0
    %1770 = vmatpush1.bf16.msra.mxu0 %v1539
    %1771 = vmatprep.subr.bf16.mxu0 0
    %1772 = vmatpush1.bf16.msra.mxu0 %v1540
    %1773 = vmatprep.mubr.bf16.mxu0 %v1043
    %1774 = vmatmul.mubr.bf16.gmra.mrb[0].mxu0 %v1042
    %v1775 = vpop.f32.mrb[0].mxu0
    %v1776 = vadd.f32 %v1736, %v1775
    %v1777 = vpop.f32.mrb[0].mxu0
    %v1778 = vpop.f32.mrb[0].mxu0
    %v1779 = vpop.f32.mrb[0].mxu0
    %1780 = vdwg.mxu0
    %1781 = vmatprep.subr.bf16.mxu0 0
    %1782 = vmatpush1.bf16.msra.mxu0 %v1541
    %1783 = vmatprep.subr.bf16.mxu0 0
    %1784 = vmatpush1.bf16.msra.mxu0 %v1542
    %1785 = vmatprep.subr.bf16.mxu0 0
    %1786 = vmatpush1.bf16.msra.mxu0 %v1543
    %1787 = vmatprep.subr.bf16.mxu0 0
    %1788 = vmatpush1.bf16.msra.mxu0 %v1544
    %1789 = vmatprep.subr.bf16.mxu0 0
    %1790 = vmatpush1.bf16.msra.mxu0 %v1545
    %1791 = vmatprep.subr.bf16.mxu0 0
    %1792 = vmatpush1.bf16.msra.mxu0 %v1546
    %1793 = vmatprep.subr.bf16.mxu0 0
    %1794 = vmatpush1.bf16.msra.mxu0 %v1547
    %1795 = vmatprep.subr.bf16.mxu0 0
    %1796 = vmatpush1.bf16.msra.mxu0 %v1548
    %1797 = vmatprep.subr.bf16.mxu0 0
    %1798 = vmatpush1.bf16.msra.mxu0 0
    %1799 = vmatprep.subr.bf16.mxu0 0
    %1800 = vmatpush1.bf16.msra.mxu0 0
    %1801 = vmatprep.subr.bf16.mxu0 0
    %1802 = vmatpush1.bf16.msra.mxu0 0
    %1803 = vmatprep.subr.bf16.mxu0 0
    %1804 = vmatpush1.bf16.msra.mxu0 0
    %1805 = vmatprep.subr.bf16.mxu0 0
    %1806 = vmatpush1.bf16.msra.mxu0 0
    %1807 = vmatprep.subr.bf16.mxu0 0
    %1808 = vmatpush1.bf16.msra.mxu0 0
    %1809 = vmatprep.subr.bf16.mxu0 0
    %1810 = vmatpush1.bf16.msra.mxu0 0
    %1811 = vmatprep.subr.bf16.mxu0 0
    %1812 = vmatpush1.bf16.msra.mxu0 0
    %1813 = vmatprep.mubr.bf16.mxu0 0
    %1814 = vmatmul.mubr.bf16.gmra.mrb[0].mxu0 %v1044
    %v1815 = vpop.f32.mrb[0].mxu0
    %v1816 = vadd.f32 %v1776, %v1815
    %v1817 = vpop.f32.mrb[0].mxu0
    %v1818 = vpop.f32.mrb[0].mxu0
    %v1819 = vpop.f32.mrb[0].mxu0
    %1820 = vdwg.mxu0
    %v1822 = vlaneseq
    %v1823 = vshrl.u32 %v1822, 7
    %v1824 = vsub.s32 0, %v1823
    %v1825 = vrot.slane %v890, %v1824
    %v1827 = vadd.f32 %v1825, %v1816
    %v1828 = vlaneseq
    %v1829 = vshrl.u32 %v1828, 7
    %v1830 = vsub.s32 1, %v1829
    %v1831 = vrot.slane %v474, %v1830
    %v1832 = vlaneseq
    %v1833 = vshrl.u32 %v1832, 7
    %v1834 = vsub.s32 1, %v1833
    %v1835 = vrot.slane %v475, %v1834
    %v1836 = vlaneseq
    %v1837 = vshrl.u32 %v1836, 7
    %v1838 = vsub.s32 1, %v1837
    %v1839 = vrot.slane %v476, %v1838
    %v1840 = vlaneseq
    %v1841 = vshrl.u32 %v1840, 7
    %v1842 = vsub.s32 1, %v1841
    %v1843 = vrot.slane %v477, %v1842
    %v1844 = vlaneseq
    %v1845 = vshrl.u32 %v1844, 7
    %v1846 = vsub.s32 1, %v1845
    %v1847 = vrot.slane %v478, %v1846
    %v1848 = vlaneseq
    %v1849 = vshrl.u32 %v1848, 7
    %v1850 = vsub.s32 1, %v1849
    %v1851 = vrot.slane %v479, %v1850
    %v1852 = vlaneseq
    %v1853 = vshrl.u32 %v1852, 7
    %v1854 = vsub.s32 1, %v1853
    %v1855 = vrot.slane %v480, %v1854
    %v1856 = vlaneseq
    %v1857 = vshrl.u32 %v1856, 7
    %v1858 = vsub.s32 1, %v1857
    %v1859 = vrot.slane %v481, %v1858
    %v1860 = vlaneseq
    %v1861 = vshrl.u32 %v1860, 7
    %v1862 = vsub.s32 1, %v1861
    %v1863 = vrot.slane %v482, %v1862
    %v1873 = vcombine.low %v1831, %v1835
    %v1874 = vcombine.low %v1839, %v1843
    %v1876 = vunpack.c.l.s4 1983009808
    %v1877 = vunpack.c.0.s8 %v1876
    %v1878 = vlaneseq
    %v1879 = vshrl.u32 %v1878, 7
    %v1880 = vsub.s32 %v1877, %v1879
    %v1881 = vrot.slane %v1873, %v1880
    %v1883 = vunpack.c.l.s4 1983009808
    %v1884 = vunpack.c.0.s8 %v1883
    %v1885 = vlaneseq
    %v1886 = vshrl.u32 %v1885, 7
    %v1887 = vsub.s32 %v1884, %v1886
    %v1888 = vrot.slane %v1874, %v1887
    %v1889 = vcombine.low %v1881, %v1888
    %v1890 = vcombine.low %v1847, %v1851
    %v1891 = vcombine.low %v1855, %v1859
    %v1893 = vunpack.c.l.s4 1983009808
    %v1894 = vunpack.c.0.s8 %v1893
    %v1895 = vlaneseq
    %v1896 = vshrl.u32 %v1895, 7
    %v1897 = vsub.s32 %v1894, %v1896
    %v1898 = vrot.slane %v1890, %v1897
    %v1900 = vunpack.c.l.s4 1983009808
    %v1901 = vunpack.c.0.s8 %v1900
    %v1902 = vlaneseq
    %v1903 = vshrl.u32 %v1902, 7
    %v1904 = vsub.s32 %v1901, %v1903
    %v1905 = vrot.slane %v1891, %v1904
    %v1906 = vcombine.low %v1898, %v1905
    %v1908 = vunpack.c.l.s4 1983009808
    %v1909 = vunpack.c.0.s8 %v1908
    %v1910 = vlaneseq
    %v1911 = vshrl.u32 %v1910, 7
    %v1912 = vsub.s32 %v1909, %v1911
    %v1913 = vrot.slane %v1863, %v1912
    %v1917 = vmul.f32 %v483, %v1889
    %v1918 = vmul.f32 %v484, %v1906
    %v1919 = vmul.f32 %v485, %v1913
    %v1923 = vcombine.high %v1917, %v1917
    %v1925 = vunpack.c.l.s4 1983009808
    %v1926 = vunpack.c.0.s8 %v1925
    %v1927 = vlaneseq
    %v1928 = vshrl.u32 %v1927, 7
    %v1929 = vsub.s32 %v1926, %v1928
    %v1930 = vrot.slane %v1917, %v1929
    %v1932 = vunpack.c.l.s4 1983009808
    %v1933 = vunpack.c.0.s8 %v1932
    %v1934 = vlaneseq
    %v1935 = vshrl.u32 %v1934, 7
    %v1936 = vsub.s32 %v1933, %v1935
    %v1937 = vrot.slane %v1923, %v1936
    %v1938 = vcombine.high %v1930, %v1930
    %v1939 = vcombine.high %v1937, %v1937
    %v1940 = vcombine.high %v1918, %v1918
    %v1942 = vunpack.c.l.s4 1983009808
    %v1943 = vunpack.c.0.s8 %v1942
    %v1944 = vlaneseq
    %v1945 = vshrl.u32 %v1944, 7
    %v1946 = vsub.s32 %v1943, %v1945
    %v1947 = vrot.slane %v1918, %v1946
    %v1949 = vunpack.c.l.s4 1983009808
    %v1950 = vunpack.c.0.s8 %v1949
    %v1951 = vlaneseq
    %v1952 = vshrl.u32 %v1951, 7
    %v1953 = vsub.s32 %v1950, %v1952
    %v1954 = vrot.slane %v1940, %v1953
    %v1955 = vcombine.high %v1947, %v1947
    %v1956 = vcombine.high %v1954, %v1954
    %v1958 = vunpack.c.l.s4 1983009808
    %v1959 = vunpack.c.0.s8 %v1958
    %v1960 = vlaneseq
    %v1961 = vshrl.u32 %v1960, 7
    %v1962 = vsub.s32 %v1959, %v1961
    %v1963 = vrot.slane %v1919, %v1962
    %v1973 = vpack.c.bf16 %v1930, %v1930
    %v1974 = vpack.c.bf16 %v1938, %v1938
    %v1975 = vpack.c.bf16 %v1937, %v1937
    %v1976 = vpack.c.bf16 %v1939, %v1939
    %v1977 = vpack.c.bf16 %v1947, %v1947
    %v1978 = vpack.c.bf16 %v1955, %v1955
    %v1979 = vpack.c.bf16 %v1954, %v1954
    %v1980 = vpack.c.bf16 %v1956, %v1956
    %v1981 = vpack.c.bf16 %v1963, %v1963
    %s1982 = scalar_lea.vmem %s4, 576
    %v1983 = vld [vmem:[%s1982] sm:$0xf]
    %v1984 = vld [vmem:[%s1982 + $0x4] sm:$0xf]
    %v1985 = vld [vmem:[%s1982 + $0x8] sm:$0xf]
    %v1986 = vld [vmem:[%s1982 + $0xc] sm:$0xf]
    %v1987 = vld [vmem:[%s1982 + $0x10] sm:$0xf]
    %v1988 = vld [vmem:[%s1982 + $0x14] sm:$0xf]
    %v1989 = vld [vmem:[%s1982 + $0x18] sm:$0xf]
    %v1990 = vld [vmem:[%s1982 + $0x1c] sm:$0xf]
    %v1991 = vld [vmem:[%s1982 + $0x20] sm:$0xf]
    %v1992 = vld [vmem:[%s1982 + $0x24] sm:$0xf]
    %v1993 = vld [vmem:[%s1982 + $0x28] sm:$0xf]
    %v1994 = vld [vmem:[%s1982 + $0x2c] sm:$0xf]
    %v1995 = vld [vmem:[%s1982 + $0x30] sm:$0xf]
    %v1996 = vld [vmem:[%s1982 + $0x34] sm:$0xf]
    %v1997 = vld [vmem:[%s1982 + $0x38] sm:$0xf]
    %v1998 = vld [vmem:[%s1982 + $0x3c] sm:$0xf]
    %v1999 = vld [vmem:[%s1982 + $0x40] sm:$0xf]
    %v2000 = vld [vmem:[%s1982 + $0x44] sm:$0xf]
    %v2001 = vld [vmem:[%s1982 + $0x48] sm:$0xf]
    %v2002 = vld [vmem:[%s1982 + $0x4c] sm:$0xf]
    %v2003 = vld [vmem:[%s1982 + $0x50] sm:$0xf]
    %v2004 = vld [vmem:[%s1982 + $0x54] sm:$0xf]
    %v2005 = vld [vmem:[%s1982 + $0x58] sm:$0xf]
    %v2006 = vld [vmem:[%s1982 + $0x5c] sm:$0xf]
    %v2007 = vld [vmem:[%s1982 + $0x60] sm:$0xf]
    %v2008 = vld [vmem:[%s1982 + $0x64] sm:$0xf]
    %v2009 = vld [vmem:[%s1982 + $0x68] sm:$0xf]
    %v2010 = vld [vmem:[%s1982 + $0x6c] sm:$0xf]
    %v2011 = vld [vmem:[%s1982 + $0x70] sm:$0xf]
    %v2012 = vld [vmem:[%s1982 + $0x74] sm:$0xf]
    %v2013 = vld [vmem:[%s1982 + $0x78] sm:$0xf]
    %v2014 = vld [vmem:[%s1982 + $0x7c] sm:$0xf]
    %v2015 = vld [vmem:[%s1982 + $0x80] sm:$0xf]
    %v2016 = vld [vmem:[%s1982 + $0x84] sm:$0xf]
    %v2017 = vld [vmem:[%s1982 + $0x88] sm:$0xf]
    %v2018 = vld [vmem:[%s1982 + $0x8c] sm:$0xf]
    %v2019 = vld [vmem:[%s1982 + $0x90] sm:$0xf]
    %v2020 = vld [vmem:[%s1982 + $0x94] sm:$0xf]
    %v2021 = vld [vmem:[%s1982 + $0x98] sm:$0xf]
    %v2022 = vld [vmem:[%s1982 + $0x9c] sm:$0xf]
    %v2023 = vld [vmem:[%s1982 + $0xa0] sm:$0xf]
    %v2024 = vld [vmem:[%s1982 + $0xa4] sm:$0xf]
    %v2025 = vld [vmem:[%s1982 + $0xa8] sm:$0xf]
    %v2026 = vld [vmem:[%s1982 + $0xac] sm:$0xf]
    %v2027 = vld [vmem:[%s1982 + $0xb0] sm:$0xf]
    %v2028 = vld [vmem:[%s1982 + $0xb4] sm:$0xf]
    %v2029 = vld [vmem:[%s1982 + $0xb8] sm:$0xf]
    %v2030 = vld [vmem:[%s1982 + $0xbc] sm:$0xf]
    %v2031 = vld [vmem:[%s1982 + $0xc0] sm:$0xf]
    %v2032 = vld [vmem:[%s1982 + $0xc4] sm:$0xf]
    %v2033 = vld [vmem:[%s1982 + $0xc8] sm:$0xf]
    %v2034 = vld [vmem:[%s1982 + $0xcc] sm:$0xf]
    %v2035 = vld [vmem:[%s1982 + $0xd0] sm:$0xf]
    %v2036 = vld [vmem:[%s1982 + $0xd4] sm:$0xf]
    %v2037 = vld [vmem:[%s1982 + $0xd8] sm:$0xf]
    %v2038 = vld [vmem:[%s1982 + $0xdc] sm:$0xf]
    %v2039 = vld [vmem:[%s1982 + $0xe0] sm:$0xf]
    %v2040 = vld [vmem:[%s1982 + $0xe4] sm:$0xf]
    %v2041 = vld [vmem:[%s1982 + $0xe8] sm:$0xf]
    %v2042 = vld [vmem:[%s1982 + $0xec] sm:$0xf]
    %v2043 = vld [vmem:[%s1982 + $0xf0] sm:$0xf]
    %v2044 = vld [vmem:[%s1982 + $0xf4] sm:$0xf]
    %v2045 = vld [vmem:[%s1982 + $0xf8] sm:$0xf]
    %v2046 = vld [vmem:[%s1982 + $0xfc] sm:$0xf]
    %v2047 = vld [vmem:[%s1982 + $0x100] sm:$0xf]
    %v2048 = vld [vmem:[%s1982 + $0x104] sm:$0xf]
    %v2049 = vld [vmem:[%s1982 + $0x108] sm:$0xf]
    %v2050 = vld [vmem:[%s1982 + $0x10c] sm:$0xf]
    %v2051 = vld [vmem:[%s1982 + $0x110] sm:$0xf]
    %v2052 = vld [vmem:[%s1982 + $0x114] sm:$0xf]
    %v2053 = vld [vmem:[%s1982 + $0x118] sm:$0xf]
    %v2054 = vld [vmem:[%s1982 + $0x11c] sm:$0xf]
    %v2055 = vld [vmem:[%s1982 + $0x120] sm:$0xf]
    %v2056 = vld [vmem:[%s1982 + $0x124] sm:$0xf]
    %v2057 = vld [vmem:[%s1982 + $0x128] sm:$0xf]
    %v2058 = vld [vmem:[%s1982 + $0x12c] sm:$0xf]
    %v2059 = vld [vmem:[%s1982 + $0x130] sm:$0xf]
    %v2060 = vld [vmem:[%s1982 + $0x134] sm:$0xf]
    %v2061 = vld [vmem:[%s1982 + $0x138] sm:$0xf]
    %v2062 = vld [vmem:[%s1982 + $0x13c] sm:$0xf]
    %v2063 = vld [vmem:[%s1982 + $0x140] sm:$0xf]
    %v2064 = vld [vmem:[%s1982 + $0x144] sm:$0xf]
    %v2065 = vld [vmem:[%s1982 + $0x148] sm:$0xf]
    %v2066 = vld [vmem:[%s1982 + $0x14c] sm:$0xf]
    %v2067 = vld [vmem:[%s1982 + $0x150] sm:$0xf]
    %v2068 = vld [vmem:[%s1982 + $0x154] sm:$0xf]
    %v2069 = vld [vmem:[%s1982 + $0x158] sm:$0xf]
    %v2070 = vld [vmem:[%s1982 + $0x15c] sm:$0xf]
    %v2071 = vld [vmem:[%s1982 + $0x160] sm:$0xf]
    %v2072 = vld [vmem:[%s1982 + $0x164] sm:$0xf]
    %v2073 = vld [vmem:[%s1982 + $0x168] sm:$0xf]
    %v2074 = vld [vmem:[%s1982 + $0x16c] sm:$0xf]
    %v2075 = vld [vmem:[%s1982 + $0x170] sm:$0xf]
    %v2076 = vld [vmem:[%s1982 + $0x174] sm:$0xf]
    %v2077 = vld [vmem:[%s1982 + $0x178] sm:$0xf]
    %v2078 = vld [vmem:[%s1982 + $0x17c] sm:$0xf]
    %v2079 = vld [vmem:[%s1982 + $0x180] sm:$0xf]
    %v2080 = vld [vmem:[%s1982 + $0x184] sm:$0xf]
    %v2081 = vld [vmem:[%s1982 + $0x188] sm:$0xf]
    %v2082 = vld [vmem:[%s1982 + $0x18c] sm:$0xf]
    %v2083 = vld [vmem:[%s1982 + $0x190] sm:$0xf]
    %v2084 = vld [vmem:[%s1982 + $0x194] sm:$0xf]
    %v2085 = vld [vmem:[%s1982 + $0x198] sm:$0xf]
    %v2086 = vld [vmem:[%s1982 + $0x19c] sm:$0xf]
    %v2087 = vld [vmem:[%s1982 + $0x1a0] sm:$0xf]
    %v2088 = vld [vmem:[%s1982 + $0x1a4] sm:$0xf]
    %v2089 = vld [vmem:[%s1982 + $0x1a8] sm:$0xf]
    %v2090 = vld [vmem:[%s1982 + $0x1ac] sm:$0xf]
    %v2091 = vld [vmem:[%s1982 + $0x1b0] sm:$0xf]
    %v2092 = vld [vmem:[%s1982 + $0x1b4] sm:$0xf]
    %v2093 = vld [vmem:[%s1982 + $0x1b8] sm:$0xf]
    %v2094 = vld [vmem:[%s1982 + $0x1bc] sm:$0xf]
    %v2095 = vld [vmem:[%s1982 + $0x1c0] sm:$0xf]
    %v2096 = vld [vmem:[%s1982 + $0x1c4] sm:$0xf]
    %v2097 = vld [vmem:[%s1982 + $0x1c8] sm:$0xf]
    %v2098 = vld [vmem:[%s1982 + $0x1cc] sm:$0xf]
    %v2099 = vld [vmem:[%s1982 + $0x1d0] sm:$0xf]
    %v2100 = vld [vmem:[%s1982 + $0x1d4] sm:$0xf]
    %v2101 = vld [vmem:[%s1982 + $0x1d8] sm:$0xf]
    %v2102 = vld [vmem:[%s1982 + $0x1dc] sm:$0xf]
    %v2103 = vld [vmem:[%s1982 + $0x1e0] sm:$0xf]
    %v2104 = vld [vmem:[%s1982 + $0x1e4] sm:$0xf]
    %v2105 = vld [vmem:[%s1982 + $0x1e8] sm:$0xf]
    %v2106 = vld [vmem:[%s1982 + $0x1ec] sm:$0xf]
    %v2107 = vld [vmem:[%s1982 + $0x1f0] sm:$0xf]
    %v2108 = vld [vmem:[%s1982 + $0x1f4] sm:$0xf]
    %v2109 = vld [vmem:[%s1982 + $0x1f8] sm:$0xf]
    %v2110 = vld [vmem:[%s1982 + $0x1fc] sm:$0xf]
    %v2111 = vld [vmem:[%s1982 + $0x200] sm:$0xf]
    %v2112 = vld [vmem:[%s1982 + $0x204] sm:$0xf]
    %v2113 = vld [vmem:[%s1982 + $0x208] sm:$0xf]
    %v2114 = vld [vmem:[%s1982 + $0x20c] sm:$0xf]
    %v2115 = vld [vmem:[%s1982 + $0x210] sm:$0xf]
    %v2116 = vld [vmem:[%s1982 + $0x214] sm:$0xf]
    %v2117 = vld [vmem:[%s1982 + $0x218] sm:$0xf]
    %v2118 = vld [vmem:[%s1982 + $0x21c] sm:$0xf]
    %v2119 = vld [vmem:[%s1982 + $0x220] sm:$0xf]
    %v2120 = vld [vmem:[%s1982 + $0x224] sm:$0xf]
    %v2121 = vld [vmem:[%s1982 + $0x228] sm:$0xf]
    %v2122 = vld [vmem:[%s1982 + $0x22c] sm:$0xf]
    %v2123 = vld [vmem:[%s1982 + $0x230] sm:$0xf]
    %v2124 = vld [vmem:[%s1982 + $0x234] sm:$0xf]
    %v2125 = vld [vmem:[%s1982 + $0x238] sm:$0xf]
    %v2126 = vld [vmem:[%s1982 + $0x23c] sm:$0xf]
    %v2271 = vunpack.c.l.b16 %v1983
    %v2272 = vunpack.c.l.b16 %v1984
    %v2273 = vunpack.c.l.b16 %v1985
    %v2274 = vunpack.c.l.b16 %v1986
    %v2275 = vunpack.c.l.b16 %v1987
    %v2276 = vunpack.c.l.b16 %v1988
    %v2277 = vunpack.c.l.b16 %v1989
    %v2278 = vunpack.c.l.b16 %v1990
    %v2279 = vunpack.c.l.b16 %v1991
    %v2280 = vunpack.c.l.b16 %v1992
    %v2281 = vunpack.c.l.b16 %v1993
    %v2282 = vunpack.c.l.b16 %v1994
    %v2283 = vunpack.c.l.b16 %v1995
    %v2284 = vunpack.c.l.b16 %v1996
    %v2285 = vunpack.c.l.b16 %v1997
    %v2286 = vunpack.c.l.b16 %v1998
    %v2287 = vunpack.c.l.b16 %v1999
    %v2288 = vunpack.c.l.b16 %v2000
    %v2289 = vunpack.c.l.b16 %v2001
    %v2290 = vunpack.c.l.b16 %v2002
    %v2291 = vunpack.c.l.b16 %v2003
    %v2292 = vunpack.c.l.b16 %v2004
    %v2293 = vunpack.c.l.b16 %v2005
    %v2294 = vunpack.c.l.b16 %v2006
    %v2295 = vunpack.c.l.b16 %v2007
    %v2296 = vunpack.c.l.b16 %v2008
    %v2297 = vunpack.c.l.b16 %v2009
    %v2298 = vunpack.c.l.b16 %v2010
    %v2299 = vunpack.c.l.b16 %v2011
    %v2300 = vunpack.c.l.b16 %v2012
    %v2301 = vunpack.c.l.b16 %v2013
    %v2302 = vunpack.c.l.b16 %v2014
    %v2303 = vunpack.c.l.b16 %v2015
    %v2304 = vunpack.c.l.b16 %v2016
    %v2305 = vunpack.c.l.b16 %v2017
    %v2306 = vunpack.c.l.b16 %v2018
    %v2307 = vunpack.c.l.b16 %v2019
    %v2308 = vunpack.c.l.b16 %v2020
    %v2309 = vunpack.c.l.b16 %v2021
    %v2310 = vunpack.c.l.b16 %v2022
    %v2311 = vunpack.c.l.b16 %v2023
    %v2312 = vunpack.c.l.b16 %v2024
    %v2313 = vunpack.c.l.b16 %v2025
    %v2314 = vunpack.c.l.b16 %v2026
    %v2315 = vunpack.c.l.b16 %v2027
    %v2316 = vunpack.c.l.b16 %v2028
    %v2317 = vunpack.c.l.b16 %v2029
    %v2318 = vunpack.c.l.b16 %v2030
    %v2319 = vunpack.c.l.b16 %v2031
    %v2320 = vunpack.c.l.b16 %v2032
    %v2321 = vunpack.c.l.b16 %v2033
    %v2322 = vunpack.c.l.b16 %v2034
    %v2323 = vunpack.c.l.b16 %v2035
    %v2324 = vunpack.c.l.b16 %v2036
    %v2325 = vunpack.c.l.b16 %v2037
    %v2326 = vunpack.c.l.b16 %v2038
    %v2327 = vunpack.c.l.b16 %v2039
    %v2328 = vunpack.c.l.b16 %v2040
    %v2329 = vunpack.c.l.b16 %v2041
    %v2330 = vunpack.c.l.b16 %v2042
    %v2331 = vunpack.c.l.b16 %v2043
    %v2332 = vunpack.c.l.b16 %v2044
    %v2333 = vunpack.c.l.b16 %v2045
    %v2334 = vunpack.c.l.b16 %v2046
    %v2335 = vunpack.c.l.b16 %v2047
    %v2336 = vunpack.c.l.b16 %v2048
    %v2337 = vunpack.c.l.b16 %v2049
    %v2338 = vunpack.c.l.b16 %v2050
    %v2339 = vunpack.c.l.b16 %v2051
    %v2340 = vunpack.c.l.b16 %v2052
    %v2341 = vunpack.c.l.b16 %v2053
    %v2342 = vunpack.c.l.b16 %v2054
    %v2343 = vunpack.c.l.b16 %v2055
    %v2344 = vunpack.c.l.b16 %v2056
    %v2345 = vunpack.c.l.b16 %v2057
    %v2346 = vunpack.c.l.b16 %v2058
    %v2347 = vunpack.c.l.b16 %v2059
    %v2348 = vunpack.c.l.b16 %v2060
    %v2349 = vunpack.c.l.b16 %v2061
    %v2350 = vunpack.c.l.b16 %v2062
    %v2351 = vunpack.c.l.b16 %v2063
    %v2352 = vunpack.c.l.b16 %v2064
    %v2353 = vunpack.c.l.b16 %v2065
    %v2354 = vunpack.c.l.b16 %v2066
    %v2355 = vunpack.c.l.b16 %v2067
    %v2356 = vunpack.c.l.b16 %v2068
    %v2357 = vunpack.c.l.b16 %v2069
    %v2358 = vunpack.c.l.b16 %v2070
    %v2359 = vunpack.c.l.b16 %v2071
    %v2360 = vunpack.c.l.b16 %v2072
    %v2361 = vunpack.c.l.b16 %v2073
    %v2362 = vunpack.c.l.b16 %v2074
    %v2363 = vunpack.c.l.b16 %v2075
    %v2364 = vunpack.c.l.b16 %v2076
    %v2365 = vunpack.c.l.b16 %v2077
    %v2366 = vunpack.c.l.b16 %v2078
    %v2367 = vunpack.c.l.b16 %v2079
    %v2368 = vunpack.c.l.b16 %v2080
    %v2369 = vunpack.c.l.b16 %v2081
    %v2370 = vunpack.c.l.b16 %v2082
    %v2371 = vunpack.c.l.b16 %v2083
    %v2372 = vunpack.c.l.b16 %v2084
    %v2373 = vunpack.c.l.b16 %v2085
    %v2374 = vunpack.c.l.b16 %v2086
    %v2375 = vunpack.c.l.b16 %v2087
    %v2376 = vunpack.c.l.b16 %v2088
    %v2377 = vunpack.c.l.b16 %v2089
    %v2378 = vunpack.c.l.b16 %v2090
    %v2379 = vunpack.c.l.b16 %v2091
    %v2380 = vunpack.c.l.b16 %v2092
    %v2381 = vunpack.c.l.b16 %v2093
    %v2382 = vunpack.c.l.b16 %v2094
    %v2383 = vunpack.c.l.b16 %v2095
    %v2384 = vunpack.c.l.b16 %v2096
    %v2385 = vunpack.c.l.b16 %v2097
    %v2386 = vunpack.c.l.b16 %v2098
    %v2387 = vunpack.c.l.b16 %v2099
    %v2388 = vunpack.c.l.b16 %v2100
    %v2389 = vunpack.c.l.b16 %v2101
    %v2390 = vunpack.c.l.b16 %v2102
    %v2391 = vunpack.c.l.b16 %v2103
    %v2392 = vunpack.c.l.b16 %v2104
    %v2393 = vunpack.c.l.b16 %v2105
    %v2394 = vunpack.c.l.b16 %v2106
    %v2395 = vunpack.c.l.b16 %v2107
    %v2396 = vunpack.c.l.b16 %v2108
    %v2397 = vunpack.c.l.b16 %v2109
    %v2398 = vunpack.c.l.b16 %v2110
    %v2399 = vunpack.c.l.b16 %v2111
    %v2400 = vunpack.c.l.b16 %v2112
    %v2401 = vunpack.c.l.b16 %v2113
    %v2402 = vunpack.c.l.b16 %v2114
    %v2403 = vunpack.c.l.b16 %v2115
    %v2404 = vunpack.c.l.b16 %v2116
    %v2405 = vunpack.c.l.b16 %v2117
    %v2406 = vunpack.c.l.b16 %v2118
    %v2407 = vunpack.c.l.b16 %v2119
    %v2408 = vunpack.c.l.b16 %v2120
    %v2409 = vunpack.c.l.b16 %v2121
    %v2410 = vunpack.c.l.b16 %v2122
    %v2411 = vunpack.c.l.b16 %v2123
    %v2412 = vunpack.c.l.b16 %v2124
    %v2413 = vunpack.c.l.b16 %v2125
    %v2414 = vunpack.c.l.b16 %v2126
    %v2415 = vpack.c.b16 %v2272, %v2271
    %v2416 = vpack.c.b16 %v2274, %v2273
    %v2417 = vpack.c.b16 %v2276, %v2275
    %v2418 = vpack.c.b16 %v2278, %v2277
    %v2419 = vpack.c.b16 %v2280, %v2279
    %v2420 = vpack.c.b16 %v2282, %v2281
    %v2421 = vpack.c.b16 %v2284, %v2283
    %v2422 = vpack.c.b16 %v2286, %v2285
    %v2423 = vpack.c.b16 %v2288, %v2287
    %v2424 = vpack.c.b16 %v2290, %v2289
    %v2425 = vpack.c.b16 %v2292, %v2291
    %v2426 = vpack.c.b16 %v2294, %v2293
    %v2427 = vpack.c.b16 %v2296, %v2295
    %v2428 = vpack.c.b16 %v2298, %v2297
    %v2429 = vpack.c.b16 %v2300, %v2299
    %v2430 = vpack.c.b16 %v2302, %v2301
    %v2431 = vpack.c.b16 %v2304, %v2303
    %v2432 = vpack.c.b16 %v2306, %v2305
    %v2433 = vpack.c.b16 %v2308, %v2307
    %v2434 = vpack.c.b16 %v2310, %v2309
    %v2435 = vpack.c.b16 %v2312, %v2311
    %v2436 = vpack.c.b16 %v2314, %v2313
    %v2437 = vpack.c.b16 %v2316, %v2315
    %v2438 = vpack.c.b16 %v2318, %v2317
    %v2439 = vpack.c.b16 %v2320, %v2319
    %v2440 = vpack.c.b16 %v2322, %v2321
    %v2441 = vpack.c.b16 %v2324, %v2323
    %v2442 = vpack.c.b16 %v2326, %v2325
    %v2443 = vpack.c.b16 %v2328, %v2327
    %v2444 = vpack.c.b16 %v2330, %v2329
    %v2445 = vpack.c.b16 %v2332, %v2331
    %v2446 = vpack.c.b16 %v2334, %v2333
    %v2447 = vpack.c.b16 %v2336, %v2335
    %v2448 = vpack.c.b16 %v2338, %v2337
    %v2449 = vpack.c.b16 %v2340, %v2339
    %v2450 = vpack.c.b16 %v2342, %v2341
    %v2451 = vpack.c.b16 %v2344, %v2343
    %v2452 = vpack.c.b16 %v2346, %v2345
    %v2453 = vpack.c.b16 %v2348, %v2347
    %v2454 = vpack.c.b16 %v2350, %v2349
    %v2455 = vpack.c.b16 %v2352, %v2351
    %v2456 = vpack.c.b16 %v2354, %v2353
    %v2457 = vpack.c.b16 %v2356, %v2355
    %v2458 = vpack.c.b16 %v2358, %v2357
    %v2459 = vpack.c.b16 %v2360, %v2359
    %v2460 = vpack.c.b16 %v2362, %v2361
    %v2461 = vpack.c.b16 %v2364, %v2363
    %v2462 = vpack.c.b16 %v2366, %v2365
    %v2463 = vpack.c.b16 %v2368, %v2367
    %v2464 = vpack.c.b16 %v2370, %v2369
    %v2465 = vpack.c.b16 %v2372, %v2371
    %v2466 = vpack.c.b16 %v2374, %v2373
    %v2467 = vpack.c.b16 %v2376, %v2375
    %v2468 = vpack.c.b16 %v2378, %v2377
    %v2469 = vpack.c.b16 %v2380, %v2379
    %v2470 = vpack.c.b16 %v2382, %v2381
    %v2471 = vpack.c.b16 %v2384, %v2383
    %v2472 = vpack.c.b16 %v2386, %v2385
    %v2473 = vpack.c.b16 %v2388, %v2387
    %v2474 = vpack.c.b16 %v2390, %v2389
    %v2475 = vpack.c.b16 %v2392, %v2391
    %v2476 = vpack.c.b16 %v2394, %v2393
    %v2477 = vpack.c.b16 %v2396, %v2395
    %v2478 = vpack.c.b16 %v2398, %v2397
    %v2479 = vpack.c.b16 %v2400, %v2399
    %v2480 = vpack.c.b16 %v2402, %v2401
    %v2481 = vpack.c.b16 %v2404, %v2403
    %v2482 = vpack.c.b16 %v2406, %v2405
    %v2483 = vpack.c.b16 %v2408, %v2407
    %v2484 = vpack.c.b16 %v2410, %v2409
    %v2485 = vpack.c.b16 %v2412, %v2411
    %v2486 = vpack.c.b16 %v2414, %v2413
    %2559 = vmatprep.subr.bf16.mxu0 0
    %2560 = vmatpush1.bf16.msra.mxu0 %v2415
    %2561 = vmatprep.subr.bf16.mxu0 0
    %2562 = vmatpush1.bf16.msra.mxu0 %v2416
    %2563 = vmatprep.subr.bf16.mxu0 0
    %2564 = vmatpush1.bf16.msra.mxu0 %v2417
    %2565 = vmatprep.subr.bf16.mxu0 0
    %2566 = vmatpush1.bf16.msra.mxu0 %v2418
    %2567 = vmatprep.subr.bf16.mxu0 0
    %2568 = vmatpush1.bf16.msra.mxu0 %v2419
    %2569 = vmatprep.subr.bf16.mxu0 0
    %2570 = vmatpush1.bf16.msra.mxu0 %v2420
    %2571 = vmatprep.subr.bf16.mxu0 0
    %2572 = vmatpush1.bf16.msra.mxu0 %v2421
    %2573 = vmatprep.subr.bf16.mxu0 0
    %2574 = vmatpush1.bf16.msra.mxu0 %v2422
    %2575 = vmatprep.subr.bf16.mxu0 0
    %2576 = vmatpush1.bf16.msra.mxu0 %v2423
    %2577 = vmatprep.subr.bf16.mxu0 0
    %2578 = vmatpush1.bf16.msra.mxu0 %v2424
    %2579 = vmatprep.subr.bf16.mxu0 0
    %2580 = vmatpush1.bf16.msra.mxu0 %v2425
    %2581 = vmatprep.subr.bf16.mxu0 0
    %2582 = vmatpush1.bf16.msra.mxu0 %v2426
    %2583 = vmatprep.subr.bf16.mxu0 0
    %2584 = vmatpush1.bf16.msra.mxu0 %v2427
    %2585 = vmatprep.subr.bf16.mxu0 0
    %2586 = vmatpush1.bf16.msra.mxu0 %v2428
    %2587 = vmatprep.subr.bf16.mxu0 0
    %2588 = vmatpush1.bf16.msra.mxu0 %v2429
    %2589 = vmatprep.subr.bf16.mxu0 0
    %2590 = vmatpush1.bf16.msra.mxu0 %v2430
    %2591 = vmatprep.mubr.bf16.mxu0 %v1974
    %2592 = vmatmul.mubr.bf16.gmra.mrb[0].mxu0 %v1973
    %v2593 = vpop.f32.mrb[0].mxu0
    %v2594 = vadd.f32 0.0, %v2593
    %v2595 = vpop.f32.mrb[0].mxu0
    %v2596 = vpop.f32.mrb[0].mxu0
    %v2597 = vpop.f32.mrb[0].mxu0
    %2598 = vdwg.mxu0
    %2599 = vmatprep.subr.bf16.mxu0 0
    %2600 = vmatpush1.bf16.msra.mxu0 %v2431
    %2601 = vmatprep.subr.bf16.mxu0 0
    %2602 = vmatpush1.bf16.msra.mxu0 %v2432
    %2603 = vmatprep.subr.bf16.mxu0 0
    %2604 = vmatpush1.bf16.msra.mxu0 %v2433
    %2605 = vmatprep.subr.bf16.mxu0 0
    %2606 = vmatpush1.bf16.msra.mxu0 %v2434
    %2607 = vmatprep.subr.bf16.mxu0 0
    %2608 = vmatpush1.bf16.msra.mxu0 %v2435
    %2609 = vmatprep.subr.bf16.mxu0 0
    %2610 = vmatpush1.bf16.msra.mxu0 %v2436
    %2611 = vmatprep.subr.bf16.mxu0 0
    %2612 = vmatpush1.bf16.msra.mxu0 %v2437
    %2613 = vmatprep.subr.bf16.mxu0 0
    %2614 = vmatpush1.bf16.msra.mxu0 %v2438
    %2615 = vmatprep.subr.bf16.mxu0 0
    %2616 = vmatpush1.bf16.msra.mxu0 %v2439
    %2617 = vmatprep.subr.bf16.mxu0 0
    %2618 = vmatpush1.bf16.msra.mxu0 %v2440
    %2619 = vmatprep.subr.bf16.mxu0 0
    %2620 = vmatpush1.bf16.msra.mxu0 %v2441
    %2621 = vmatprep.subr.bf16.mxu0 0
    %2622 = vmatpush1.bf16.msra.mxu0 %v2442
    %2623 = vmatprep.subr.bf16.mxu0 0
    %2624 = vmatpush1.bf16.msra.mxu0 %v2443
    %2625 = vmatprep.subr.bf16.mxu0 0
    %2626 = vmatpush1.bf16.msra.mxu0 %v2444
    %2627 = vmatprep.subr.bf16.mxu0 0
    %2628 = vmatpush1.bf16.msra.mxu0 %v2445
    %2629 = vmatprep.subr.bf16.mxu0 0
    %2630 = vmatpush1.bf16.msra.mxu0 %v2446
    %2631 = vmatprep.mubr.bf16.mxu0 %v1976
    %2632 = vmatmul.mubr.bf16.gmra.mrb[0].mxu0 %v1975
    %v2633 = vpop.f32.mrb[0].mxu0
    %v2634 = vadd.f32 %v2594, %v2633
    %v2635 = vpop.f32.mrb[0].mxu0
    %v2636 = vpop.f32.mrb[0].mxu0
    %v2637 = vpop.f32.mrb[0].mxu0
    %2638 = vdwg.mxu0
    %2639 = vmatprep.subr.bf16.mxu0 0
    %2640 = vmatpush1.bf16.msra.mxu0 %v2447
    %2641 = vmatprep.subr.bf16.mxu0 0
    %2642 = vmatpush1.bf16.msra.mxu0 %v2448
    %2643 = vmatprep.subr.bf16.mxu0 0
    %2644 = vmatpush1.bf16.msra.mxu0 %v2449
    %2645 = vmatprep.subr.bf16.mxu0 0
    %2646 = vmatpush1.bf16.msra.mxu0 %v2450
    %2647 = vmatprep.subr.bf16.mxu0 0
    %2648 = vmatpush1.bf16.msra.mxu0 %v2451
    %2649 = vmatprep.subr.bf16.mxu0 0
    %2650 = vmatpush1.bf16.msra.mxu0 %v2452
    %2651 = vmatprep.subr.bf16.mxu0 0
    %2652 = vmatpush1.bf16.msra.mxu0 %v2453
    %2653 = vmatprep.subr.bf16.mxu0 0
    %2654 = vmatpush1.bf16.msra.mxu0 %v2454
    %2655 = vmatprep.subr.bf16.mxu0 0
    %2656 = vmatpush1.bf16.msra.mxu0 %v2455
    %2657 = vmatprep.subr.bf16.mxu0 0
    %2658 = vmatpush1.bf16.msra.mxu0 %v2456
    %2659 = vmatprep.subr.bf16.mxu0 0
    %2660 = vmatpush1.bf16.msra.mxu0 %v2457
    %2661 = vmatprep.subr.bf16.mxu0 0
    %2662 = vmatpush1.bf16.msra.mxu0 %v2458
    %2663 = vmatprep.subr.bf16.mxu0 0
    %2664 = vmatpush1.bf16.msra.mxu0 %v2459
    %2665 = vmatprep.subr.bf16.mxu0 0
    %2666 = vmatpush1.bf16.msra.mxu0 %v2460
    %2667 = vmatprep.subr.bf16.mxu0 0
    %2668 = vmatpush1.bf16.msra.mxu0 %v2461
    %2669 = vmatprep.subr.bf16.mxu0 0
    %2670 = vmatpush1.bf16.msra.mxu0 %v2462
    %2671 = vmatprep.mubr.bf16.mxu0 %v1978
    %2672 = vmatmul.mubr.bf16.gmra.mrb[0].mxu0 %v1977
    %v2673 = vpop.f32.mrb[0].mxu0
    %v2674 = vadd.f32 %v2634, %v2673
    %v2675 = vpop.f32.mrb[0].mxu0
    %v2676 = vpop.f32.mrb[0].mxu0
    %v2677 = vpop.f32.mrb[0].mxu0
    %2678 = vdwg.mxu0
    %2679 = vmatprep.subr.bf16.mxu0 0
    %2680 = vmatpush1.bf16.msra.mxu0 %v2463
    %2681 = vmatprep.subr.bf16.mxu0 0
    %2682 = vmatpush1.bf16.msra.mxu0 %v2464
    %2683 = vmatprep.subr.bf16.mxu0 0
    %2684 = vmatpush1.bf16.msra.mxu0 %v2465
    %2685 = vmatprep.subr.bf16.mxu0 0
    %2686 = vmatpush1.bf16.msra.mxu0 %v2466
    %2687 = vmatprep.subr.bf16.mxu0 0
    %2688 = vmatpush1.bf16.msra.mxu0 %v2467
    %2689 = vmatprep.subr.bf16.mxu0 0
    %2690 = vmatpush1.bf16.msra.mxu0 %v2468
    %2691 = vmatprep.subr.bf16.mxu0 0
    %2692 = vmatpush1.bf16.msra.mxu0 %v2469
    %2693 = vmatprep.subr.bf16.mxu0 0
    %2694 = vmatpush1.bf16.msra.mxu0 %v2470
    %2695 = vmatprep.subr.bf16.mxu0 0
    %2696 = vmatpush1.bf16.msra.mxu0 %v2471
    %2697 = vmatprep.subr.bf16.mxu0 0
    %2698 = vmatpush1.bf16.msra.mxu0 %v2472
    %2699 = vmatprep.subr.bf16.mxu0 0
    %2700 = vmatpush1.bf16.msra.mxu0 %v2473
    %2701 = vmatprep.subr.bf16.mxu0 0
    %2702 = vmatpush1.bf16.msra.mxu0 %v2474
    %2703 = vmatprep.subr.bf16.mxu0 0
    %2704 = vmatpush1.bf16.msra.mxu0 %v2475
    %2705 = vmatprep.subr.bf16.mxu0 0
    %2706 = vmatpush1.bf16.msra.mxu0 %v2476
    %2707 = vmatprep.subr.bf16.mxu0 0
    %2708 = vmatpush1.bf16.msra.mxu0 %v2477
    %2709 = vmatprep.subr.bf16.mxu0 0
    %2710 = vmatpush1.bf16.msra.mxu0 %v2478
    %2711 = vmatprep.mubr.bf16.mxu0 %v1980
    %2712 = vmatmul.mubr.bf16.gmra.mrb[0].mxu0 %v1979
    %v2713 = vpop.f32.mrb[0].mxu0
    %v2714 = vadd.f32 %v2674, %v2713
    %v2715 = vpop.f32.mrb[0].mxu0
    %v2716 = vpop.f32.mrb[0].mxu0
    %v2717 = vpop.f32.mrb[0].mxu0
    %2718 = vdwg.mxu0
    %2719 = vmatprep.subr.bf16.mxu0 0
    %2720 = vmatpush1.bf16.msra.mxu0 %v2479
    %2721 = vmatprep.subr.bf16.mxu0 0
    %2722 = vmatpush1.bf16.msra.mxu0 %v2480
    %2723 = vmatprep.subr.bf16.mxu0 0
    %2724 = vmatpush1.bf16.msra.mxu0 %v2481
    %2725 = vmatprep.subr.bf16.mxu0 0
    %2726 = vmatpush1.bf16.msra.mxu0 %v2482
    %2727 = vmatprep.subr.bf16.mxu0 0
    %2728 = vmatpush1.bf16.msra.mxu0 %v2483
    %2729 = vmatprep.subr.bf16.mxu0 0
    %2730 = vmatpush1.bf16.msra.mxu0 %v2484
    %2731 = vmatprep.subr.bf16.mxu0 0
    %2732 = vmatpush1.bf16.msra.mxu0 %v2485
    %2733 = vmatprep.subr.bf16.mxu0 0
    %2734 = vmatpush1.bf16.msra.mxu0 %v2486
    %2735 = vmatprep.subr.bf16.mxu0 0
    %2736 = vmatpush1.bf16.msra.mxu0 0
    %2737 = vmatprep.subr.bf16.mxu0 0
    %2738 = vmatpush1.bf16.msra.mxu0 0
    %2739 = vmatprep.subr.bf16.mxu0 0
    %2740 = vmatpush1.bf16.msra.mxu0 0
    %2741 = vmatprep.subr.bf16.mxu0 0
    %2742 = vmatpush1.bf16.msra.mxu0 0
    %2743 = vmatprep.subr.bf16.mxu0 0
    %2744 = vmatpush1.bf16.msra.mxu0 0
    %2745 = vmatprep.subr.bf16.mxu0 0
    %2746 = vmatpush1.bf16.msra.mxu0 0
    %2747 = vmatprep.subr.bf16.mxu0 0
    %2748 = vmatpush1.bf16.msra.mxu0 0
    %2749 = vmatprep.subr.bf16.mxu0 0
    %2750 = vmatpush1.bf16.msra.mxu0 0
    %2751 = vmatprep.mubr.bf16.mxu0 0
    %2752 = vmatmul.mubr.bf16.gmra.mrb[0].mxu0 %v1981
    %v2753 = vpop.f32.mrb[0].mxu0
    %v2754 = vadd.f32 %v2714, %v2753
    %v2755 = vpop.f32.mrb[0].mxu0
    %v2756 = vpop.f32.mrb[0].mxu0
    %v2757 = vpop.f32.mrb[0].mxu0
    %2758 = vdwg.mxu0
    %v2759 = vadd.f32 %v1827, %v2754
    %v2760 = vlaneseq
    %v2761 = vshrl.u32 %v2760, 7
    %v2762 = vsub.s32 2, %v2761
    %v2763 = vrot.slane %v474, %v2762
    %v2764 = vlaneseq
    %v2765 = vshrl.u32 %v2764, 7
    %v2766 = vsub.s32 2, %v2765
    %v2767 = vrot.slane %v475, %v2766
    %v2768 = vlaneseq
    %v2769 = vshrl.u32 %v2768, 7
    %v2770 = vsub.s32 2, %v2769
    %v2771 = vrot.slane %v476, %v2770
    %v2772 = vlaneseq
    %v2773 = vshrl.u32 %v2772, 7
    %v2774 = vsub.s32 2, %v2773
    %v2775 = vrot.slane %v477, %v2774
    %v2776 = vlaneseq
    %v2777 = vshrl.u32 %v2776, 7
    %v2778 = vsub.s32 2, %v2777
    %v2779 = vrot.slane %v478, %v2778
    %v2780 = vlaneseq
    %v2781 = vshrl.u32 %v2780, 7
    %v2782 = vsub.s32 2, %v2781
    %v2783 = vrot.slane %v479, %v2782
    %v2784 = vlaneseq
    %v2785 = vshrl.u32 %v2784, 7
    %v2786 = vsub.s32 2, %v2785
    %v2787 = vrot.slane %v480, %v2786
    %v2788 = vlaneseq
    %v2789 = vshrl.u32 %v2788, 7
    %v2790 = vsub.s32 2, %v2789
    %v2791 = vrot.slane %v481, %v2790
    %v2792 = vlaneseq
    %v2793 = vshrl.u32 %v2792, 7
    %v2794 = vsub.s32 2, %v2793
    %v2795 = vrot.slane %v482, %v2794
    %v2805 = vcombine.low %v2763, %v2767
    %v2806 = vcombine.low %v2771, %v2775
    %v2808 = vunpack.c.l.s4 1983009808
    %v2809 = vunpack.c.0.s8 %v2808
    %v2810 = vlaneseq
    %v2811 = vshrl.u32 %v2810, 7
    %v2812 = vsub.s32 %v2809, %v2811
    %v2813 = vrot.slane %v2805, %v2812
    %v2815 = vunpack.c.l.s4 1983009808
    %v2816 = vunpack.c.0.s8 %v2815
    %v2817 = vlaneseq
    %v2818 = vshrl.u32 %v2817, 7
    %v2819 = vsub.s32 %v2816, %v2818
    %v2820 = vrot.slane %v2806, %v2819
    %v2821 = vcombine.low %v2813, %v2820
    %v2822 = vcombine.low %v2779, %v2783
    %v2823 = vcombine.low %v2787, %v2791
    %v2825 = vunpack.c.l.s4 1983009808
    %v2826 = vunpack.c.0.s8 %v2825
    %v2827 = vlaneseq
    %v2828 = vshrl.u32 %v2827, 7
    %v2829 = vsub.s32 %v2826, %v2828
    %v2830 = vrot.slane %v2822, %v2829
    %v2832 = vunpack.c.l.s4 1983009808
    %v2833 = vunpack.c.0.s8 %v2832
    %v2834 = vlaneseq
    %v2835 = vshrl.u32 %v2834, 7
    %v2836 = vsub.s32 %v2833, %v2835
    %v2837 = vrot.slane %v2823, %v2836
    %v2838 = vcombine.low %v2830, %v2837
    %v2840 = vunpack.c.l.s4 1983009808
    %v2841 = vunpack.c.0.s8 %v2840
    %v2842 = vlaneseq
    %v2843 = vshrl.u32 %v2842, 7
    %v2844 = vsub.s32 %v2841, %v2843
    %v2845 = vrot.slane %v2795, %v2844
    %v2849 = vmul.f32 %v483, %v2821
    %v2850 = vmul.f32 %v484, %v2838
    %v2851 = vmul.f32 %v485, %v2845
    %v2855 = vcombine.high %v2849, %v2849
    %v2857 = vunpack.c.l.s4 1983009808
    %v2858 = vunpack.c.0.s8 %v2857
    %v2859 = vlaneseq
    %v2860 = vshrl.u32 %v2859, 7
    %v2861 = vsub.s32 %v2858, %v2860
    %v2862 = vrot.slane %v2849, %v2861
    %v2864 = vunpack.c.l.s4 1983009808
    %v2865 = vunpack.c.0.s8 %v2864
    %v2866 = vlaneseq
    %v2867 = vshrl.u32 %v2866, 7
    %v2868 = vsub.s32 %v2865, %v2867
    %v2869 = vrot.slane %v2855, %v2868
    %v2870 = vcombine.high %v2862, %v2862
    %v2871 = vcombine.high %v2869, %v2869
    %v2872 = vcombine.high %v2850, %v2850
    %v2874 = vunpack.c.l.s4 1983009808
    %v2875 = vunpack.c.0.s8 %v2874
    %v2876 = vlaneseq
    %v2877 = vshrl.u32 %v2876, 7
    %v2878 = vsub.s32 %v2875, %v2877
    %v2879 = vrot.slane %v2850, %v2878
    %v2881 = vunpack.c.l.s4 1983009808
    %v2882 = vunpack.c.0.s8 %v2881
    %v2883 = vlaneseq
    %v2884 = vshrl.u32 %v2883, 7
    %v2885 = vsub.s32 %v2882, %v2884
    %v2886 = vrot.slane %v2872, %v2885
    %v2887 = vcombine.high %v2879, %v2879
    %v2888 = vcombine.high %v2886, %v2886
    %v2890 = vunpack.c.l.s4 1983009808
    %v2891 = vunpack.c.0.s8 %v2890
    %v2892 = vlaneseq
    %v2893 = vshrl.u32 %v2892, 7
    %v2894 = vsub.s32 %v2891, %v2893
    %v2895 = vrot.slane %v2851, %v2894
    %v2905 = vpack.c.bf16 %v2862, %v2862
    %v2906 = vpack.c.bf16 %v2870, %v2870
    %v2907 = vpack.c.bf16 %v2869, %v2869
    %v2908 = vpack.c.bf16 %v2871, %v2871
    %v2909 = vpack.c.bf16 %v2879, %v2879
    %v2910 = vpack.c.bf16 %v2887, %v2887
    %v2911 = vpack.c.bf16 %v2886, %v2886
    %v2912 = vpack.c.bf16 %v2888, %v2888
    %v2913 = vpack.c.bf16 %v2895, %v2895
    %s2914 = scalar_lea.vmem %s4, 1152
    %v2915 = vld [vmem:[%s2914] sm:$0xf]
    %v2916 = vld [vmem:[%s2914 + $0x4] sm:$0xf]
    %v2917 = vld [vmem:[%s2914 + $0x8] sm:$0xf]
    %v2918 = vld [vmem:[%s2914 + $0xc] sm:$0xf]
    %v2919 = vld [vmem:[%s2914 + $0x10] sm:$0xf]
    %v2920 = vld [vmem:[%s2914 + $0x14] sm:$0xf]
    %v2921 = vld [vmem:[%s2914 + $0x18] sm:$0xf]
    %v2922 = vld [vmem:[%s2914 + $0x1c] sm:$0xf]
    %v2923 = vld [vmem:[%s2914 + $0x20] sm:$0xf]
    %v2924 = vld [vmem:[%s2914 + $0x24] sm:$0xf]
    %v2925 = vld [vmem:[%s2914 + $0x28] sm:$0xf]
    %v2926 = vld [vmem:[%s2914 + $0x2c] sm:$0xf]
    %v2927 = vld [vmem:[%s2914 + $0x30] sm:$0xf]
    %v2928 = vld [vmem:[%s2914 + $0x34] sm:$0xf]
    %v2929 = vld [vmem:[%s2914 + $0x38] sm:$0xf]
    %v2930 = vld [vmem:[%s2914 + $0x3c] sm:$0xf]
    %v2931 = vld [vmem:[%s2914 + $0x40] sm:$0xf]
    %v2932 = vld [vmem:[%s2914 + $0x44] sm:$0xf]
    %v2933 = vld [vmem:[%s2914 + $0x48] sm:$0xf]
    %v2934 = vld [vmem:[%s2914 + $0x4c] sm:$0xf]
    %v2935 = vld [vmem:[%s2914 + $0x50] sm:$0xf]
    %v2936 = vld [vmem:[%s2914 + $0x54] sm:$0xf]
    %v2937 = vld [vmem:[%s2914 + $0x58] sm:$0xf]
    %v2938 = vld [vmem:[%s2914 + $0x5c] sm:$0xf]
    %v2939 = vld [vmem:[%s2914 + $0x60] sm:$0xf]
    %v2940 = vld [vmem:[%s2914 + $0x64] sm:$0xf]
    %v2941 = vld [vmem:[%s2914 + $0x68] sm:$0xf]
    %v2942 = vld [vmem:[%s2914 + $0x6c] sm:$0xf]
    %v2943 = vld [vmem:[%s2914 + $0x70] sm:$0xf]
    %v2944 = vld [vmem:[%s2914 + $0x74] sm:$0xf]
    %v2945 = vld [vmem:[%s2914 + $0x78] sm:$0xf]
    %v2946 = vld [vmem:[%s2914 + $0x7c] sm:$0xf]
    %v2947 = vld [vmem:[%s2914 + $0x80] sm:$0xf]
    %v2948 = vld [vmem:[%s2914 + $0x84] sm:$0xf]
    %v2949 = vld [vmem:[%s2914 + $0x88] sm:$0xf]
    %v2950 = vld [vmem:[%s2914 + $0x8c] sm:$0xf]
    %v2951 = vld [vmem:[%s2914 + $0x90] sm:$0xf]
    %v2952 = vld [vmem:[%s2914 + $0x94] sm:$0xf]
    %v2953 = vld [vmem:[%s2914 + $0x98] sm:$0xf]
    %v2954 = vld [vmem:[%s2914 + $0x9c] sm:$0xf]
    %v2955 = vld [vmem:[%s2914 + $0xa0] sm:$0xf]
    %v2956 = vld [vmem:[%s2914 + $0xa4] sm:$0xf]
    %v2957 = vld [vmem:[%s2914 + $0xa8] sm:$0xf]
    %v2958 = vld [vmem:[%s2914 + $0xac] sm:$0xf]
    %v2959 = vld [vmem:[%s2914 + $0xb0] sm:$0xf]
    %v2960 = vld [vmem:[%s2914 + $0xb4] sm:$0xf]
    %v2961 = vld [vmem:[%s2914 + $0xb8] sm:$0xf]
    %v2962 = vld [vmem:[%s2914 + $0xbc] sm:$0xf]
    %v2963 = vld [vmem:[%s2914 + $0xc0] sm:$0xf]
    %v2964 = vld [vmem:[%s2914 + $0xc4] sm:$0xf]
    %v2965 = vld [vmem:[%s2914 + $0xc8] sm:$0xf]
    %v2966 = vld [vmem:[%s2914 + $0xcc] sm:$0xf]
    %v2967 = vld [vmem:[%s2914 + $0xd0] sm:$0xf]
    %v2968 = vld [vmem:[%s2914 + $0xd4] sm:$0xf]
    %v2969 = vld [vmem:[%s2914 + $0xd8] sm:$0xf]
    %v2970 = vld [vmem:[%s2914 + $0xdc] sm:$0xf]
    %v2971 = vld [vmem:[%s2914 + $0xe0] sm:$0xf]
    %v2972 = vld [vmem:[%s2914 + $0xe4] sm:$0xf]
    %v2973 = vld [vmem:[%s2914 + $0xe8] sm:$0xf]
    %v2974 = vld [vmem:[%s2914 + $0xec] sm:$0xf]
    %v2975 = vld [vmem:[%s2914 + $0xf0] sm:$0xf]
    %v2976 = vld [vmem:[%s2914 + $0xf4] sm:$0xf]
    %v2977 = vld [vmem:[%s2914 + $0xf8] sm:$0xf]
    %v2978 = vld [vmem:[%s2914 + $0xfc] sm:$0xf]
    %v2979 = vld [vmem:[%s2914 + $0x100] sm:$0xf]
    %v2980 = vld [vmem:[%s2914 + $0x104] sm:$0xf]
    %v2981 = vld [vmem:[%s2914 + $0x108] sm:$0xf]
    %v2982 = vld [vmem:[%s2914 + $0x10c] sm:$0xf]
    %v2983 = vld [vmem:[%s2914 + $0x110] sm:$0xf]
    %v2984 = vld [vmem:[%s2914 + $0x114] sm:$0xf]
    %v2985 = vld [vmem:[%s2914 + $0x118] sm:$0xf]
    %v2986 = vld [vmem:[%s2914 + $0x11c] sm:$0xf]
    %v2987 = vld [vmem:[%s2914 + $0x120] sm:$0xf]
    %v2988 = vld [vmem:[%s2914 + $0x124] sm:$0xf]
    %v2989 = vld [vmem:[%s2914 + $0x128] sm:$0xf]
    %v2990 = vld [vmem:[%s2914 + $0x12c] sm:$0xf]
    %v2991 = vld [vmem:[%s2914 + $0x130] sm:$0xf]
    %v2992 = vld [vmem:[%s2914 + $0x134] sm:$0xf]
    %v2993 = vld [vmem:[%s2914 + $0x138] sm:$0xf]
    %v2994 = vld [vmem:[%s2914 + $0x13c] sm:$0xf]
    %v2995 = vld [vmem:[%s2914 + $0x140] sm:$0xf]
    %v2996 = vld [vmem:[%s2914 + $0x144] sm:$0xf]
    %v2997 = vld [vmem:[%s2914 + $0x148] sm:$0xf]
    %v2998 = vld [vmem:[%s2914 + $0x14c] sm:$0xf]
    %v2999 = vld [vmem:[%s2914 + $0x150] sm:$0xf]
    %v3000 = vld [vmem:[%s2914 + $0x154] sm:$0xf]
    %v3001 = vld [vmem:[%s2914 + $0x158] sm:$0xf]
    %v3002 = vld [vmem:[%s2914 + $0x15c] sm:$0xf]
    %v3003 = vld [vmem:[%s2914 + $0x160] sm:$0xf]
    %v3004 = vld [vmem:[%s2914 + $0x164] sm:$0xf]
    %v3005 = vld [vmem:[%s2914 + $0x168] sm:$0xf]
    %v3006 = vld [vmem:[%s2914 + $0x16c] sm:$0xf]
    %v3007 = vld [vmem:[%s2914 + $0x170] sm:$0xf]
    %v3008 = vld [vmem:[%s2914 + $0x174] sm:$0xf]
    %v3009 = vld [vmem:[%s2914 + $0x178] sm:$0xf]
    %v3010 = vld [vmem:[%s2914 + $0x17c] sm:$0xf]
    %v3011 = vld [vmem:[%s2914 + $0x180] sm:$0xf]
    %v3012 = vld [vmem:[%s2914 + $0x184] sm:$0xf]
    %v3013 = vld [vmem:[%s2914 + $0x188] sm:$0xf]
    %v3014 = vld [vmem:[%s2914 + $0x18c] sm:$0xf]
    %v3015 = vld [vmem:[%s2914 + $0x190] sm:$0xf]
    %v3016 = vld [vmem:[%s2914 + $0x194] sm:$0xf]
    %v3017 = vld [vmem:[%s2914 + $0x198] sm:$0xf]
    %v3018 = vld [vmem:[%s2914 + $0x19c] sm:$0xf]
    %v3019 = vld [vmem:[%s2914 + $0x1a0] sm:$0xf]
    %v3020 = vld [vmem:[%s2914 + $0x1a4] sm:$0xf]
    %v3021 = vld [vmem:[%s2914 + $0x1a8] sm:$0xf]
    %v3022 = vld [vmem:[%s2914 + $0x1ac] sm:$0xf]
    %v3023 = vld [vmem:[%s2914 + $0x1b0] sm:$0xf]
    %v3024 = vld [vmem:[%s2914 + $0x1b4] sm:$0xf]
    %v3025 = vld [vmem:[%s2914 + $0x1b8] sm:$0xf]
    %v3026 = vld [vmem:[%s2914 + $0x1bc] sm:$0xf]
    %v3027 = vld [vmem:[%s2914 + $0x1c0] sm:$0xf]
    %v3028 = vld [vmem:[%s2914 + $0x1c4] sm:$0xf]
    %v3029 = vld [vmem:[%s2914 + $0x1c8] sm:$0xf]
    %v3030 = vld [vmem:[%s2914 + $0x1cc] sm:$0xf]
    %v3031 = vld [vmem:[%s2914 + $0x1d0] sm:$0xf]
    %v3032 = vld [vmem:[%s2914 + $0x1d4] sm:$0xf]
    %v3033 = vld [vmem:[%s2914 + $0x1d8] sm:$0xf]
    %v3034 = vld [vmem:[%s2914 + $0x1dc] sm:$0xf]
    %v3035 = vld [vmem:[%s2914 + $0x1e0] sm:$0xf]
    %v3036 = vld [vmem:[%s2914 + $0x1e4] sm:$0xf]
    %v3037 = vld [vmem:[%s2914 + $0x1e8] sm:$0xf]
    %v3038 = vld [vmem:[%s2914 + $0x1ec] sm:$0xf]
    %v3039 = vld [vmem:[%s2914 + $0x1f0] sm:$0xf]
    %v3040 = vld [vmem:[%s2914 + $0x1f4] sm:$0xf]
    %v3041 = vld [vmem:[%s2914 + $0x1f8] sm:$0xf]
    %v3042 = vld [vmem:[%s2914 + $0x1fc] sm:$0xf]
    %v3043 = vld [vmem:[%s2914 + $0x200] sm:$0xf]
    %v3044 = vld [vmem:[%s2914 + $0x204] sm:$0xf]
    %v3045 = vld [vmem:[%s2914 + $0x208] sm:$0xf]
    %v3046 = vld [vmem:[%s2914 + $0x20c] sm:$0xf]
    %v3047 = vld [vmem:[%s2914 + $0x210] sm:$0xf]
    %v3048 = vld [vmem:[%s2914 + $0x214] sm:$0xf]
    %v3049 = vld [vmem:[%s2914 + $0x218] sm:$0xf]
    %v3050 = vld [vmem:[%s2914 + $0x21c] sm:$0xf]
    %v3051 = vld [vmem:[%s2914 + $0x220] sm:$0xf]
    %v3052 = vld [vmem:[%s2914 + $0x224] sm:$0xf]
    %v3053 = vld [vmem:[%s2914 + $0x228] sm:$0xf]
    %v3054 = vld [vmem:[%s2914 + $0x22c] sm:$0xf]
    %v3055 = vld [vmem:[%s2914 + $0x230] sm:$0xf]
    %v3056 = vld [vmem:[%s2914 + $0x234] sm:$0xf]
    %v3057 = vld [vmem:[%s2914 + $0x238] sm:$0xf]
    %v3058 = vld [vmem:[%s2914 + $0x23c] sm:$0xf]
    %v3203 = vunpack.c.l.b16 %v2915
    %v3204 = vunpack.c.l.b16 %v2916
    %v3205 = vunpack.c.l.b16 %v2917
    %v3206 = vunpack.c.l.b16 %v2918
    %v3207 = vunpack.c.l.b16 %v2919
    %v3208 = vunpack.c.l.b16 %v2920
    %v3209 = vunpack.c.l.b16 %v2921
    %v3210 = vunpack.c.l.b16 %v2922
    %v3211 = vunpack.c.l.b16 %v2923
    %v3212 = vunpack.c.l.b16 %v2924
    %v3213 = vunpack.c.l.b16 %v2925
    %v3214 = vunpack.c.l.b16 %v2926
    %v3215 = vunpack.c.l.b16 %v2927
    %v3216 = vunpack.c.l.b16 %v2928
    %v3217 = vunpack.c.l.b16 %v2929
    %v3218 = vunpack.c.l.b16 %v2930
    %v3219 = vunpack.c.l.b16 %v2931
    %v3220 = vunpack.c.l.b16 %v2932
    %v3221 = vunpack.c.l.b16 %v2933
    %v3222 = vunpack.c.l.b16 %v2934
    %v3223 = vunpack.c.l.b16 %v2935
    %v3224 = vunpack.c.l.b16 %v2936
    %v3225 = vunpack.c.l.b16 %v2937
    %v3226 = vunpack.c.l.b16 %v2938
    %v3227 = vunpack.c.l.b16 %v2939
    %v3228 = vunpack.c.l.b16 %v2940
    %v3229 = vunpack.c.l.b16 %v2941
    %v3230 = vunpack.c.l.b16 %v2942
    %v3231 = vunpack.c.l.b16 %v2943
    %v3232 = vunpack.c.l.b16 %v2944
    %v3233 = vunpack.c.l.b16 %v2945
    %v3234 = vunpack.c.l.b16 %v2946
    %v3235 = vunpack.c.l.b16 %v2947
    %v3236 = vunpack.c.l.b16 %v2948
    %v3237 = vunpack.c.l.b16 %v2949
    %v3238 = vunpack.c.l.b16 %v2950
    %v3239 = vunpack.c.l.b16 %v2951
    %v3240 = vunpack.c.l.b16 %v2952
    %v3241 = vunpack.c.l.b16 %v2953
    %v3242 = vunpack.c.l.b16 %v2954
    %v3243 = vunpack.c.l.b16 %v2955
    %v3244 = vunpack.c.l.b16 %v2956
    %v3245 = vunpack.c.l.b16 %v2957
    %v3246 = vunpack.c.l.b16 %v2958
    %v3247 = vunpack.c.l.b16 %v2959
    %v3248 = vunpack.c.l.b16 %v2960
    %v3249 = vunpack.c.l.b16 %v2961
    %v3250 = vunpack.c.l.b16 %v2962
    %v3251 = vunpack.c.l.b16 %v2963
    %v3252 = vunpack.c.l.b16 %v2964
    %v3253 = vunpack.c.l.b16 %v2965
    %v3254 = vunpack.c.l.b16 %v2966
    %v3255 = vunpack.c.l.b16 %v2967
    %v3256 = vunpack.c.l.b16 %v2968
    %v3257 = vunpack.c.l.b16 %v2969
    %v3258 = vunpack.c.l.b16 %v2970
    %v3259 = vunpack.c.l.b16 %v2971
    %v3260 = vunpack.c.l.b16 %v2972
    %v3261 = vunpack.c.l.b16 %v2973
    %v3262 = vunpack.c.l.b16 %v2974
    %v3263 = vunpack.c.l.b16 %v2975
    %v3264 = vunpack.c.l.b16 %v2976
    %v3265 = vunpack.c.l.b16 %v2977
    %v3266 = vunpack.c.l.b16 %v2978
    %v3267 = vunpack.c.l.b16 %v2979
    %v3268 = vunpack.c.l.b16 %v2980
    %v3269 = vunpack.c.l.b16 %v2981
    %v3270 = vunpack.c.l.b16 %v2982
    %v3271 = vunpack.c.l.b16 %v2983
    %v3272 = vunpack.c.l.b16 %v2984
    %v3273 = vunpack.c.l.b16 %v2985
    %v3274 = vunpack.c.l.b16 %v2986
    %v3275 = vunpack.c.l.b16 %v2987
    %v3276 = vunpack.c.l.b16 %v2988
    %v3277 = vunpack.c.l.b16 %v2989
    %v3278 = vunpack.c.l.b16 %v2990
    %v3279 = vunpack.c.l.b16 %v2991
    %v3280 = vunpack.c.l.b16 %v2992
    %v3281 = vunpack.c.l.b16 %v2993
    %v3282 = vunpack.c.l.b16 %v2994
    %v3283 = vunpack.c.l.b16 %v2995
    %v3284 = vunpack.c.l.b16 %v2996
    %v3285 = vunpack.c.l.b16 %v2997
    %v3286 = vunpack.c.l.b16 %v2998
    %v3287 = vunpack.c.l.b16 %v2999
    %v3288 = vunpack.c.l.b16 %v3000
    %v3289 = vunpack.c.l.b16 %v3001
    %v3290 = vunpack.c.l.b16 %v3002
    %v3291 = vunpack.c.l.b16 %v3003
    %v3292 = vunpack.c.l.b16 %v3004
    %v3293 = vunpack.c.l.b16 %v3005
    %v3294 = vunpack.c.l.b16 %v3006
    %v3295 = vunpack.c.l.b16 %v3007
    %v3296 = vunpack.c.l.b16 %v3008
    %v3297 = vunpack.c.l.b16 %v3009
    %v3298 = vunpack.c.l.b16 %v3010
    %v3299 = vunpack.c.l.b16 %v3011
    %v3300 = vunpack.c.l.b16 %v3012
    %v3301 = vunpack.c.l.b16 %v3013
    %v3302 = vunpack.c.l.b16 %v3014
    %v3303 = vunpack.c.l.b16 %v3015
    %v3304 = vunpack.c.l.b16 %v3016
    %v3305 = vunpack.c.l.b16 %v3017
    %v3306 = vunpack.c.l.b16 %v3018
    %v3307 = vunpack.c.l.b16 %v3019
    %v3308 = vunpack.c.l.b16 %v3020
    %v3309 = vunpack.c.l.b16 %v3021
    %v3310 = vunpack.c.l.b16 %v3022
    %v3311 = vunpack.c.l.b16 %v3023
    %v3312 = vunpack.c.l.b16 %v3024
    %v3313 = vunpack.c.l.b16 %v3025
    %v3314 = vunpack.c.l.b16 %v3026
    %v3315 = vunpack.c.l.b16 %v3027
    %v3316 = vunpack.c.l.b16 %v3028
    %v3317 = vunpack.c.l.b16 %v3029
    %v3318 = vunpack.c.l.b16 %v3030
    %v3319 = vunpack.c.l.b16 %v3031
    %v3320 = vunpack.c.l.b16 %v3032
    %v3321 = vunpack.c.l.b16 %v3033
    %v3322 = vunpack.c.l.b16 %v3034
    %v3323 = vunpack.c.l.b16 %v3035
    %v3324 = vunpack.c.l.b16 %v3036
    %v3325 = vunpack.c.l.b16 %v3037
    %v3326 = vunpack.c.l.b16 %v3038
    %v3327 = vunpack.c.l.b16 %v3039
    %v3328 = vunpack.c.l.b16 %v3040
    %v3329 = vunpack.c.l.b16 %v3041
    %v3330 = vunpack.c.l.b16 %v3042
    %v3331 = vunpack.c.l.b16 %v3043
    %v3332 = vunpack.c.l.b16 %v3044
    %v3333 = vunpack.c.l.b16 %v3045
    %v3334 = vunpack.c.l.b16 %v3046
    %v3335 = vunpack.c.l.b16 %v3047
    %v3336 = vunpack.c.l.b16 %v3048
    %v3337 = vunpack.c.l.b16 %v3049
    %v3338 = vunpack.c.l.b16 %v3050
    %v3339 = vunpack.c.l.b16 %v3051
    %v3340 = vunpack.c.l.b16 %v3052
    %v3341 = vunpack.c.l.b16 %v3053
    %v3342 = vunpack.c.l.b16 %v3054
    %v3343 = vunpack.c.l.b16 %v3055
    %v3344 = vunpack.c.l.b16 %v3056
    %v3345 = vunpack.c.l.b16 %v3057
    %v3346 = vunpack.c.l.b16 %v3058
    %v3347 = vpack.c.b16 %v3204, %v3203
    %v3348 = vpack.c.b16 %v3206, %v3205
    %v3349 = vpack.c.b16 %v3208, %v3207
    %v3350 = vpack.c.b16 %v3210, %v3209
    %v3351 = vpack.c.b16 %v3212, %v3211
    %v3352 = vpack.c.b16 %v3214, %v3213
    %v3353 = vpack.c.b16 %v3216, %v3215
    %v3354 = vpack.c.b16 %v3218, %v3217
    %v3355 = vpack.c.b16 %v3220, %v3219
    %v3356 = vpack.c.b16 %v3222, %v3221
    %v3357 = vpack.c.b16 %v3224, %v3223
    %v3358 = vpack.c.b16 %v3226, %v3225
    %v3359 = vpack.c.b16 %v3228, %v3227
    %v3360 = vpack.c.b16 %v3230, %v3229
    %v3361 = vpack.c.b16 %v3232, %v3231
    %v3362 = vpack.c.b16 %v3234, %v3233
    %v3363 = vpack.c.b16 %v3236, %v3235
    %v3364 = vpack.c.b16 %v3238, %v3237
    %v3365 = vpack.c.b16 %v3240, %v3239
    %v3366 = vpack.c.b16 %v3242, %v3241
    %v3367 = vpack.c.b16 %v3244, %v3243
    %v3368 = vpack.c.b16 %v3246, %v3245
    %v3369 = vpack.c.b16 %v3248, %v3247
    %v3370 = vpack.c.b16 %v3250, %v3249
    %v3371 = vpack.c.b16 %v3252, %v3251
    %v3372 = vpack.c.b16 %v3254, %v3253
    %v3373 = vpack.c.b16 %v3256, %v3255
    %v3374 = vpack.c.b16 %v3258, %v3257
    %v3375 = vpack.c.b16 %v3260, %v3259
    %v3376 = vpack.c.b16 %v3262, %v3261
    %v3377 = vpack.c.b16 %v3264, %v3263
    %v3378 = vpack.c.b16 %v3266, %v3265
    %v3379 = vpack.c.b16 %v3268, %v3267
    %v3380 = vpack.c.b16 %v3270, %v3269
    %v3381 = vpack.c.b16 %v3272, %v3271
    %v3382 = vpack.c.b16 %v3274, %v3273
    %v3383 = vpack.c.b16 %v3276, %v3275
    %v3384 = vpack.c.b16 %v3278, %v3277
    %v3385 = vpack.c.b16 %v3280, %v3279
    %v3386 = vpack.c.b16 %v3282, %v3281
    %v3387 = vpack.c.b16 %v3284, %v3283
    %v3388 = vpack.c.b16 %v3286, %v3285
    %v3389 = vpack.c.b16 %v3288, %v3287
    %v3390 = vpack.c.b16 %v3290, %v3289
    %v3391 = vpack.c.b16 %v3292, %v3291
    %v3392 = vpack.c.b16 %v3294, %v3293
    %v3393 = vpack.c.b16 %v3296, %v3295
    %v3394 = vpack.c.b16 %v3298, %v3297
    %v3395 = vpack.c.b16 %v3300, %v3299
    %v3396 = vpack.c.b16 %v3302, %v3301
    %v3397 = vpack.c.b16 %v3304, %v3303
    %v3398 = vpack.c.b16 %v3306, %v3305
    %v3399 = vpack.c.b16 %v3308, %v3307
    %v3400 = vpack.c.b16 %v3310, %v3309
    %v3401 = vpack.c.b16 %v3312, %v3311
    %v3402 = vpack.c.b16 %v3314, %v3313
    %v3403 = vpack.c.b16 %v3316, %v3315
    %v3404 = vpack.c.b16 %v3318, %v3317
    %v3405 = vpack.c.b16 %v3320, %v3319
    %v3406 = vpack.c.b16 %v3322, %v3321
    %v3407 = vpack.c.b16 %v3324, %v3323
    %v3408 = vpack.c.b16 %v3326, %v3325
    %v3409 = vpack.c.b16 %v3328, %v3327
    %v3410 = vpack.c.b16 %v3330, %v3329
    %v3411 = vpack.c.b16 %v3332, %v3331
    %v3412 = vpack.c.b16 %v3334, %v3333
    %v3413 = vpack.c.b16 %v3336, %v3335
    %v3414 = vpack.c.b16 %v3338, %v3337
    %v3415 = vpack.c.b16 %v3340, %v3339
    %v3416 = vpack.c.b16 %v3342, %v3341
    %v3417 = vpack.c.b16 %v3344, %v3343
    %v3418 = vpack.c.b16 %v3346, %v3345
    %3491 = vmatprep.subr.bf16.mxu0 0
    %3492 = vmatpush1.bf16.msra.mxu0 %v3347
    %3493 = vmatprep.subr.bf16.mxu0 0
    %3494 = vmatpush1.bf16.msra.mxu0 %v3348
    %3495 = vmatprep.subr.bf16.mxu0 0
    %3496 = vmatpush1.bf16.msra.mxu0 %v3349
    %3497 = vmatprep.subr.bf16.mxu0 0
    %3498 = vmatpush1.bf16.msra.mxu0 %v3350
    %3499 = vmatprep.subr.bf16.mxu0 0
    %3500 = vmatpush1.bf16.msra.mxu0 %v3351
    %3501 = vmatprep.subr.bf16.mxu0 0
    %3502 = vmatpush1.bf16.msra.mxu0 %v3352
    %3503 = vmatprep.subr.bf16.mxu0 0
    %3504 = vmatpush1.bf16.msra.mxu0 %v3353
    %3505 = vmatprep.subr.bf16.mxu0 0
    %3506 = vmatpush1.bf16.msra.mxu0 %v3354
    %3507 = vmatprep.subr.bf16.mxu0 0
    %3508 = vmatpush1.bf16.msra.mxu0 %v3355
    %3509 = vmatprep.subr.bf16.mxu0 0
    %3510 = vmatpush1.bf16.msra.mxu0 %v3356
    %3511 = vmatprep.subr.bf16.mxu0 0
    %3512 = vmatpush1.bf16.msra.mxu0 %v3357
    %3513 = vmatprep.subr.bf16.mxu0 0
    %3514 = vmatpush1.bf16.msra.mxu0 %v3358
    %3515 = vmatprep.subr.bf16.mxu0 0
    %3516 = vmatpush1.bf16.msra.mxu0 %v3359
    %3517 = vmatprep.subr.bf16.mxu0 0
    %3518 = vmatpush1.bf16.msra.mxu0 %v3360
    %3519 = vmatprep.subr.bf16.mxu0 0
    %3520 = vmatpush1.bf16.msra.mxu0 %v3361
    %3521 = vmatprep.subr.bf16.mxu0 0
    %3522 = vmatpush1.bf16.msra.mxu0 %v3362
    %3523 = vmatprep.mubr.bf16.mxu0 %v2906
    %3524 = vmatmul.mubr.bf16.gmra.mrb[0].mxu0 %v2905
    %v3525 = vpop.f32.mrb[0].mxu0
    %v3526 = vadd.f32 0.0, %v3525
    %v3527 = vpop.f32.mrb[0].mxu0
    %v3528 = vpop.f32.mrb[0].mxu0
    %v3529 = vpop.f32.mrb[0].mxu0
    %3530 = vdwg.mxu0
    %3531 = vmatprep.subr.bf16.mxu0 0
    %3532 = vmatpush1.bf16.msra.mxu0 %v3363
    %3533 = vmatprep.subr.bf16.mxu0 0
    %3534 = vmatpush1.bf16.msra.mxu0 %v3364
    %3535 = vmatprep.subr.bf16.mxu0 0
    %3536 = vmatpush1.bf16.msra.mxu0 %v3365
    %3537 = vmatprep.subr.bf16.mxu0 0
    %3538 = vmatpush1.bf16.msra.mxu0 %v3366
    %3539 = vmatprep.subr.bf16.mxu0 0
    %3540 = vmatpush1.bf16.msra.mxu0 %v3367
    %3541 = vmatprep.subr.bf16.mxu0 0
    %3542 = vmatpush1.bf16.msra.mxu0 %v3368
    %3543 = vmatprep.subr.bf16.mxu0 0
    %3544 = vmatpush1.bf16.msra.mxu0 %v3369
    %3545 = vmatprep.subr.bf16.mxu0 0
    %3546 = vmatpush1.bf16.msra.mxu0 %v3370
    %3547 = vmatprep.subr.bf16.mxu0 0
    %3548 = vmatpush1.bf16.msra.mxu0 %v3371
    %3549 = vmatprep.subr.bf16.mxu0 0
    %3550 = vmatpush1.bf16.msra.mxu0 %v3372
    %3551 = vmatprep.subr.bf16.mxu0 0
    %3552 = vmatpush1.bf16.msra.mxu0 %v3373
    %3553 = vmatprep.subr.bf16.mxu0 0
    %3554 = vmatpush1.bf16.msra.mxu0 %v3374
    %3555 = vmatprep.subr.bf16.mxu0 0
    %3556 = vmatpush1.bf16.msra.mxu0 %v3375
    %3557 = vmatprep.subr.bf16.mxu0 0
    %3558 = vmatpush1.bf16.msra.mxu0 %v3376
    %3559 = vmatprep.subr.bf16.mxu0 0
    %3560 = vmatpush1.bf16.msra.mxu0 %v3377
    %3561 = vmatprep.subr.bf16.mxu0 0
    %3562 = vmatpush1.bf16.msra.mxu0 %v3378
    %3563 = vmatprep.mubr.bf16.mxu0 %v2908
    %3564 = vmatmul.mubr.bf16.gmra.mrb[0].mxu0 %v2907
    %v3565 = vpop.f32.mrb[0].mxu0
    %v3566 = vadd.f32 %v3526, %v3565
    %v3567 = vpop.f32.mrb[0].mxu0
    %v3568 = vpop.f32.mrb[0].mxu0
    %v3569 = vpop.f32.mrb[0].mxu0
    %3570 = vdwg.mxu0
    %3571 = vmatprep.subr.bf16.mxu0 0
    %3572 = vmatpush1.bf16.msra.mxu0 %v3379
    %3573 = vmatprep.subr.bf16.mxu0 0
    %3574 = vmatpush1.bf16.msra.mxu0 %v3380
    %3575 = vmatprep.subr.bf16.mxu0 0
    %3576 = vmatpush1.bf16.msra.mxu0 %v3381
    %3577 = vmatprep.subr.bf16.mxu0 0
    %3578 = vmatpush1.bf16.msra.mxu0 %v3382
    %3579 = vmatprep.subr.bf16.mxu0 0
    %3580 = vmatpush1.bf16.msra.mxu0 %v3383
    %3581 = vmatprep.subr.bf16.mxu0 0
    %3582 = vmatpush1.bf16.msra.mxu0 %v3384
    %3583 = vmatprep.subr.bf16.mxu0 0
    %3584 = vmatpush1.bf16.msra.mxu0 %v3385
    %3585 = vmatprep.subr.bf16.mxu0 0
    %3586 = vmatpush1.bf16.msra.mxu0 %v3386
    %3587 = vmatprep.subr.bf16.mxu0 0
    %3588 = vmatpush1.bf16.msra.mxu0 %v3387
    %3589 = vmatprep.subr.bf16.mxu0 0
    %3590 = vmatpush1.bf16.msra.mxu0 %v3388
    %3591 = vmatprep.subr.bf16.mxu0 0
    %3592 = vmatpush1.bf16.msra.mxu0 %v3389
    %3593 = vmatprep.subr.bf16.mxu0 0
    %3594 = vmatpush1.bf16.msra.mxu0 %v3390
    %3595 = vmatprep.subr.bf16.mxu0 0
    %3596 = vmatpush1.bf16.msra.mxu0 %v3391
    %3597 = vmatprep.subr.bf16.mxu0 0
    %3598 = vmatpush1.bf16.msra.mxu0 %v3392
    %3599 = vmatprep.subr.bf16.mxu0 0
    %3600 = vmatpush1.bf16.msra.mxu0 %v3393
    %3601 = vmatprep.subr.bf16.mxu0 0
    %3602 = vmatpush1.bf16.msra.mxu0 %v3394
    %3603 = vmatprep.mubr.bf16.mxu0 %v2910
    %3604 = vmatmul.mubr.bf16.gmra.mrb[0].mxu0 %v2909
    %v3605 = vpop.f32.mrb[0].mxu0
    %v3606 = vadd.f32 %v3566, %v3605
    %v3607 = vpop.f32.mrb[0].mxu0
    %v3608 = vpop.f32.mrb[0].mxu0
    %v3609 = vpop.f32.mrb[0].mxu0
    %3610 = vdwg.mxu0
    %3611 = vmatprep.subr.bf16.mxu0 0
    %3612 = vmatpush1.bf16.msra.mxu0 %v3395
    %3613 = vmatprep.subr.bf16.mxu0 0
    %3614 = vmatpush1.bf16.msra.mxu0 %v3396
    %3615 = vmatprep.subr.bf16.mxu0 0
    %3616 = vmatpush1.bf16.msra.mxu0 %v3397
    %3617 = vmatprep.subr.bf16.mxu0 0
    %3618 = vmatpush1.bf16.msra.mxu0 %v3398
    %3619 = vmatprep.subr.bf16.mxu0 0
    %3620 = vmatpush1.bf16.msra.mxu0 %v3399
    %3621 = vmatprep.subr.bf16.mxu0 0
    %3622 = vmatpush1.bf16.msra.mxu0 %v3400
    %3623 = vmatprep.subr.bf16.mxu0 0
    %3624 = vmatpush1.bf16.msra.mxu0 %v3401
    %3625 = vmatprep.subr.bf16.mxu0 0
    %3626 = vmatpush1.bf16.msra.mxu0 %v3402
    %3627 = vmatprep.subr.bf16.mxu0 0
    %3628 = vmatpush1.bf16.msra.mxu0 %v3403
    %3629 = vmatprep.subr.bf16.mxu0 0
    %3630 = vmatpush1.bf16.msra.mxu0 %v3404
    %3631 = vmatprep.subr.bf16.mxu0 0
    %3632 = vmatpush1.bf16.msra.mxu0 %v3405
    %3633 = vmatprep.subr.bf16.mxu0 0
    %3634 = vmatpush1.bf16.msra.mxu0 %v3406
    %3635 = vmatprep.subr.bf16.mxu0 0
    %3636 = vmatpush1.bf16.msra.mxu0 %v3407
    %3637 = vmatprep.subr.bf16.mxu0 0
    %3638 = vmatpush1.bf16.msra.mxu0 %v3408
    %3639 = vmatprep.subr.bf16.mxu0 0
    %3640 = vmatpush1.bf16.msra.mxu0 %v3409
    %3641 = vmatprep.subr.bf16.mxu0 0
    %3642 = vmatpush1.bf16.msra.mxu0 %v3410
    %3643 = vmatprep.mubr.bf16.mxu0 %v2912
    %3644 = vmatmul.mubr.bf16.gmra.mrb[0].mxu0 %v2911
    %v3645 = vpop.f32.mrb[0].mxu0
    %v3646 = vadd.f32 %v3606, %v3645
    %v3647 = vpop.f32.mrb[0].mxu0
    %v3648 = vpop.f32.mrb[0].mxu0
    %v3649 = vpop.f32.mrb[0].mxu0
    %3650 = vdwg.mxu0
    %3651 = vmatprep.subr.bf16.mxu0 0
    %3652 = vmatpush1.bf16.msra.mxu0 %v3411
    %3653 = vmatprep.subr.bf16.mxu0 0
    %3654 = vmatpush1.bf16.msra.mxu0 %v3412
    %3655 = vmatprep.subr.bf16.mxu0 0
    %3656 = vmatpush1.bf16.msra.mxu0 %v3413
    %3657 = vmatprep.subr.bf16.mxu0 0
    %3658 = vmatpush1.bf16.msra.mxu0 %v3414
    %3659 = vmatprep.subr.bf16.mxu0 0
    %3660 = vmatpush1.bf16.msra.mxu0 %v3415
    %3661 = vmatprep.subr.bf16.mxu0 0
    %3662 = vmatpush1.bf16.msra.mxu0 %v3416
    %3663 = vmatprep.subr.bf16.mxu0 0
    %3664 = vmatpush1.bf16.msra.mxu0 %v3417
    %3665 = vmatprep.subr.bf16.mxu0 0
    %3666 = vmatpush1.bf16.msra.mxu0 %v3418
    %3667 = vmatprep.subr.bf16.mxu0 0
    %3668 = vmatpush1.bf16.msra.mxu0 0
    %3669 = vmatprep.subr.bf16.mxu0 0
    %3670 = vmatpush1.bf16.msra.mxu0 0
    %3671 = vmatprep.subr.bf16.mxu0 0
    %3672 = vmatpush1.bf16.msra.mxu0 0
    %3673 = vmatprep.subr.bf16.mxu0 0
    %3674 = vmatpush1.bf16.msra.mxu0 0
    %3675 = vmatprep.subr.bf16.mxu0 0
    %3676 = vmatpush1.bf16.msra.mxu0 0
    %3677 = vmatprep.subr.bf16.mxu0 0
    %3678 = vmatpush1.bf16.msra.mxu0 0
    %3679 = vmatprep.subr.bf16.mxu0 0
    %3680 = vmatpush1.bf16.msra.mxu0 0
    %3681 = vmatprep.subr.bf16.mxu0 0
    %3682 = vmatpush1.bf16.msra.mxu0 0
    %3683 = vmatprep.mubr.bf16.mxu0 0
    %3684 = vmatmul.mubr.bf16.gmra.mrb[0].mxu0 %v2913
    %v3685 = vpop.f32.mrb[0].mxu0
    %v3686 = vadd.f32 %v3646, %v3685
    %v3687 = vpop.f32.mrb[0].mxu0
    %v3688 = vpop.f32.mrb[0].mxu0
    %v3689 = vpop.f32.mrb[0].mxu0
    %3690 = vdwg.mxu0
    %v3691 = vadd.f32 %v2759, %v3686
    %v3692 = vld [vmem:[%s6] sm:$0xff]
    %v3693 = vld [vmem:[%s6 + $0x8] sm:$0xff]
    %v3694 = vld [vmem:[%s7] sm:$0xff]
    %v3695 = vld [vmem:[%s7 + $0x8] sm:$0xff]
    %v3696 = vld [vmem:[%s7 + $0x10] sm:$0xff]
    %v3697 = vld [vmem:[%s7 + $0x18] sm:$0xff]
    %vm3698 = vcmask 261120
    %v3700 = vsel %vm3698, %v3691, 0
    %3702 = vmatprep.subr.mxu0 0.0
    %3703 = vmatpush1.msra.mxu0 %v3694
    %3704 = vmatprep.subr.mxu0 0.0
    %3705 = vmatpush1.msra.mxu0 %v3695
    %3706 = vmatprep.subr.mxu0 0.0
    %3707 = vmatpush1.msra.mxu0 %v3696
    %3708 = vmatprep.subr.mxu0 0.0
    %3709 = vmatpush1.msra.mxu0 %v3697
    %3710 = vmatprep.subr.mxu0 0.0
    %3711 = vmatpush1.msra.mxu0 0.0
    %3712 = vmatprep.subr.mxu0 0.0
    %3713 = vmatpush1.msra.mxu0 0.0
    %3714 = vmatprep.subr.mxu0 0.0
    %3715 = vmatpush1.msra.mxu0 0.0
    %3716 = vmatprep.subr.mxu0 0.0
    %3717 = vmatpush1.msra.mxu0 0.0
    %3718 = vmatprep.subr.mxu0 0.0
    %3719 = vmatpush1.msra.mxu0 0.0
    %3720 = vmatprep.subr.mxu0 0.0
    %3721 = vmatpush1.msra.mxu0 0.0
    %3722 = vmatprep.subr.mxu0 0.0
    %3723 = vmatpush1.msra.mxu0 0.0
    %3724 = vmatprep.subr.mxu0 0.0
    %3725 = vmatpush1.msra.mxu0 0.0
    %3726 = vmatprep.subr.mxu0 0.0
    %3727 = vmatpush1.msra.mxu0 0.0
    %3728 = vmatprep.subr.mxu0 0.0
    %3729 = vmatpush1.msra.mxu0 0.0
    %3730 = vmatprep.subr.mxu0 0.0
    %3731 = vmatpush1.msra.mxu0 0.0
    %3732 = vmatprep.subr.mxu0 0.0
    %3733 = vmatpush1.msra.mxu0 0.0
    %3734 = vmatprep.subr.mxu0 0.0
    %3735 = vmatpush1.msra.mxu0 0.0
    %3736 = vmatprep.subr.mxu0 0.0
    %3737 = vmatpush1.msra.mxu0 0.0
    %3738 = vmatprep.subr.mxu0 0.0
    %3739 = vmatpush1.msra.mxu0 0.0
    %3740 = vmatprep.subr.mxu0 0.0
    %3741 = vmatpush1.msra.mxu0 0.0
    %3742 = vmatprep.subr.mxu0 0.0
    %3743 = vmatpush1.msra.mxu0 0.0
    %3744 = vmatprep.subr.mxu0 0.0
    %3745 = vmatpush1.msra.mxu0 0.0
    %3746 = vmatprep.subr.mxu0 0.0
    %3747 = vmatpush1.msra.mxu0 0.0
    %3748 = vmatprep.subr.mxu0 0.0
    %3749 = vmatpush1.msra.mxu0 0.0
    %3750 = vmatprep.subr.mxu0 0.0
    %3751 = vmatpush1.msra.mxu0 0.0
    %3752 = vmatprep.subr.mxu0 0.0
    %3753 = vmatpush1.msra.mxu0 0.0
    %3754 = vmatprep.subr.mxu0 0.0
    %3755 = vmatpush1.msra.mxu0 0.0
    %3756 = vmatprep.subr.mxu0 0.0
    %3757 = vmatpush1.msra.mxu0 0.0
    %3758 = vmatprep.subr.mxu0 0.0
    %3759 = vmatpush1.msra.mxu0 0.0
    %3760 = vmatprep.subr.mxu0 0.0
    %3761 = vmatpush1.msra.mxu0 0.0
    %3762 = vmatprep.subr.mxu0 0.0
    %3763 = vmatpush1.msra.mxu0 0.0
    %3764 = vmatprep.subr.mxu0 0.0
    %3765 = vmatpush1.msra.mxu0 0.0
    %3766 = vmatprep.mubr.f32.mxu0 0.0
    %3767 = vmatmul.mubr.f32.gmra.mrb[0].mxu0 %v3700
    %v3768 = vpop.f32.mrb[0].mxu0
    %v3769 = vadd.f32 0.0, %v3768
    %v3770 = vpop.f32.mrb[0].mxu0
    %3771 = vdwg.mxu0
    %vm3772 = vcmask 130048
    %v3774 = vsel %vm3772, %v889, 0
    %3776 = vmatprep.subr.mxu0 0.0
    %3777 = vmatpush1.msra.mxu0 %v3692
    %3778 = vmatprep.subr.mxu0 0.0
    %3779 = vmatpush1.msra.mxu0 %v3693
    %3780 = vmatprep.subr.mxu0 0.0
    %3781 = vmatpush1.msra.mxu0 0.0
    %3782 = vmatprep.subr.mxu0 0.0
    %3783 = vmatpush1.msra.mxu0 0.0
    %3784 = vmatprep.subr.mxu0 0.0
    %3785 = vmatpush1.msra.mxu0 0.0
    %3786 = vmatprep.subr.mxu0 0.0
    %3787 = vmatpush1.msra.mxu0 0.0
    %3788 = vmatprep.subr.mxu0 0.0
    %3789 = vmatpush1.msra.mxu0 0.0
    %3790 = vmatprep.subr.mxu0 0.0
    %3791 = vmatpush1.msra.mxu0 0.0
    %3792 = vmatprep.subr.mxu0 0.0
    %3793 = vmatpush1.msra.mxu0 0.0
    %3794 = vmatprep.subr.mxu0 0.0
    %3795 = vmatpush1.msra.mxu0 0.0
    %3796 = vmatprep.subr.mxu0 0.0
    %3797 = vmatpush1.msra.mxu0 0.0
    %3798 = vmatprep.subr.mxu0 0.0
    %3799 = vmatpush1.msra.mxu0 0.0
    %3800 = vmatprep.subr.mxu0 0.0
    %3801 = vmatpush1.msra.mxu0 0.0
    %3802 = vmatprep.subr.mxu0 0.0
    %3803 = vmatpush1.msra.mxu0 0.0
    %3804 = vmatprep.subr.mxu0 0.0
    %3805 = vmatpush1.msra.mxu0 0.0
    %3806 = vmatprep.subr.mxu0 0.0
    %3807 = vmatpush1.msra.mxu0 0.0
    %3808 = vmatprep.subr.mxu0 0.0
    %3809 = vmatpush1.msra.mxu0 0.0
    %3810 = vmatprep.subr.mxu0 0.0
    %3811 = vmatpush1.msra.mxu0 0.0
    %3812 = vmatprep.subr.mxu0 0.0
    %3813 = vmatpush1.msra.mxu0 0.0
    %3814 = vmatprep.subr.mxu0 0.0
    %3815 = vmatpush1.msra.mxu0 0.0
    %3816 = vmatprep.subr.mxu0 0.0
    %3817 = vmatpush1.msra.mxu0 0.0
    %3818 = vmatprep.subr.mxu0 0.0
    %3819 = vmatpush1.msra.mxu0 0.0
    %3820 = vmatprep.subr.mxu0 0.0
    %3821 = vmatpush1.msra.mxu0 0.0
    %3822 = vmatprep.subr.mxu0 0.0
    %3823 = vmatpush1.msra.mxu0 0.0
    %3824 = vmatprep.subr.mxu0 0.0
    %3825 = vmatpush1.msra.mxu0 0.0
    %3826 = vmatprep.subr.mxu0 0.0
    %3827 = vmatpush1.msra.mxu0 0.0
    %3828 = vmatprep.subr.mxu0 0.0
    %3829 = vmatpush1.msra.mxu0 0.0
    %3830 = vmatprep.subr.mxu0 0.0
    %3831 = vmatpush1.msra.mxu0 0.0
    %3832 = vmatprep.subr.mxu0 0.0
    %3833 = vmatpush1.msra.mxu0 0.0
    %3834 = vmatprep.subr.mxu0 0.0
    %3835 = vmatpush1.msra.mxu0 0.0
    %3836 = vmatprep.subr.mxu0 0.0
    %3837 = vmatpush1.msra.mxu0 0.0
    %3838 = vmatprep.subr.mxu0 0.0
    %3839 = vmatpush1.msra.mxu0 0.0
    %3840 = vmatprep.mubr.f32.mxu0 0.0
    %3841 = vmatmul.mubr.f32.gmra.mrb[0].mxu0 %v3774
    %v3842 = vpop.f32.mrb[0].mxu0
    %v3843 = vadd.f32 %v3769, %v3842
    %v3844 = vpop.f32.mrb[0].mxu0
    %3845 = vdwg.mxu0
    %v3846 = vld [vmem:[%s8] sm:$0x1]
    %v3848 = vlaneseq
    %v3849 = vshrl.u32 %v3848, 7
    %v3850 = vsub.s32 0, %v3849
    %v3851 = vrot.slane %v3846, %v3850
    %v3853 = vadd.f32 %v3843, %v3851
    %v3854 = vxor.u32 %v3853, 2147483648
    %v3855 = vmul.f32 %v3854, 1.442695
    %v3856 = vpow.pop %v3855
    %v3857 = vadd.f32 %v3856, 1.0
    %v3858 = vrcp.pop %v3857
    %v3859 = vmul.f32 1.0, %v3858
    %vm3860 = vcmask 107520
    %3861 = vst.msk [vmem:[#allocation2] sm:$0x3] %vm3860, %v3859
    // Predicated region
    $region38: #{_lambda_.1} parent=1 // pred_check
      _
    $region39: #{_lambda_.1} parent=1 // pred_check_branch
      %3863 = sbr.rel (0) target = $region41
    $region40: #{_lambda_.1} parent=1 // pred_region
      %s3865 = ssub.s32 32, 32
      %3866 = vsyncadd [#allocation3], %s3865
      %s3868 = sshll.u32 [#allocation2], 4
      %s3869 = int_to_ptr.vmem [resolvable:$true] %s3868
      %3871 = dma.vmem_to_hbm [thread:$0]  %s3869, 32, %s9, [#allocation3]
    $region41: #{_lambda_.1} parent=1 // pred_fallthru
      _
    // Predicated region
    $region42: #{_lambda_.1} parent=1 // pred_check
      _
    $region43: #{_lambda_.1} parent=1 // pred_check_branch
      %3873 = sbr.rel (0) target = $region45
    $region44: #{_lambda_.1} parent=1 // pred_region
      %3874 = dma.done [#allocation3], 32
    $region45: #{_lambda_.1} parent=1 // pred_fallthru
      _
    %3875 = vsyncpa [#allocation3], 1

</llo_original>
